<compile_context>
chip_gen: v7x
topology: tpu7x:2x2x1
jax: 0.10.0
libtpu: 0.0.40
codegen_flags: <defaults>
</compile_context>

<pallas_src>
import jax
import jax.numpy as jnp
from jax.experimental import pallas as pl
from jax.experimental.pallas import tpu as pltpu

_MAX_ROWS_PER_STEP = 64   # upper bound on rows gathered / scattered per grid step
_LANE = 128


def _round_up(x: int, m: int) -> int:
    return ((x + m - 1) // m) * m


def _sublane(dtype) -> int:
    # rows-per-step must be a multiple of the dtype's sublane packing.
    return max(8, 32 // max(1, jnp.dtype(dtype).itemsize))


def _rows_per_step(K: int, dtype) -> int:
    sub = _sublane(dtype)
    return max(sub, min(_round_up(_MAX_ROWS_PER_STEP, sub), _round_up(K, sub)))


# ----------------------------------------------------------------------------
# pull:  out = emb.index_select(0, n_id)
# Table stays in HBM; each grid step gathers `rows` (possibly non-contiguous)
# rows with `rows` overlapping DMAs landing directly in the pipelined VMEM
# output block (no staging copy).
# ----------------------------------------------------------------------------
def _make_gather_kernel(rows):
    def kernel(nid_ref, emb_hbm_ref, out_ref, sem):
        base = pl.program_id(0) * rows
        copies = []
        for r in range(rows):
            src_row = nid_ref[base + r]
            cp = pltpu.make_async_copy(
                emb_hbm_ref.at[pl.ds(src_row, 1), :],
                out_ref.at[pl.ds(r, 1), :],     # straight into the output block
                sem.at[0],
            )
            cp.start()
            copies.append(cp)
        for cp in copies:                        # all rows in flight, then drain
            cp.wait()
    return kernel


def pull_pallas(emb, n_id):
    N, D = emb.shape
    K = int(n_id.shape[0])
    if K == 0:
        return jnp.zeros((0, D), emb.dtype)
    rows = _rows_per_step(K, emb.dtype)
    # TODO(synk): PyTorch raises on out-of-range ids; we clamp defensively.
    n_id = jnp.clip(n_id.astype(jnp.int32), 0, N - 1)
    Kp = _round_up(K, rows)
    if Kp != K:
        n_id = jnp.concatenate([n_id, jnp.zeros((Kp - K,), jnp.int32)])
    itemsize = jnp.dtype(emb.dtype).itemsize
    out = pl.pallas_call(
        _make_gather_kernel(rows),
        out_shape=jax.ShapeDtypeStruct((Kp, D), emb.dtype),
        grid_spec=pltpu.PrefetchScalarGridSpec(
            num_scalar_prefetch=1,
            grid=(Kp // rows,),
            in_specs=[pl.BlockSpec(memory_space=pl.ANY)],          # table in HBM
            out_specs=pl.BlockSpec((rows, D), lambda i, nid: (i, 0)),
            scratch_shapes=[pltpu.SemaphoreType.DMA((1,))],
        ),
        compiler_params=pltpu.CompilerParams(
            dimension_semantics=("parallel",)),   # rows independent -> 2 TCs on v7x
        cost_estimate=pl.CostEstimate(
            flops=0, transcendentals=0,
            bytes_accessed=2 * Kp * D * itemsize),
    )(n_id, emb)
    return out[:K] if Kp != K else out


# ----------------------------------------------------------------------------
# push:  emb[n_id] = x   (in place; table aliased to output)
# x stays in HBM; each grid step issues `rows` HBM->HBM row DMAs.  When the
# grid is sequential ("arbitrary"), waits are deferred by one step (two
# semaphore slots + final drain) so write completion overlaps the next step's
# DMA issue.  With unique_indices=True the grid is "parallel" and waits stay
# within the step (required: deferred waits across steps could deadlock if the
# grid is split across TensorCores).
# ----------------------------------------------------------------------------
def _make_scatter_kernel(rows, defer_waits):
    def kernel(nid_ref, emb_hbm_ref, x_hbm_ref, out_hbm_ref, sems):
        del emb_hbm_ref                       # aliased to out_hbm_ref (same HBM buffer)
        i = pl.program_id(0)
        base = i * rows
        slot = i % 2

        def wait_rows(s):
            # Waits only need the per-copy byte count; all copies are (1, D).
            for _ in range(rows):
                pltpu.make_async_copy(
                    x_hbm_ref.at[pl.ds(0, 1), :],
                    out_hbm_ref.at[pl.ds(0, 1), :],
                    sems.at[s],
                ).wait()

        if defer_waits:
            @pl.when(i > 0)
            def _wait_prev_step():
                wait_rows(1 - slot)

        for r in range(rows):
            dst_row = nid_ref[base + r]
            pltpu.make_async_copy(
                x_hbm_ref.at[pl.ds(base + r, 1), :],
                out_hbm_ref.at[pl.ds(dst_row, 1), :],
                sems.at[slot],
            ).start()

        if defer_waits:
            @pl.when(i == pl.num_programs(0) - 1)
            def _drain_last_step():
                wait_rows(slot)
        else:
            wait_rows(slot)

    return kernel


def push_pallas(emb, x, n_id, *, unique_indices=False):
    N, D = emb.shape
    K = int(n_id.shape[0])
    if K == 0:
        return emb
    rows = _rows_per_step(K, emb.dtype)
    # TODO(synk): PyTorch raises on out-of-range ids; we clamp defensively.
    n_id = jnp.clip(n_id.astype(jnp.int32), 0, N - 1)
    x = x.astype(emb.dtype)
    Kp = _round_up(K, rows)
    if Kp != K:
        pad = Kp - K
        # Pad with copies of the last (index, row): duplicate DMAs write
        # identical bytes to the same destination, so the result is unchanged.
        n_id = jnp.concatenate([n_id, jnp.broadcast_to(n_id[K - 1], (pad,))])
        x = jnp.concatenate([x, jnp.broadcast_to(x[K - 1], (pad, D))])
    itemsize = jnp.dtype(emb.dtype).itemsize
    # Duplicate destination rows are unordered within a step (and, with
    # deferred waits, across adjacent steps) -- matching the nondeterminism of
    # torch's emb[n_id] = x when n_id contains duplicates.
    defer_waits = not unique_indices
    semantics = ("parallel",) if unique_indices else ("arbitrary",)
    return pl.pallas_call(
        _make_scatter_kernel(rows, defer_waits),
        out_shape=jax.ShapeDtypeStruct((N, D), emb.dtype),
        grid_spec=pltpu.PrefetchScalarGridSpec(
            num_scalar_prefetch=1,
            grid=(Kp // rows,),
            in_specs=[
                pl.BlockSpec(memory_space=pl.ANY),   # emb (aliased to output)
                pl.BlockSpec(memory_space=pl.ANY),   # x rows, scattered HBM->HBM
            ],
            out_specs=pl.BlockSpec(memory_space=pl.ANY),   # in-place table
            scratch_shapes=[pltpu.SemaphoreType.DMA((2,))],
        ),
        compiler_params=pltpu.CompilerParams(dimension_semantics=semantics),
        # Input indices count the scalar-prefetch operand: 0=n_id, 1=emb, 2=x.
        input_output_aliases={1: 0},
        cost_estimate=pl.CostEstimate(
            flops=0, transcendentals=0,
            bytes_accessed=2 * Kp * D * itemsize),
    )(n_id, emb, x)


# ----------------------------------------------------------------------------
# JAX-side History module mirroring the PyTorch class.
# ----------------------------------------------------------------------------
class History:
    """A historical embedding storage module (JAX / Pallas version)."""

    def __init__(self, num_embeddings: int, embedding_dim: int):
        self.num_embeddings = num_embeddings
        self.embedding_dim = embedding_dim
        # Lane-dense internal storage: pad D up to a multiple of 128 so every
        # row DMA is >= 512 B and output stores are unmasked full-vreg vst.
        self._padded_dim = _round_up(embedding_dim, _LANE)
        self.reset_parameters()

    def reset_parameters(self):
        # torch code does emb.fill_(0)
        self.emb = jnp.zeros((self.num_embeddings, self._padded_dim), jnp.float32)

    def _unpad(self, a):
        if self._padded_dim == self.embedding_dim:
            return a
        return a[:, : self.embedding_dim]

    def pull(self, n_id=None):
        if n_id is None:
            return self._unpad(self.emb)
        return self._unpad(pull_pallas(self.emb, n_id))

    def push(self, x, n_id, unique_indices: bool = False):
        if self._padded_dim != self.embedding_dim:
            pad = self._padded_dim - self.embedding_dim
            x = jnp.concatenate(
                [x, jnp.zeros((x.shape[0], pad), x.dtype)], axis=1)
        self.emb = push_pallas(self.emb, x, n_id, unique_indices=unique_indices)

    def forward(self, *args, **kwargs):
        # TODO(synk): the reference module's forward() raises NotImplementedError;
        # there is nothing to lower here.
        raise NotImplementedError


if __name__ == "__main__":
    num_embeddings, embedding_dim = 256, 128

    key = jax.random.PRNGKey(0)
    k1, k2, k3, k4, k5 = jax.random.split(key, 5)

    # First push: 160 unique rows -> multi-step grid, "parallel" scatter path.
    n_id1 = jax.random.permutation(k1, num_embeddings)[:160].astype(jnp.int32)
    x1 = jax.random.normal(k2, (160, embedding_dim), dtype=jnp.float32)

    # Second push: 70 unique rows -> padded last block + deferred-wait path.
    n_id2 = jax.random.permutation(k3, num_embeddings)[:70].astype(jnp.int32)
    x2 = jax.random.normal(k4, (70, embedding_dim), dtype=jnp.float32)

    # Pull 100 rows -> multi-step parallel gather with a padded tail.
    pull_ids = jax.random.permutation(k5, num_embeddings)[:100].astype(jnp.int32)

    hist = History(num_embeddings, embedding_dim)
    hist.push(x1, n_id1, unique_indices=True)   # parallel in-place scatter
    hist.push(x2, n_id2)                        # sequential scatter, deferred waits
    out_full = hist.pull()                      # whole table (no gather needed)
    out_sel = hist.pull(pull_ids)               # Pallas batched gather

    jax.block_until_ready(out_full)
    jax.block_until_ready(out_sel)

    # Pure-JAX reference for semantics check.
    ref_emb = (jnp.zeros((num_embeddings, embedding_dim), jnp.float32)
               .at[n_id1].set(x1)
               .at[n_id2].set(x2))
    ref_sel = ref_emb[pull_ids]

    assert out_full.shape == (num_embeddings, embedding_dim)
    assert out_sel.shape == (100, embedding_dim)
    assert out_full.dtype == jnp.float32 and out_sel.dtype == jnp.float32
    assert jnp.allclose(out_full, ref_emb), "push (scatter) mismatch"
    assert jnp.allclose(out_sel, ref_sel), "pull (gather) mismatch"

    print("KERNEL_OK")
</pallas_src>

<mosaic_0001>
module attributes {stable_mosaic.version = 11 : i64} {
  func.func @kernel(%arg0: i32, %arg1: memref<192xi32, #tpu.memory_space<smem>>, %arg2: memref<256x128xf32, #tpu.memory_space<any>>, %arg3: memref<192x128xf32, #tpu.memory_space<any>>, %arg4: memref<256x128xf32, #tpu.memory_space<any>>, %arg5: memref<2x!tpu.dma_semaphore, #tpu.memory_space<semaphore_mem>>) attributes {dimension_semantics = [#tpu.dimension_semantics<parallel>], iteration_bounds = array<i64: 3>, scalar_prefetch = 1 : i64, scratch_operands = 1 : i64, tpu.core_type = #tpu.core_type<tc>, window_params = [{}, {}, {}]} {
    %c64_i32 = arith.constant 64 : i32
    %0 = arith.muli %arg0, %c64_i32 : i32
    %c2_i32 = arith.constant 2 : i32
    %c0_i32 = arith.constant 0 : i32
    %1 = arith.cmpi eq, %c2_i32, %c0_i32 : i32
    %c1_i32 = arith.constant 1 : i32
    %2 = arith.select %1, %c1_i32, %c2_i32 : i32
    %3 = arith.remsi %arg0, %2 : i32
    %c0_i32_0 = arith.constant 0 : i32
    %4 = arith.cmpi ne, %3, %c0_i32_0 : i32
    %c0_i32_1 = arith.constant 0 : i32
    %5 = arith.cmpi slt, %3, %c0_i32_1 : i32
    %c0_i32_2 = arith.constant 0 : i32
    %6 = arith.cmpi slt, %2, %c0_i32_2 : i32
    %7 = arith.xori %5, %6 : i1
    %8 = arith.andi %7, %4 : i1
    %9 = arith.addi %3, %2 : i32
    %10 = arith.select %8, %9, %3 : i32
    %c0_i32_3 = arith.constant 0 : i32
    %11 = arith.addi %0, %c0_i32_3 : i32
    %12 = arith.index_cast %11 : i32 to index
    %13 = memref.load %arg1[%12] : memref<192xi32, #tpu.memory_space<smem>>
    %c0_i32_4 = arith.constant 0 : i32
    %14 = arith.addi %0, %c0_i32_4 : i32
    %c0_i32_5 = arith.constant 0 : i32
    %15 = tpu.memref_slice %arg3[%14, %c0_i32_5] : memref<192x128xf32, #tpu.memory_space<any>> -> memref<1x128xf32, #tpu.memory_space<any>>
    %c0_i32_6 = arith.constant 0 : i32
    %16 = tpu.memref_slice %arg4[%13, %c0_i32_6] : memref<256x128xf32, #tpu.memory_space<any>> -> memref<1x128xf32, #tpu.memory_space<any>>
    %17 = tpu.memref_slice %arg5[%10] : memref<2x!tpu.dma_semaphore, #tpu.memory_space<semaphore_mem>> -> memref<1x!tpu.dma_semaphore, #tpu.memory_space<semaphore_mem>>
    %18 = tpu.memref_squeeze %17 : memref<1x!tpu.dma_semaphore, #tpu.memory_space<semaphore_mem>> -> memref<!tpu.dma_semaphore, #tpu.memory_space<semaphore_mem>>
    tpu.enqueue_dma source(%15 : memref<1x128xf32, #tpu.memory_space<any>>) target(%16 : memref<1x128xf32, #tpu.memory_space<any>>) target_semaphore(%18 : memref<!tpu.dma_semaphore, #tpu.memory_space<semaphore_mem>>)
    %c1_i32_7 = arith.constant 1 : i32
    %19 = arith.addi %0, %c1_i32_7 : i32
    %20 = arith.index_cast %19 : i32 to index
    %21 = memref.load %arg1[%20] : memref<192xi32, #tpu.memory_space<smem>>
    %c1_i32_8 = arith.constant 1 : i32
    %22 = arith.addi %0, %c1_i32_8 : i32
    %c0_i32_9 = arith.constant 0 : i32
    %23 = tpu.memref_slice %arg3[%22, %c0_i32_9] : memref<192x128xf32, #tpu.memory_space<any>> -> memref<1x128xf32, #tpu.memory_space<any>>
    %c0_i32_10 = arith.constant 0 : i32
    %24 = tpu.memref_slice %arg4[%21, %c0_i32_10] : memref<256x128xf32, #tpu.memory_space<any>> -> memref<1x128xf32, #tpu.memory_space<any>>
    %25 = tpu.memref_slice %arg5[%10] : memref<2x!tpu.dma_semaphore, #tpu.memory_space<semaphore_mem>> -> memref<1x!tpu.dma_semaphore, #tpu.memory_space<semaphore_mem>>
    %26 = tpu.memref_squeeze %25 : memref<1x!tpu.dma_semaphore, #tpu.memory_space<semaphore_mem>> -> memref<!tpu.dma_semaphore, #tpu.memory_space<semaphore_mem>>
    tpu.enqueue_dma source(%23 : memref<1x128xf32, #tpu.memory_space<any>>) target(%24 : memref<1x128xf32, #tpu.memory_space<any>>) target_semaphore(%26 : memref<!tpu.dma_semaphore, #tpu.memory_space<semaphore_mem>>)
    %c2_i32_11 = arith.constant 2 : i32
    %27 = arith.addi %0, %c2_i32_11 : i32
    %28 = arith.index_cast %27 : i32 to index
    %29 = memref.load %arg1[%28] : memref<192xi32, #tpu.memory_space<smem>>
    %c2_i32_12 = arith.constant 2 : i32
    %30 = arith.addi %0, %c2_i32_12 : i32
    %c0_i32_13 = arith.constant 0 : i32
    %31 = tpu.memref_slice %arg3[%30, %c0_i32_13] : memref<192x128xf32, #tpu.memory_space<any>> -> memref<1x128xf32, #tpu.memory_space<any>>
    %c0_i32_14 = arith.constant 0 : i32
    %32 = tpu.memref_slice %arg4[%29, %c0_i32_14] : memref<256x128xf32, #tpu.memory_space<any>> -> memref<1x128xf32, #tpu.memory_space<any>>
    %33 = tpu.memref_slice %arg5[%10] : memref<2x!tpu.dma_semaphore, #tpu.memory_space<semaphore_mem>> -> memref<1x!tpu.dma_semaphore, #tpu.memory_space<semaphore_mem>>
    %34 = tpu.memref_squeeze %33 : memref<1x!tpu.dma_semaphore, #tpu.memory_space<semaphore_mem>> -> memref<!tpu.dma_semaphore, #tpu.memory_space<semaphore_mem>>
    tpu.enqueue_dma source(%31 : memref<1x128xf32, #tpu.memory_space<any>>) target(%32 : memref<1x128xf32, #tpu.memory_space<any>>) target_semaphore(%34 : memref<!tpu.dma_semaphore, #tpu.memory_space<semaphore_mem>>)
    %c3_i32 = arith.constant 3 : i32
    %35 = arith.addi %0, %c3_i32 : i32
    %36 = arith.index_cast %35 : i32 to index
    %37 = memref.load %arg1[%36] : memref<192xi32, #tpu.memory_space<smem>>
    %c3_i32_15 = arith.constant 3 : i32
    %38 = arith.addi %0, %c3_i32_15 : i32
    %c0_i32_16 = arith.constant 0 : i32
    %39 = tpu.memref_slice %arg3[%38, %c0_i32_16] : memref<192x128xf32, #tpu.memory_space<any>> -> memref<1x128xf32, #tpu.memory_space<any>>
    %c0_i32_17 = arith.constant 0 : i32
    %40 = tpu.memref_slice %arg4[%37, %c0_i32_17] : memref<256x128xf32, #tpu.memory_space<any>> -> memref<1x128xf32, #tpu.memory_space<any>>
    %41 = tpu.memref_slice %arg5[%10] : memref<2x!tpu.dma_semaphore, #tpu.memory_space<semaphore_mem>> -> memref<1x!tpu.dma_semaphore, #tpu.memory_space<semaphore_mem>>
    %42 = tpu.memref_squeeze %41 : memref<1x!tpu.dma_semaphore, #tpu.memory_space<semaphore_mem>> -> memref<!tpu.dma_semaphore, #tpu.memory_space<semaphore_mem>>
    tpu.enqueue_dma source(%39 : memref<1x128xf32, #tpu.memory_space<any>>) target(%40 : memref<1x128xf32, #tpu.memory_space<any>>) target_semaphore(%42 : memref<!tpu.dma_semaphore, #tpu.memory_space<semaphore_mem>>)
    %c4_i32 = arith.constant 4 : i32
    %43 = arith.addi %0, %c4_i32 : i32
    %44 = arith.index_cast %43 : i32 to index
    %45 = memref.load %arg1[%44] : memref<192xi32, #tpu.memory_space<smem>>
    %c4_i32_18 = arith.constant 4 : i32
    %46 = arith.addi %0, %c4_i32_18 : i32
    %c0_i32_19 = arith.constant 0 : i32
    %47 = tpu.memref_slice %arg3[%46, %c0_i32_19] : memref<192x128xf32, #tpu.memory_space<any>> -> memref<1x128xf32, #tpu.memory_space<any>>
    %c0_i32_20 = arith.constant 0 : i32
    %48 = tpu.memref_slice %arg4[%45, %c0_i32_20] : memref<256x128xf32, #tpu.memory_space<any>> -> memref<1x128xf32, #tpu.memory_space<any>>
    %49 = tpu.memref_slice %arg5[%10] : memref<2x!tpu.dma_semaphore, #tpu.memory_space<semaphore_mem>> -> memref<1x!tpu.dma_semaphore, #tpu.memory_space<semaphore_mem>>
    %50 = tpu.memref_squeeze %49 : memref<1x!tpu.dma_semaphore, #tpu.memory_space<semaphore_mem>> -> memref<!tpu.dma_semaphore, #tpu.memory_space<semaphore_mem>>
    tpu.enqueue_dma source(%47 : memref<1x128xf32, #tpu.memory_space<any>>) target(%48 : memref<1x128xf32, #tpu.memory_space<any>>) target_semaphore(%50 : memref<!tpu.dma_semaphore, #tpu.memory_space<semaphore_mem>>)
    %c5_i32 = arith.constant 5 : i32
    %51 = arith.addi %0, %c5_i32 : i32
    %52 = arith.index_cast %51 : i32 to index
    %53 = memref.load %arg1[%52] : memref<192xi32, #tpu.memory_space<smem>>
    %c5_i32_21 = arith.constant 5 : i32
    %54 = arith.addi %0, %c5_i32_21 : i32
    %c0_i32_22 = arith.constant 0 : i32
    %55 = tpu.memref_slice %arg3[%54, %c0_i32_22] : memref<192x128xf32, #tpu.memory_space<any>> -> memref<1x128xf32, #tpu.memory_space<any>>
    %c0_i32_23 = arith.constant 0 : i32
    %56 = tpu.memref_slice %arg4[%53, %c0_i32_23] : memref<256x128xf32, #tpu.memory_space<any>> -> memref<1x128xf32, #tpu.memory_space<any>>
    %57 = tpu.memref_slice %arg5[%10] : memref<2x!tpu.dma_semaphore, #tpu.memory_space<semaphore_mem>> -> memref<1x!tpu.dma_semaphore, #tpu.memory_space<semaphore_mem>>
    %58 = tpu.memref_squeeze %57 : memref<1x!tpu.dma_semaphore, #tpu.memory_space<semaphore_mem>> -> memref<!tpu.dma_semaphore, #tpu.memory_space<semaphore_mem>>
    tpu.enqueue_dma source(%55 : memref<1x128xf32, #tpu.memory_space<any>>) target(%56 : memref<1x128xf32, #tpu.memory_space<any>>) target_semaphore(%58 : memref<!tpu.dma_semaphore, #tpu.memory_space<semaphore_mem>>)
    %c6_i32 = arith.constant 6 : i32
    %59 = arith.addi %0, %c6_i32 : i32
    %60 = arith.index_cast %59 : i32 to index
    %61 = memref.load %arg1[%60] : memref<192xi32, #tpu.memory_space<smem>>
    %c6_i32_24 = arith.constant 6 : i32
    %62 = arith.addi %0, %c6_i32_24 : i32
    %c0_i32_25 = arith.constant 0 : i32
    %63 = tpu.memref_slice %arg3[%62, %c0_i32_25] : memref<192x128xf32, #tpu.memory_space<any>> -> memref<1x128xf32, #tpu.memory_space<any>>
    %c0_i32_26 = arith.constant 0 : i32
    %64 = tpu.memref_slice %arg4[%61, %c0_i32_26] : memref<256x128xf32, #tpu.memory_space<any>> -> memref<1x128xf32, #tpu.memory_space<any>>
    %65 = tpu.memref_slice %arg5[%10] : memref<2x!tpu.dma_semaphore, #tpu.memory_space<semaphore_mem>> -> memref<1x!tpu.dma_semaphore, #tpu.memory_space<semaphore_mem>>
    %66 = tpu.memref_squeeze %65 : memref<1x!tpu.dma_semaphore, #tpu.memory_space<semaphore_mem>> -> memref<!tpu.dma_semaphore, #tpu.memory_space<semaphore_mem>>
    tpu.enqueue_dma source(%63 : memref<1x128xf32, #tpu.memory_space<any>>) target(%64 : memref<1x128xf32, #tpu.memory_space<any>>) target_semaphore(%66 : memref<!tpu.dma_semaphore, #tpu.memory_space<semaphore_mem>>)
    %c7_i32 = arith.constant 7 : i32
    %67 = arith.addi %0, %c7_i32 : i32
    %68 = arith.index_cast %67 : i32 to index
    %69 = memref.load %arg1[%68] : memref<192xi32, #tpu.memory_space<smem>>
    %c7_i32_27 = arith.constant 7 : i32
    %70 = arith.addi %0, %c7_i32_27 : i32
    %c0_i32_28 = arith.constant 0 : i32
    %71 = tpu.memref_slice %arg3[%70, %c0_i32_28] : memref<192x128xf32, #tpu.memory_space<any>> -> memref<1x128xf32, #tpu.memory_space<any>>
    %c0_i32_29 = arith.constant 0 : i32
    %72 = tpu.memref_slice %arg4[%69, %c0_i32_29] : memref<256x128xf32, #tpu.memory_space<any>> -> memref<1x128xf32, #tpu.memory_space<any>>
    %73 = tpu.memref_slice %arg5[%10] : memref<2x!tpu.dma_semaphore, #tpu.memory_space<semaphore_mem>> -> memref<1x!tpu.dma_semaphore, #tpu.memory_space<semaphore_mem>>
    %74 = tpu.memref_squeeze %73 : memref<1x!tpu.dma_semaphore, #tpu.memory_space<semaphore_mem>> -> memref<!tpu.dma_semaphore, #tpu.memory_space<semaphore_mem>>
    tpu.enqueue_dma source(%71 : memref<1x128xf32, #tpu.memory_space<any>>) target(%72 : memref<1x128xf32, #tpu.memory_space<any>>) target_semaphore(%74 : memref<!tpu.dma_semaphore, #tpu.memory_space<semaphore_mem>>)
    %c8_i32 = arith.constant 8 : i32
    %75 = arith.addi %0, %c8_i32 : i32
    %76 = arith.index_cast %75 : i32 to index
    %77 = memref.load %arg1[%76] : memref<192xi32, #tpu.memory_space<smem>>
    %c8_i32_30 = arith.constant 8 : i32
    %78 = arith.addi %0, %c8_i32_30 : i32
    %c0_i32_31 = arith.constant 0 : i32
    %79 = tpu.memref_slice %arg3[%78, %c0_i32_31] : memref<192x128xf32, #tpu.memory_space<any>> -> memref<1x128xf32, #tpu.memory_space<any>>
    %c0_i32_32 = arith.constant 0 : i32
    %80 = tpu.memref_slice %arg4[%77, %c0_i32_32] : memref<256x128xf32, #tpu.memory_space<any>> -> memref<1x128xf32, #tpu.memory_space<any>>
    %81 = tpu.memref_slice %arg5[%10] : memref<2x!tpu.dma_semaphore, #tpu.memory_space<semaphore_mem>> -> memref<1x!tpu.dma_semaphore, #tpu.memory_space<semaphore_mem>>
    %82 = tpu.memref_squeeze %81 : memref<1x!tpu.dma_semaphore, #tpu.memory_space<semaphore_mem>> -> memref<!tpu.dma_semaphore, #tpu.memory_space<semaphore_mem>>
    tpu.enqueue_dma source(%79 : memref<1x128xf32, #tpu.memory_space<any>>) target(%80 : memref<1x128xf32, #tpu.memory_space<any>>) target_semaphore(%82 : memref<!tpu.dma_semaphore, #tpu.memory_space<semaphore_mem>>)
    %c9_i32 = arith.constant 9 : i32
    %83 = arith.addi %0, %c9_i32 : i32
    %84 = arith.index_cast %83 : i32 to index
    %85 = memref.load %arg1[%84] : memref<192xi32, #tpu.memory_space<smem>>
    %c9_i32_33 = arith.constant 9 : i32
    %86 = arith.addi %0, %c9_i32_33 : i32
    %c0_i32_34 = arith.constant 0 : i32
    %87 = tpu.memref_slice %arg3[%86, %c0_i32_34] : memref<192x128xf32, #tpu.memory_space<any>> -> memref<1x128xf32, #tpu.memory_space<any>>
    %c0_i32_35 = arith.constant 0 : i32
    %88 = tpu.memref_slice %arg4[%85, %c0_i32_35] : memref<256x128xf32, #tpu.memory_space<any>> -> memref<1x128xf32, #tpu.memory_space<any>>
    %89 = tpu.memref_slice %arg5[%10] : memref<2x!tpu.dma_semaphore, #tpu.memory_space<semaphore_mem>> -> memref<1x!tpu.dma_semaphore, #tpu.memory_space<semaphore_mem>>
    %90 = tpu.memref_squeeze %89 : memref<1x!tpu.dma_semaphore, #tpu.memory_space<semaphore_mem>> -> memref<!tpu.dma_semaphore, #tpu.memory_space<semaphore_mem>>
    tpu.enqueue_dma source(%87 : memref<1x128xf32, #tpu.memory_space<any>>) target(%88 : memref<1x128xf32, #tpu.memory_space<any>>) target_semaphore(%90 : memref<!tpu.dma_semaphore, #tpu.memory_space<semaphore_mem>>)
    %c10_i32 = arith.constant 10 : i32
    %91 = arith.addi %0, %c10_i32 : i32
    %92 = arith.index_cast %91 : i32 to index
    %93 = memref.load %arg1[%92] : memref<192xi32, #tpu.memory_space<smem>>
    %c10_i32_36 = arith.constant 10 : i32
    %94 = arith.addi %0, %c10_i32_36 : i32
    %c0_i32_37 = arith.constant 0 : i32
    %95 = tpu.memref_slice %arg3[%94, %c0_i32_37] : memref<192x128xf32, #tpu.memory_space<any>> -> memref<1x128xf32, #tpu.memory_space<any>>
    %c0_i32_38 = arith.constant 0 : i32
    %96 = tpu.memref_slice %arg4[%93, %c0_i32_38] : memref<256x128xf32, #tpu.memory_space<any>> -> memref<1x128xf32, #tpu.memory_space<any>>
    %97 = tpu.memref_slice %arg5[%10] : memref<2x!tpu.dma_semaphore, #tpu.memory_space<semaphore_mem>> -> memref<1x!tpu.dma_semaphore, #tpu.memory_space<semaphore_mem>>
    %98 = tpu.memref_squeeze %97 : memref<1x!tpu.dma_semaphore, #tpu.memory_space<semaphore_mem>> -> memref<!tpu.dma_semaphore, #tpu.memory_space<semaphore_mem>>
    tpu.enqueue_dma source(%95 : memref<1x128xf32, #tpu.memory_space<any>>) target(%96 : memref<1x128xf32, #tpu.memory_space<any>>) target_semaphore(%98 : memref<!tpu.dma_semaphore, #tpu.memory_space<semaphore_mem>>)
    %c11_i32 = arith.constant 11 : i32
    %99 = arith.addi %0, %c11_i32 : i32
    %100 = arith.index_cast %99 : i32 to index
    %101 = memref.load %arg1[%100] : memref<192xi32, #tpu.memory_space<smem>>
    %c11_i32_39 = arith.constant 11 : i32
    %102 = arith.addi %0, %c11_i32_39 : i32
    %c0_i32_40 = arith.constant 0 : i32
    %103 = tpu.memref_slice %arg3[%102, %c0_i32_40] : memref<192x128xf32, #tpu.memory_space<any>> -> memref<1x128xf32, #tpu.memory_space<any>>
    %c0_i32_41 = arith.constant 0 : i32
    %104 = tpu.memref_slice %arg4[%101, %c0_i32_41] : memref<256x128xf32, #tpu.memory_space<any>> -> memref<1x128xf32, #tpu.memory_space<any>>
    %105 = tpu.memref_slice %arg5[%10] : memref<2x!tpu.dma_semaphore, #tpu.memory_space<semaphore_mem>> -> memref<1x!tpu.dma_semaphore, #tpu.memory_space<semaphore_mem>>
    %106 = tpu.memref_squeeze %105 : memref<1x!tpu.dma_semaphore, #tpu.memory_space<semaphore_mem>> -> memref<!tpu.dma_semaphore, #tpu.memory_space<semaphore_mem>>
    tpu.enqueue_dma source(%103 : memref<1x128xf32, #tpu.memory_space<any>>) target(%104 : memref<1x128xf32, #tpu.memory_space<any>>) target_semaphore(%106 : memref<!tpu.dma_semaphore, #tpu.memory_space<semaphore_mem>>)
    %c12_i32 = arith.constant 12 : i32
    %107 = arith.addi %0, %c12_i32 : i32
    %108 = arith.index_cast %107 : i32 to index
    %109 = memref.load %arg1[%108] : memref<192xi32, #tpu.memory_space<smem>>
    %c12_i32_42 = arith.constant 12 : i32
    %110 = arith.addi %0, %c12_i32_42 : i32
    %c0_i32_43 = arith.constant 0 : i32
    %111 = tpu.memref_slice %arg3[%110, %c0_i32_43] : memref<192x128xf32, #tpu.memory_space<any>> -> memref<1x128xf32, #tpu.memory_space<any>>
    %c0_i32_44 = arith.constant 0 : i32
    %112 = tpu.memref_slice %arg4[%109, %c0_i32_44] : memref<256x128xf32, #tpu.memory_space<any>> -> memref<1x128xf32, #tpu.memory_space<any>>
    %113 = tpu.memref_slice %arg5[%10] : memref<2x!tpu.dma_semaphore, #tpu.memory_space<semaphore_mem>> -> memref<1x!tpu.dma_semaphore, #tpu.memory_space<semaphore_mem>>
    %114 = tpu.memref_squeeze %113 : memref<1x!tpu.dma_semaphore, #tpu.memory_space<semaphore_mem>> -> memref<!tpu.dma_semaphore, #tpu.memory_space<semaphore_mem>>
    tpu.enqueue_dma source(%111 : memref<1x128xf32, #tpu.memory_space<any>>) target(%112 : memref<1x128xf32, #tpu.memory_space<any>>) target_semaphore(%114 : memref<!tpu.dma_semaphore, #tpu.memory_space<semaphore_mem>>)
    %c13_i32 = arith.constant 13 : i32
    %115 = arith.addi %0, %c13_i32 : i32
    %116 = arith.index_cast %115 : i32 to index
    %117 = memref.load %arg1[%116] : memref<192xi32, #tpu.memory_space<smem>>
    %c13_i32_45 = arith.constant 13 : i32
    %118 = arith.addi %0, %c13_i32_45 : i32
    %c0_i32_46 = arith.constant 0 : i32
    %119 = tpu.memref_slice %arg3[%118, %c0_i32_46] : memref<192x128xf32, #tpu.memory_space<any>> -> memref<1x128xf32, #tpu.memory_space<any>>
    %c0_i32_47 = arith.constant 0 : i32
    %120 = tpu.memref_slice %arg4[%117, %c0_i32_47] : memref<256x128xf32, #tpu.memory_space<any>> -> memref<1x128xf32, #tpu.memory_space<any>>
    %121 = tpu.memref_slice %arg5[%10] : memref<2x!tpu.dma_semaphore, #tpu.memory_space<semaphore_mem>> -> memref<1x!tpu.dma_semaphore, #tpu.memory_space<semaphore_mem>>
    %122 = tpu.memref_squeeze %121 : memref<1x!tpu.dma_semaphore, #tpu.memory_space<semaphore_mem>> -> memref<!tpu.dma_semaphore, #tpu.memory_space<semaphore_mem>>
    tpu.enqueue_dma source(%119 : memref<1x128xf32, #tpu.memory_space<any>>) target(%120 : memref<1x128xf32, #tpu.memory_space<any>>) target_semaphore(%122 : memref<!tpu.dma_semaphore, #tpu.memory_space<semaphore_mem>>)
    %c14_i32 = arith.constant 14 : i32
    %123 = arith.addi %0, %c14_i32 : i32
    %124 = arith.index_cast %123 : i32 to index
    %125 = memref.load %arg1[%124] : memref<192xi32, #tpu.memory_space<smem>>
    %c14_i32_48 = arith.constant 14 : i32
    %126 = arith.addi %0, %c14_i32_48 : i32
    %c0_i32_49 = arith.constant 0 : i32
    %127 = tpu.memref_slice %arg3[%126, %c0_i32_49] : memref<192x128xf32, #tpu.memory_space<any>> -> memref<1x128xf32, #tpu.memory_space<any>>
    %c0_i32_50 = arith.constant 0 : i32
    %128 = tpu.memref_slice %arg4[%125, %c0_i32_50] : memref<256x128xf32, #tpu.memory_space<any>> -> memref<1x128xf32, #tpu.memory_space<any>>
    %129 = tpu.memref_slice %arg5[%10] : memref<2x!tpu.dma_semaphore, #tpu.memory_space<semaphore_mem>> -> memref<1x!tpu.dma_semaphore, #tpu.memory_space<semaphore_mem>>
    %130 = tpu.memref_squeeze %129 : memref<1x!tpu.dma_semaphore, #tpu.memory_space<semaphore_mem>> -> memref<!tpu.dma_semaphore, #tpu.memory_space<semaphore_mem>>
    tpu.enqueue_dma source(%127 : memref<1x128xf32, #tpu.memory_space<any>>) target(%128 : memref<1x128xf32, #tpu.memory_space<any>>) target_semaphore(%130 : memref<!tpu.dma_semaphore, #tpu.memory_space<semaphore_mem>>)
    %c15_i32 = arith.constant 15 : i32
    %131 = arith.addi %0, %c15_i32 : i32
    %132 = arith.index_cast %131 : i32 to index
    %133 = memref.load %arg1[%132] : memref<192xi32, #tpu.memory_space<smem>>
    %c15_i32_51 = arith.constant 15 : i32
    %134 = arith.addi %0, %c15_i32_51 : i32
    %c0_i32_52 = arith.constant 0 : i32
    %135 = tpu.memref_slice %arg3[%134, %c0_i32_52] : memref<192x128xf32, #tpu.memory_space<any>> -> memref<1x128xf32, #tpu.memory_space<any>>
    %c0_i32_53 = arith.constant 0 : i32
    %136 = tpu.memref_slice %arg4[%133, %c0_i32_53] : memref<256x128xf32, #tpu.memory_space<any>> -> memref<1x128xf32, #tpu.memory_space<any>>
    %137 = tpu.memref_slice %arg5[%10] : memref<2x!tpu.dma_semaphore, #tpu.memory_space<semaphore_mem>> -> memref<1x!tpu.dma_semaphore, #tpu.memory_space<semaphore_mem>>
    %138 = tpu.memref_squeeze %137 : memref<1x!tpu.dma_semaphore, #tpu.memory_space<semaphore_mem>> -> memref<!tpu.dma_semaphore, #tpu.memory_space<semaphore_mem>>
    tpu.enqueue_dma source(%135 : memref<1x128xf32, #tpu.memory_space<any>>) target(%136 : memref<1x128xf32, #tpu.memory_space<any>>) target_semaphore(%138 : memref<!tpu.dma_semaphore, #tpu.memory_space<semaphore_mem>>)
    %c16_i32 = arith.constant 16 : i32
    %139 = arith.addi %0, %c16_i32 : i32
    %140 = arith.index_cast %139 : i32 to index
    %141 = memref.load %arg1[%140] : memref<192xi32, #tpu.memory_space<smem>>
    %c16_i32_54 = arith.constant 16 : i32
    %142 = arith.addi %0, %c16_i32_54 : i32
    %c0_i32_55 = arith.constant 0 : i32
    %143 = tpu.memref_slice %arg3[%142, %c0_i32_55] : memref<192x128xf32, #tpu.memory_space<any>> -> memref<1x128xf32, #tpu.memory_space<any>>
    %c0_i32_56 = arith.constant 0 : i32
    %144 = tpu.memref_slice %arg4[%141, %c0_i32_56] : memref<256x128xf32, #tpu.memory_space<any>> -> memref<1x128xf32, #tpu.memory_space<any>>
    %145 = tpu.memref_slice %arg5[%10] : memref<2x!tpu.dma_semaphore, #tpu.memory_space<semaphore_mem>> -> memref<1x!tpu.dma_semaphore, #tpu.memory_space<semaphore_mem>>
    %146 = tpu.memref_squeeze %145 : memref<1x!tpu.dma_semaphore, #tpu.memory_space<semaphore_mem>> -> memref<!tpu.dma_semaphore, #tpu.memory_space<semaphore_mem>>
    tpu.enqueue_dma source(%143 : memref<1x128xf32, #tpu.memory_space<any>>) target(%144 : memref<1x128xf32, #tpu.memory_space<any>>) target_semaphore(%146 : memref<!tpu.dma_semaphore, #tpu.memory_space<semaphore_mem>>)
    %c17_i32 = arith.constant 17 : i32
    %147 = arith.addi %0, %c17_i32 : i32
    %148 = arith.index_cast %147 : i32 to index
    %149 = memref.load %arg1[%148] : memref<192xi32, #tpu.memory_space<smem>>
    %c17_i32_57 = arith.constant 17 : i32
    %150 = arith.addi %0, %c17_i32_57 : i32
    %c0_i32_58 = arith.constant 0 : i32
    %151 = tpu.memref_slice %arg3[%150, %c0_i32_58] : memref<192x128xf32, #tpu.memory_space<any>> -> memref<1x128xf32, #tpu.memory_space<any>>
    %c0_i32_59 = arith.constant 0 : i32
    %152 = tpu.memref_slice %arg4[%149, %c0_i32_59] : memref<256x128xf32, #tpu.memory_space<any>> -> memref<1x128xf32, #tpu.memory_space<any>>
    %153 = tpu.memref_slice %arg5[%10] : memref<2x!tpu.dma_semaphore, #tpu.memory_space<semaphore_mem>> -> memref<1x!tpu.dma_semaphore, #tpu.memory_space<semaphore_mem>>
    %154 = tpu.memref_squeeze %153 : memref<1x!tpu.dma_semaphore, #tpu.memory_space<semaphore_mem>> -> memref<!tpu.dma_semaphore, #tpu.memory_space<semaphore_mem>>
    tpu.enqueue_dma source(%151 : memref<1x128xf32, #tpu.memory_space<any>>) target(%152 : memref<1x128xf32, #tpu.memory_space<any>>) target_semaphore(%154 : memref<!tpu.dma_semaphore, #tpu.memory_space<semaphore_mem>>)
    %c18_i32 = arith.constant 18 : i32
    %155 = arith.addi %0, %c18_i32 : i32
    %156 = arith.index_cast %155 : i32 to index
    %157 = memref.load %arg1[%156] : memref<192xi32, #tpu.memory_space<smem>>
    %c18_i32_60 = arith.constant 18 : i32
    %158 = arith.addi %0, %c18_i32_60 : i32
    %c0_i32_61 = arith.constant 0 : i32
    %159 = tpu.memref_slice %arg3[%158, %c0_i32_61] : memref<192x128xf32, #tpu.memory_space<any>> -> memref<1x128xf32, #tpu.memory_space<any>>
    %c0_i32_62 = arith.constant 0 : i32
    %160 = tpu.memref_slice %arg4[%157, %c0_i32_62] : memref<256x128xf32, #tpu.memory_space<any>> -> memref<1x128xf32, #tpu.memory_space<any>>
    %161 = tpu.memref_slice %arg5[%10] : memref<2x!tpu.dma_semaphore, #tpu.memory_space<semaphore_mem>> -> memref<1x!tpu.dma_semaphore, #tpu.memory_space<semaphore_mem>>
    %162 = tpu.memref_squeeze %161 : memref<1x!tpu.dma_semaphore, #tpu.memory_space<semaphore_mem>> -> memref<!tpu.dma_semaphore, #tpu.memory_space<semaphore_mem>>
    tpu.enqueue_dma source(%159 : memref<1x128xf32, #tpu.memory_space<any>>) target(%160 : memref<1x128xf32, #tpu.memory_space<any>>) target_semaphore(%162 : memref<!tpu.dma_semaphore, #tpu.memory_space<semaphore_mem>>)
    %c19_i32 = arith.constant 19 : i32
    %163 = arith.addi %0, %c19_i32 : i32
    %164 = arith.index_cast %163 : i32 to index
    %165 = memref.load %arg1[%164] : memref<192xi32, #tpu.memory_space<smem>>
    %c19_i32_63 = arith.constant 19 : i32
    %166 = arith.addi %0, %c19_i32_63 : i32
    %c0_i32_64 = arith.constant 0 : i32
    %167 = tpu.memref_slice %arg3[%166, %c0_i32_64] : memref<192x128xf32, #tpu.memory_space<any>> -> memref<1x128xf32, #tpu.memory_space<any>>
    %c0_i32_65 = arith.constant 0 : i32
    %168 = tpu.memref_slice %arg4[%165, %c0_i32_65] : memref<256x128xf32, #tpu.memory_space<any>> -> memref<1x128xf32, #tpu.memory_space<any>>
    %169 = tpu.memref_slice %arg5[%10] : memref<2x!tpu.dma_semaphore, #tpu.memory_space<semaphore_mem>> -> memref<1x!tpu.dma_semaphore, #tpu.memory_space<semaphore_mem>>
    %170 = tpu.memref_squeeze %169 : memref<1x!tpu.dma_semaphore, #tpu.memory_space<semaphore_mem>> -> memref<!tpu.dma_semaphore, #tpu.memory_space<semaphore_mem>>
    tpu.enqueue_dma source(%167 : memref<1x128xf32, #tpu.memory_space<any>>) target(%168 : memref<1x128xf32, #tpu.memory_space<any>>) target_semaphore(%170 : memref<!tpu.dma_semaphore, #tpu.memory_space<semaphore_mem>>)
    %c20_i32 = arith.constant 20 : i32
    %171 = arith.addi %0, %c20_i32 : i32
    %172 = arith.index_cast %171 : i32 to index
    %173 = memref.load %arg1[%172] : memref<192xi32, #tpu.memory_space<smem>>
    %c20_i32_66 = arith.constant 20 : i32
    %174 = arith.addi %0, %c20_i32_66 : i32
    %c0_i32_67 = arith.constant 0 : i32
    %175 = tpu.memref_slice %arg3[%174, %c0_i32_67] : memref<192x128xf32, #tpu.memory_space<any>> -> memref<1x128xf32, #tpu.memory_space<any>>
    %c0_i32_68 = arith.constant 0 : i32
    %176 = tpu.memref_slice %arg4[%173, %c0_i32_68] : memref<256x128xf32, #tpu.memory_space<any>> -> memref<1x128xf32, #tpu.memory_space<any>>
    %177 = tpu.memref_slice %arg5[%10] : memref<2x!tpu.dma_semaphore, #tpu.memory_space<semaphore_mem>> -> memref<1x!tpu.dma_semaphore, #tpu.memory_space<semaphore_mem>>
    %178 = tpu.memref_squeeze %177 : memref<1x!tpu.dma_semaphore, #tpu.memory_space<semaphore_mem>> -> memref<!tpu.dma_semaphore, #tpu.memory_space<semaphore_mem>>
    tpu.enqueue_dma source(%175 : memref<1x128xf32, #tpu.memory_space<any>>) target(%176 : memref<1x128xf32, #tpu.memory_space<any>>) target_semaphore(%178 : memref<!tpu.dma_semaphore, #tpu.memory_space<semaphore_mem>>)
    %c21_i32 = arith.constant 21 : i32
    %179 = arith.addi %0, %c21_i32 : i32
    %180 = arith.index_cast %179 : i32 to index
    %181 = memref.load %arg1[%180] : memref<192xi32, #tpu.memory_space<smem>>
    %c21_i32_69 = arith.constant 21 : i32
    %182 = arith.addi %0, %c21_i32_69 : i32
    %c0_i32_70 = arith.constant 0 : i32
    %183 = tpu.memref_slice %arg3[%182, %c0_i32_70] : memref<192x128xf32, #tpu.memory_space<any>> -> memref<1x128xf32, #tpu.memory_space<any>>
    %c0_i32_71 = arith.constant 0 : i32
    %184 = tpu.memref_slice %arg4[%181, %c0_i32_71] : memref<256x128xf32, #tpu.memory_space<any>> -> memref<1x128xf32, #tpu.memory_space<any>>
    %185 = tpu.memref_slice %arg5[%10] : memref<2x!tpu.dma_semaphore, #tpu.memory_space<semaphore_mem>> -> memref<1x!tpu.dma_semaphore, #tpu.memory_space<semaphore_mem>>
    %186 = tpu.memref_squeeze %185 : memref<1x!tpu.dma_semaphore, #tpu.memory_space<semaphore_mem>> -> memref<!tpu.dma_semaphore, #tpu.memory_space<semaphore_mem>>
    tpu.enqueue_dma source(%183 : memref<1x128xf32, #tpu.memory_space<any>>) target(%184 : memref<1x128xf32, #tpu.memory_space<any>>) target_semaphore(%186 : memref<!tpu.dma_semaphore, #tpu.memory_space<semaphore_mem>>)
    %c22_i32 = arith.constant 22 : i32
    %187 = arith.addi %0, %c22_i32 : i32
    %188 = arith.index_cast %187 : i32 to index
    %189 = memref.load %arg1[%188] : memref<192xi32, #tpu.memory_space<smem>>
    %c22_i32_72 = arith.constant 22 : i32
    %190 = arith.addi %0, %c22_i32_72 : i32
    %c0_i32_73 = arith.constant 0 : i32
    %191 = tpu.memref_slice %arg3[%190, %c0_i32_73] : memref<192x128xf32, #tpu.memory_space<any>> -> memref<1x128xf32, #tpu.memory_space<any>>
    %c0_i32_74 = arith.constant 0 : i32
    %192 = tpu.memref_slice %arg4[%189, %c0_i32_74] : memref<256x128xf32, #tpu.memory_space<any>> -> memref<1x128xf32, #tpu.memory_space<any>>
    %193 = tpu.memref_slice %arg5[%10] : memref<2x!tpu.dma_semaphore, #tpu.memory_space<semaphore_mem>> -> memref<1x!tpu.dma_semaphore, #tpu.memory_space<semaphore_mem>>
    %194 = tpu.memref_squeeze %193 : memref<1x!tpu.dma_semaphore, #tpu.memory_space<semaphore_mem>> -> memref<!tpu.dma_semaphore, #tpu.memory_space<semaphore_mem>>
    tpu.enqueue_dma source(%191 : memref<1x128xf32, #tpu.memory_space<any>>) target(%192 : memref<1x128xf32, #tpu.memory_space<any>>) target_semaphore(%194 : memref<!tpu.dma_semaphore, #tpu.memory_space<semaphore_mem>>)
    %c23_i32 = arith.constant 23 : i32
    %195 = arith.addi %0, %c23_i32 : i32
    %196 = arith.index_cast %195 : i32 to index
    %197 = memref.load %arg1[%196] : memref<192xi32, #tpu.memory_space<smem>>
    %c23_i32_75 = arith.constant 23 : i32
    %198 = arith.addi %0, %c23_i32_75 : i32
    %c0_i32_76 = arith.constant 0 : i32
    %199 = tpu.memref_slice %arg3[%198, %c0_i32_76] : memref<192x128xf32, #tpu.memory_space<any>> -> memref<1x128xf32, #tpu.memory_space<any>>
    %c0_i32_77 = arith.constant 0 : i32
    %200 = tpu.memref_slice %arg4[%197, %c0_i32_77] : memref<256x128xf32, #tpu.memory_space<any>> -> memref<1x128xf32, #tpu.memory_space<any>>
    %201 = tpu.memref_slice %arg5[%10] : memref<2x!tpu.dma_semaphore, #tpu.memory_space<semaphore_mem>> -> memref<1x!tpu.dma_semaphore, #tpu.memory_space<semaphore_mem>>
    %202 = tpu.memref_squeeze %201 : memref<1x!tpu.dma_semaphore, #tpu.memory_space<semaphore_mem>> -> memref<!tpu.dma_semaphore, #tpu.memory_space<semaphore_mem>>
    tpu.enqueue_dma source(%199 : memref<1x128xf32, #tpu.memory_space<any>>) target(%200 : memref<1x128xf32, #tpu.memory_space<any>>) target_semaphore(%202 : memref<!tpu.dma_semaphore, #tpu.memory_space<semaphore_mem>>)
    %c24_i32 = arith.constant 24 : i32
    %203 = arith.addi %0, %c24_i32 : i32
    %204 = arith.index_cast %203 : i32 to index
    %205 = memref.load %arg1[%204] : memref<192xi32, #tpu.memory_space<smem>>
    %c24_i32_78 = arith.constant 24 : i32
    %206 = arith.addi %0, %c24_i32_78 : i32
    %c0_i32_79 = arith.constant 0 : i32
    %207 = tpu.memref_slice %arg3[%206, %c0_i32_79] : memref<192x128xf32, #tpu.memory_space<any>> -> memref<1x128xf32, #tpu.memory_space<any>>
    %c0_i32_80 = arith.constant 0 : i32
    %208 = tpu.memref_slice %arg4[%205, %c0_i32_80] : memref<256x128xf32, #tpu.memory_space<any>> -> memref<1x128xf32, #tpu.memory_space<any>>
    %209 = tpu.memref_slice %arg5[%10] : memref<2x!tpu.dma_semaphore, #tpu.memory_space<semaphore_mem>> -> memref<1x!tpu.dma_semaphore, #tpu.memory_space<semaphore_mem>>
    %210 = tpu.memref_squeeze %209 : memref<1x!tpu.dma_semaphore, #tpu.memory_space<semaphore_mem>> -> memref<!tpu.dma_semaphore, #tpu.memory_space<semaphore_mem>>
    tpu.enqueue_dma source(%207 : memref<1x128xf32, #tpu.memory_space<any>>) target(%208 : memref<1x128xf32, #tpu.memory_space<any>>) target_semaphore(%210 : memref<!tpu.dma_semaphore, #tpu.memory_space<semaphore_mem>>)
    %c25_i32 = arith.constant 25 : i32
    %211 = arith.addi %0, %c25_i32 : i32
    %212 = arith.index_cast %211 : i32 to index
    %213 = memref.load %arg1[%212] : memref<192xi32, #tpu.memory_space<smem>>
    %c25_i32_81 = arith.constant 25 : i32
    %214 = arith.addi %0, %c25_i32_81 : i32
    %c0_i32_82 = arith.constant 0 : i32
    %215 = tpu.memref_slice %arg3[%214, %c0_i32_82] : memref<192x128xf32, #tpu.memory_space<any>> -> memref<1x128xf32, #tpu.memory_space<any>>
    %c0_i32_83 = arith.constant 0 : i32
    %216 = tpu.memref_slice %arg4[%213, %c0_i32_83] : memref<256x128xf32, #tpu.memory_space<any>> -> memref<1x128xf32, #tpu.memory_space<any>>
    %217 = tpu.memref_slice %arg5[%10] : memref<2x!tpu.dma_semaphore, #tpu.memory_space<semaphore_mem>> -> memref<1x!tpu.dma_semaphore, #tpu.memory_space<semaphore_mem>>
    %218 = tpu.memref_squeeze %217 : memref<1x!tpu.dma_semaphore, #tpu.memory_space<semaphore_mem>> -> memref<!tpu.dma_semaphore, #tpu.memory_space<semaphore_mem>>
    tpu.enqueue_dma source(%215 : memref<1x128xf32, #tpu.memory_space<any>>) target(%216 : memref<1x128xf32, #tpu.memory_space<any>>) target_semaphore(%218 : memref<!tpu.dma_semaphore, #tpu.memory_space<semaphore_mem>>)
    %c26_i32 = arith.constant 26 : i32
    %219 = arith.addi %0, %c26_i32 : i32
    %220 = arith.index_cast %219 : i32 to index
    %221 = memref.load %arg1[%220] : memref<192xi32, #tpu.memory_space<smem>>
    %c26_i32_84 = arith.constant 26 : i32
    %222 = arith.addi %0, %c26_i32_84 : i32
    %c0_i32_85 = arith.constant 0 : i32
    %223 = tpu.memref_slice %arg3[%222, %c0_i32_85] : memref<192x128xf32, #tpu.memory_space<any>> -> memref<1x128xf32, #tpu.memory_space<any>>
    %c0_i32_86 = arith.constant 0 : i32
    %224 = tpu.memref_slice %arg4[%221, %c0_i32_86] : memref<256x128xf32, #tpu.memory_space<any>> -> memref<1x128xf32, #tpu.memory_space<any>>
    %225 = tpu.memref_slice %arg5[%10] : memref<2x!tpu.dma_semaphore, #tpu.memory_space<semaphore_mem>> -> memref<1x!tpu.dma_semaphore, #tpu.memory_space<semaphore_mem>>
    %226 = tpu.memref_squeeze %225 : memref<1x!tpu.dma_semaphore, #tpu.memory_space<semaphore_mem>> -> memref<!tpu.dma_semaphore, #tpu.memory_space<semaphore_mem>>
    tpu.enqueue_dma source(%223 : memref<1x128xf32, #tpu.memory_space<any>>) target(%224 : memref<1x128xf32, #tpu.memory_space<any>>) target_semaphore(%226 : memref<!tpu.dma_semaphore, #tpu.memory_space<semaphore_mem>>)
    %c27_i32 = arith.constant 27 : i32
    %227 = arith.addi %0, %c27_i32 : i32
    %228 = arith.index_cast %227 : i32 to index
    %229 = memref.load %arg1[%228] : memref<192xi32, #tpu.memory_space<smem>>
    %c27_i32_87 = arith.constant 27 : i32
    %230 = arith.addi %0, %c27_i32_87 : i32
    %c0_i32_88 = arith.constant 0 : i32
    %231 = tpu.memref_slice %arg3[%230, %c0_i32_88] : memref<192x128xf32, #tpu.memory_space<any>> -> memref<1x128xf32, #tpu.memory_space<any>>
    %c0_i32_89 = arith.constant 0 : i32
    %232 = tpu.memref_slice %arg4[%229, %c0_i32_89] : memref<256x128xf32, #tpu.memory_space<any>> -> memref<1x128xf32, #tpu.memory_space<any>>
    %233 = tpu.memref_slice %arg5[%10] : memref<2x!tpu.dma_semaphore, #tpu.memory_space<semaphore_mem>> -> memref<1x!tpu.dma_semaphore, #tpu.memory_space<semaphore_mem>>
    %234 = tpu.memref_squeeze %233 : memref<1x!tpu.dma_semaphore, #tpu.memory_space<semaphore_mem>> -> memref<!tpu.dma_semaphore, #tpu.memory_space<semaphore_mem>>
    tpu.enqueue_dma source(%231 : memref<1x128xf32, #tpu.memory_space<any>>) target(%232 : memref<1x128xf32, #tpu.memory_space<any>>) target_semaphore(%234 : memref<!tpu.dma_semaphore, #tpu.memory_space<semaphore_mem>>)
    %c28_i32 = arith.constant 28 : i32
    %235 = arith.addi %0, %c28_i32 : i32
    %236 = arith.index_cast %235 : i32 to index
    %237 = memref.load %arg1[%236] : memref<192xi32, #tpu.memory_space<smem>>
    %c28_i32_90 = arith.constant 28 : i32
    %238 = arith.addi %0, %c28_i32_90 : i32
    %c0_i32_91 = arith.constant 0 : i32
    %239 = tpu.memref_slice %arg3[%238, %c0_i32_91] : memref<192x128xf32, #tpu.memory_space<any>> -> memref<1x128xf32, #tpu.memory_space<any>>
    %c0_i32_92 = arith.constant 0 : i32
    %240 = tpu.memref_slice %arg4[%237, %c0_i32_92] : memref<256x128xf32, #tpu.memory_space<any>> -> memref<1x128xf32, #tpu.memory_space<any>>
    %241 = tpu.memref_slice %arg5[%10] : memref<2x!tpu.dma_semaphore, #tpu.memory_space<semaphore_mem>> -> memref<1x!tpu.dma_semaphore, #tpu.memory_space<semaphore_mem>>
    %242 = tpu.memref_squeeze %241 : memref<1x!tpu.dma_semaphore, #tpu.memory_space<semaphore_mem>> -> memref<!tpu.dma_semaphore, #tpu.memory_space<semaphore_mem>>
    tpu.enqueue_dma source(%239 : memref<1x128xf32, #tpu.memory_space<any>>) target(%240 : memref<1x128xf32, #tpu.memory_space<any>>) target_semaphore(%242 : memref<!tpu.dma_semaphore, #tpu.memory_space<semaphore_mem>>)
    %c29_i32 = arith.constant 29 : i32
    %243 = arith.addi %0, %c29_i32 : i32
    %244 = arith.index_cast %243 : i32 to index
    %245 = memref.load %arg1[%244] : memref<192xi32, #tpu.memory_space<smem>>
    %c29_i32_93 = arith.constant 29 : i32
    %246 = arith.addi %0, %c29_i32_93 : i32
    %c0_i32_94 = arith.constant 0 : i32
    %247 = tpu.memref_slice %arg3[%246, %c0_i32_94] : memref<192x128xf32, #tpu.memory_space<any>> -> memref<1x128xf32, #tpu.memory_space<any>>
    %c0_i32_95 = arith.constant 0 : i32
    %248 = tpu.memref_slice %arg4[%245, %c0_i32_95] : memref<256x128xf32, #tpu.memory_space<any>> -> memref<1x128xf32, #tpu.memory_space<any>>
    %249 = tpu.memref_slice %arg5[%10] : memref<2x!tpu.dma_semaphore, #tpu.memory_space<semaphore_mem>> -> memref<1x!tpu.dma_semaphore, #tpu.memory_space<semaphore_mem>>
    %250 = tpu.memref_squeeze %249 : memref<1x!tpu.dma_semaphore, #tpu.memory_space<semaphore_mem>> -> memref<!tpu.dma_semaphore, #tpu.memory_space<semaphore_mem>>
    tpu.enqueue_dma source(%247 : memref<1x128xf32, #tpu.memory_space<any>>) target(%248 : memref<1x128xf32, #tpu.memory_space<any>>) target_semaphore(%250 : memref<!tpu.dma_semaphore, #tpu.memory_space<semaphore_mem>>)
    %c30_i32 = arith.constant 30 : i32
    %251 = arith.addi %0, %c30_i32 : i32
    %252 = arith.index_cast %251 : i32 to index
    %253 = memref.load %arg1[%252] : memref<192xi32, #tpu.memory_space<smem>>
    %c30_i32_96 = arith.constant 30 : i32
    %254 = arith.addi %0, %c30_i32_96 : i32
    %c0_i32_97 = arith.constant 0 : i32
    %255 = tpu.memref_slice %arg3[%254, %c0_i32_97] : memref<192x128xf32, #tpu.memory_space<any>> -> memref<1x128xf32, #tpu.memory_space<any>>
    %c0_i32_98 = arith.constant 0 : i32
    %256 = tpu.memref_slice %arg4[%253, %c0_i32_98] : memref<256x128xf32, #tpu.memory_space<any>> -> memref<1x128xf32, #tpu.memory_space<any>>
    %257 = tpu.memref_slice %arg5[%10] : memref<2x!tpu.dma_semaphore, #tpu.memory_space<semaphore_mem>> -> memref<1x!tpu.dma_semaphore, #tpu.memory_space<semaphore_mem>>
    %258 = tpu.memref_squeeze %257 : memref<1x!tpu.dma_semaphore, #tpu.memory_space<semaphore_mem>> -> memref<!tpu.dma_semaphore, #tpu.memory_space<semaphore_mem>>
    tpu.enqueue_dma source(%255 : memref<1x128xf32, #tpu.memory_space<any>>) target(%256 : memref<1x128xf32, #tpu.memory_space<any>>) target_semaphore(%258 : memref<!tpu.dma_semaphore, #tpu.memory_space<semaphore_mem>>)
    %c31_i32 = arith.constant 31 : i32
    %259 = arith.addi %0, %c31_i32 : i32
    %260 = arith.index_cast %259 : i32 to index
    %261 = memref.load %arg1[%260] : memref<192xi32, #tpu.memory_space<smem>>
    %c31_i32_99 = arith.constant 31 : i32
    %262 = arith.addi %0, %c31_i32_99 : i32
    %c0_i32_100 = arith.constant 0 : i32
    %263 = tpu.memref_slice %arg3[%262, %c0_i32_100] : memref<192x128xf32, #tpu.memory_space<any>> -> memref<1x128xf32, #tpu.memory_space<any>>
    %c0_i32_101 = arith.constant 0 : i32
    %264 = tpu.memref_slice %arg4[%261, %c0_i32_101] : memref<256x128xf32, #tpu.memory_space<any>> -> memref<1x128xf32, #tpu.memory_space<any>>
    %265 = tpu.memref_slice %arg5[%10] : memref<2x!tpu.dma_semaphore, #tpu.memory_space<semaphore_mem>> -> memref<1x!tpu.dma_semaphore, #tpu.memory_space<semaphore_mem>>
    %266 = tpu.memref_squeeze %265 : memref<1x!tpu.dma_semaphore, #tpu.memory_space<semaphore_mem>> -> memref<!tpu.dma_semaphore, #tpu.memory_space<semaphore_mem>>
    tpu.enqueue_dma source(%263 : memref<1x128xf32, #tpu.memory_space<any>>) target(%264 : memref<1x128xf32, #tpu.memory_space<any>>) target_semaphore(%266 : memref<!tpu.dma_semaphore, #tpu.memory_space<semaphore_mem>>)
    %c32_i32 = arith.constant 32 : i32
    %267 = arith.addi %0, %c32_i32 : i32
    %268 = arith.index_cast %267 : i32 to index
    %269 = memref.load %arg1[%268] : memref<192xi32, #tpu.memory_space<smem>>
    %c32_i32_102 = arith.constant 32 : i32
    %270 = arith.addi %0, %c32_i32_102 : i32
    %c0_i32_103 = arith.constant 0 : i32
    %271 = tpu.memref_slice %arg3[%270, %c0_i32_103] : memref<192x128xf32, #tpu.memory_space<any>> -> memref<1x128xf32, #tpu.memory_space<any>>
    %c0_i32_104 = arith.constant 0 : i32
    %272 = tpu.memref_slice %arg4[%269, %c0_i32_104] : memref<256x128xf32, #tpu.memory_space<any>> -> memref<1x128xf32, #tpu.memory_space<any>>
    %273 = tpu.memref_slice %arg5[%10] : memref<2x!tpu.dma_semaphore, #tpu.memory_space<semaphore_mem>> -> memref<1x!tpu.dma_semaphore, #tpu.memory_space<semaphore_mem>>
    %274 = tpu.memref_squeeze %273 : memref<1x!tpu.dma_semaphore, #tpu.memory_space<semaphore_mem>> -> memref<!tpu.dma_semaphore, #tpu.memory_space<semaphore_mem>>
    tpu.enqueue_dma source(%271 : memref<1x128xf32, #tpu.memory_space<any>>) target(%272 : memref<1x128xf32, #tpu.memory_space<any>>) target_semaphore(%274 : memref<!tpu.dma_semaphore, #tpu.memory_space<semaphore_mem>>)
    %c33_i32 = arith.constant 33 : i32
    %275 = arith.addi %0, %c33_i32 : i32
    %276 = arith.index_cast %275 : i32 to index
    %277 = memref.load %arg1[%276] : memref<192xi32, #tpu.memory_space<smem>>
    %c33_i32_105 = arith.constant 33 : i32
    %278 = arith.addi %0, %c33_i32_105 : i32
    %c0_i32_106 = arith.constant 0 : i32
    %279 = tpu.memref_slice %arg3[%278, %c0_i32_106] : memref<192x128xf32, #tpu.memory_space<any>> -> memref<1x128xf32, #tpu.memory_space<any>>
    %c0_i32_107 = arith.constant 0 : i32
    %280 = tpu.memref_slice %arg4[%277, %c0_i32_107] : memref<256x128xf32, #tpu.memory_space<any>> -> memref<1x128xf32, #tpu.memory_space<any>>
    %281 = tpu.memref_slice %arg5[%10] : memref<2x!tpu.dma_semaphore, #tpu.memory_space<semaphore_mem>> -> memref<1x!tpu.dma_semaphore, #tpu.memory_space<semaphore_mem>>
    %282 = tpu.memref_squeeze %281 : memref<1x!tpu.dma_semaphore, #tpu.memory_space<semaphore_mem>> -> memref<!tpu.dma_semaphore, #tpu.memory_space<semaphore_mem>>
    tpu.enqueue_dma source(%279 : memref<1x128xf32, #tpu.memory_space<any>>) target(%280 : memref<1x128xf32, #tpu.memory_space<any>>) target_semaphore(%282 : memref<!tpu.dma_semaphore, #tpu.memory_space<semaphore_mem>>)
    %c34_i32 = arith.constant 34 : i32
    %283 = arith.addi %0, %c34_i32 : i32
    %284 = arith.index_cast %283 : i32 to index
    %285 = memref.load %arg1[%284] : memref<192xi32, #tpu.memory_space<smem>>
    %c34_i32_108 = arith.constant 34 : i32
    %286 = arith.addi %0, %c34_i32_108 : i32
    %c0_i32_109 = arith.constant 0 : i32
    %287 = tpu.memref_slice %arg3[%286, %c0_i32_109] : memref<192x128xf32, #tpu.memory_space<any>> -> memref<1x128xf32, #tpu.memory_space<any>>
    %c0_i32_110 = arith.constant 0 : i32
    %288 = tpu.memref_slice %arg4[%285, %c0_i32_110] : memref<256x128xf32, #tpu.memory_space<any>> -> memref<1x128xf32, #tpu.memory_space<any>>
    %289 = tpu.memref_slice %arg5[%10] : memref<2x!tpu.dma_semaphore, #tpu.memory_space<semaphore_mem>> -> memref<1x!tpu.dma_semaphore, #tpu.memory_space<semaphore_mem>>
    %290 = tpu.memref_squeeze %289 : memref<1x!tpu.dma_semaphore, #tpu.memory_space<semaphore_mem>> -> memref<!tpu.dma_semaphore, #tpu.memory_space<semaphore_mem>>
    tpu.enqueue_dma source(%287 : memref<1x128xf32, #tpu.memory_space<any>>) target(%288 : memref<1x128xf32, #tpu.memory_space<any>>) target_semaphore(%290 : memref<!tpu.dma_semaphore, #tpu.memory_space<semaphore_mem>>)
    %c35_i32 = arith.constant 35 : i32
    %291 = arith.addi %0, %c35_i32 : i32
    %292 = arith.index_cast %291 : i32 to index
    %293 = memref.load %arg1[%292] : memref<192xi32, #tpu.memory_space<smem>>
    %c35_i32_111 = arith.constant 35 : i32
    %294 = arith.addi %0, %c35_i32_111 : i32
    %c0_i32_112 = arith.constant 0 : i32
    %295 = tpu.memref_slice %arg3[%294, %c0_i32_112] : memref<192x128xf32, #tpu.memory_space<any>> -> memref<1x128xf32, #tpu.memory_space<any>>
    %c0_i32_113 = arith.constant 0 : i32
    %296 = tpu.memref_slice %arg4[%293, %c0_i32_113] : memref<256x128xf32, #tpu.memory_space<any>> -> memref<1x128xf32, #tpu.memory_space<any>>
    %297 = tpu.memref_slice %arg5[%10] : memref<2x!tpu.dma_semaphore, #tpu.memory_space<semaphore_mem>> -> memref<1x!tpu.dma_semaphore, #tpu.memory_space<semaphore_mem>>
    %298 = tpu.memref_squeeze %297 : memref<1x!tpu.dma_semaphore, #tpu.memory_space<semaphore_mem>> -> memref<!tpu.dma_semaphore, #tpu.memory_space<semaphore_mem>>
    tpu.enqueue_dma source(%295 : memref<1x128xf32, #tpu.memory_space<any>>) target(%296 : memref<1x128xf32, #tpu.memory_space<any>>) target_semaphore(%298 : memref<!tpu.dma_semaphore, #tpu.memory_space<semaphore_mem>>)
    %c36_i32 = arith.constant 36 : i32
    %299 = arith.addi %0, %c36_i32 : i32
    %300 = arith.index_cast %299 : i32 to index
    %301 = memref.load %arg1[%300] : memref<192xi32, #tpu.memory_space<smem>>
    %c36_i32_114 = arith.constant 36 : i32
    %302 = arith.addi %0, %c36_i32_114 : i32
    %c0_i32_115 = arith.constant 0 : i32
    %303 = tpu.memref_slice %arg3[%302, %c0_i32_115] : memref<192x128xf32, #tpu.memory_space<any>> -> memref<1x128xf32, #tpu.memory_space<any>>
    %c0_i32_116 = arith.constant 0 : i32
    %304 = tpu.memref_slice %arg4[%301, %c0_i32_116] : memref<256x128xf32, #tpu.memory_space<any>> -> memref<1x128xf32, #tpu.memory_space<any>>
    %305 = tpu.memref_slice %arg5[%10] : memref<2x!tpu.dma_semaphore, #tpu.memory_space<semaphore_mem>> -> memref<1x!tpu.dma_semaphore, #tpu.memory_space<semaphore_mem>>
    %306 = tpu.memref_squeeze %305 : memref<1x!tpu.dma_semaphore, #tpu.memory_space<semaphore_mem>> -> memref<!tpu.dma_semaphore, #tpu.memory_space<semaphore_mem>>
    tpu.enqueue_dma source(%303 : memref<1x128xf32, #tpu.memory_space<any>>) target(%304 : memref<1x128xf32, #tpu.memory_space<any>>) target_semaphore(%306 : memref<!tpu.dma_semaphore, #tpu.memory_space<semaphore_mem>>)
    %c37_i32 = arith.constant 37 : i32
    %307 = arith.addi %0, %c37_i32 : i32
    %308 = arith.index_cast %307 : i32 to index
    %309 = memref.load %arg1[%308] : memref<192xi32, #tpu.memory_space<smem>>
    %c37_i32_117 = arith.constant 37 : i32
    %310 = arith.addi %0, %c37_i32_117 : i32
    %c0_i32_118 = arith.constant 0 : i32
    %311 = tpu.memref_slice %arg3[%310, %c0_i32_118] : memref<192x128xf32, #tpu.memory_space<any>> -> memref<1x128xf32, #tpu.memory_space<any>>
    %c0_i32_119 = arith.constant 0 : i32
    %312 = tpu.memref_slice %arg4[%309, %c0_i32_119] : memref<256x128xf32, #tpu.memory_space<any>> -> memref<1x128xf32, #tpu.memory_space<any>>
    %313 = tpu.memref_slice %arg5[%10] : memref<2x!tpu.dma_semaphore, #tpu.memory_space<semaphore_mem>> -> memref<1x!tpu.dma_semaphore, #tpu.memory_space<semaphore_mem>>
    %314 = tpu.memref_squeeze %313 : memref<1x!tpu.dma_semaphore, #tpu.memory_space<semaphore_mem>> -> memref<!tpu.dma_semaphore, #tpu.memory_space<semaphore_mem>>
    tpu.enqueue_dma source(%311 : memref<1x128xf32, #tpu.memory_space<any>>) target(%312 : memref<1x128xf32, #tpu.memory_space<any>>) target_semaphore(%314 : memref<!tpu.dma_semaphore, #tpu.memory_space<semaphore_mem>>)
    %c38_i32 = arith.constant 38 : i32
    %315 = arith.addi %0, %c38_i32 : i32
    %316 = arith.index_cast %315 : i32 to index
    %317 = memref.load %arg1[%316] : memref<192xi32, #tpu.memory_space<smem>>
    %c38_i32_120 = arith.constant 38 : i32
    %318 = arith.addi %0, %c38_i32_120 : i32
    %c0_i32_121 = arith.constant 0 : i32
    %319 = tpu.memref_slice %arg3[%318, %c0_i32_121] : memref<192x128xf32, #tpu.memory_space<any>> -> memref<1x128xf32, #tpu.memory_space<any>>
    %c0_i32_122 = arith.constant 0 : i32
    %320 = tpu.memref_slice %arg4[%317, %c0_i32_122] : memref<256x128xf32, #tpu.memory_space<any>> -> memref<1x128xf32, #tpu.memory_space<any>>
    %321 = tpu.memref_slice %arg5[%10] : memref<2x!tpu.dma_semaphore, #tpu.memory_space<semaphore_mem>> -> memref<1x!tpu.dma_semaphore, #tpu.memory_space<semaphore_mem>>
    %322 = tpu.memref_squeeze %321 : memref<1x!tpu.dma_semaphore, #tpu.memory_space<semaphore_mem>> -> memref<!tpu.dma_semaphore, #tpu.memory_space<semaphore_mem>>
    tpu.enqueue_dma source(%319 : memref<1x128xf32, #tpu.memory_space<any>>) target(%320 : memref<1x128xf32, #tpu.memory_space<any>>) target_semaphore(%322 : memref<!tpu.dma_semaphore, #tpu.memory_space<semaphore_mem>>)
    %c39_i32 = arith.constant 39 : i32
    %323 = arith.addi %0, %c39_i32 : i32
    %324 = arith.index_cast %323 : i32 to index
    %325 = memref.load %arg1[%324] : memref<192xi32, #tpu.memory_space<smem>>
    %c39_i32_123 = arith.constant 39 : i32
    %326 = arith.addi %0, %c39_i32_123 : i32
    %c0_i32_124 = arith.constant 0 : i32
    %327 = tpu.memref_slice %arg3[%326, %c0_i32_124] : memref<192x128xf32, #tpu.memory_space<any>> -> memref<1x128xf32, #tpu.memory_space<any>>
    %c0_i32_125 = arith.constant 0 : i32
    %328 = tpu.memref_slice %arg4[%325, %c0_i32_125] : memref<256x128xf32, #tpu.memory_space<any>> -> memref<1x128xf32, #tpu.memory_space<any>>
    %329 = tpu.memref_slice %arg5[%10] : memref<2x!tpu.dma_semaphore, #tpu.memory_space<semaphore_mem>> -> memref<1x!tpu.dma_semaphore, #tpu.memory_space<semaphore_mem>>
    %330 = tpu.memref_squeeze %329 : memref<1x!tpu.dma_semaphore, #tpu.memory_space<semaphore_mem>> -> memref<!tpu.dma_semaphore, #tpu.memory_space<semaphore_mem>>
    tpu.enqueue_dma source(%327 : memref<1x128xf32, #tpu.memory_space<any>>) target(%328 : memref<1x128xf32, #tpu.memory_space<any>>) target_semaphore(%330 : memref<!tpu.dma_semaphore, #tpu.memory_space<semaphore_mem>>)
    %c40_i32 = arith.constant 40 : i32
    %331 = arith.addi %0, %c40_i32 : i32
    %332 = arith.index_cast %331 : i32 to index
    %333 = memref.load %arg1[%332] : memref<192xi32, #tpu.memory_space<smem>>
    %c40_i32_126 = arith.constant 40 : i32
    %334 = arith.addi %0, %c40_i32_126 : i32
    %c0_i32_127 = arith.constant 0 : i32
    %335 = tpu.memref_slice %arg3[%334, %c0_i32_127] : memref<192x128xf32, #tpu.memory_space<any>> -> memref<1x128xf32, #tpu.memory_space<any>>
    %c0_i32_128 = arith.constant 0 : i32
    %336 = tpu.memref_slice %arg4[%333, %c0_i32_128] : memref<256x128xf32, #tpu.memory_space<any>> -> memref<1x128xf32, #tpu.memory_space<any>>
    %337 = tpu.memref_slice %arg5[%10] : memref<2x!tpu.dma_semaphore, #tpu.memory_space<semaphore_mem>> -> memref<1x!tpu.dma_semaphore, #tpu.memory_space<semaphore_mem>>
    %338 = tpu.memref_squeeze %337 : memref<1x!tpu.dma_semaphore, #tpu.memory_space<semaphore_mem>> -> memref<!tpu.dma_semaphore, #tpu.memory_space<semaphore_mem>>
    tpu.enqueue_dma source(%335 : memref<1x128xf32, #tpu.memory_space<any>>) target(%336 : memref<1x128xf32, #tpu.memory_space<any>>) target_semaphore(%338 : memref<!tpu.dma_semaphore, #tpu.memory_space<semaphore_mem>>)
    %c41_i32 = arith.constant 41 : i32
    %339 = arith.addi %0, %c41_i32 : i32
    %340 = arith.index_cast %339 : i32 to index
    %341 = memref.load %arg1[%340] : memref<192xi32, #tpu.memory_space<smem>>
    %c41_i32_129 = arith.constant 41 : i32
    %342 = arith.addi %0, %c41_i32_129 : i32
    %c0_i32_130 = arith.constant 0 : i32
    %343 = tpu.memref_slice %arg3[%342, %c0_i32_130] : memref<192x128xf32, #tpu.memory_space<any>> -> memref<1x128xf32, #tpu.memory_space<any>>
    %c0_i32_131 = arith.constant 0 : i32
    %344 = tpu.memref_slice %arg4[%341, %c0_i32_131] : memref<256x128xf32, #tpu.memory_space<any>> -> memref<1x128xf32, #tpu.memory_space<any>>
    %345 = tpu.memref_slice %arg5[%10] : memref<2x!tpu.dma_semaphore, #tpu.memory_space<semaphore_mem>> -> memref<1x!tpu.dma_semaphore, #tpu.memory_space<semaphore_mem>>
    %346 = tpu.memref_squeeze %345 : memref<1x!tpu.dma_semaphore, #tpu.memory_space<semaphore_mem>> -> memref<!tpu.dma_semaphore, #tpu.memory_space<semaphore_mem>>
    tpu.enqueue_dma source(%343 : memref<1x128xf32, #tpu.memory_space<any>>) target(%344 : memref<1x128xf32, #tpu.memory_space<any>>) target_semaphore(%346 : memref<!tpu.dma_semaphore, #tpu.memory_space<semaphore_mem>>)
    %c42_i32 = arith.constant 42 : i32
    %347 = arith.addi %0, %c42_i32 : i32
    %348 = arith.index_cast %347 : i32 to index
    %349 = memref.load %arg1[%348] : memref<192xi32, #tpu.memory_space<smem>>
    %c42_i32_132 = arith.constant 42 : i32
    %350 = arith.addi %0, %c42_i32_132 : i32
    %c0_i32_133 = arith.constant 0 : i32
    %351 = tpu.memref_slice %arg3[%350, %c0_i32_133] : memref<192x128xf32, #tpu.memory_space<any>> -> memref<1x128xf32, #tpu.memory_space<any>>
    %c0_i32_134 = arith.constant 0 : i32
    %352 = tpu.memref_slice %arg4[%349, %c0_i32_134] : memref<256x128xf32, #tpu.memory_space<any>> -> memref<1x128xf32, #tpu.memory_space<any>>
    %353 = tpu.memref_slice %arg5[%10] : memref<2x!tpu.dma_semaphore, #tpu.memory_space<semaphore_mem>> -> memref<1x!tpu.dma_semaphore, #tpu.memory_space<semaphore_mem>>
    %354 = tpu.memref_squeeze %353 : memref<1x!tpu.dma_semaphore, #tpu.memory_space<semaphore_mem>> -> memref<!tpu.dma_semaphore, #tpu.memory_space<semaphore_mem>>
    tpu.enqueue_dma source(%351 : memref<1x128xf32, #tpu.memory_space<any>>) target(%352 : memref<1x128xf32, #tpu.memory_space<any>>) target_semaphore(%354 : memref<!tpu.dma_semaphore, #tpu.memory_space<semaphore_mem>>)
    %c43_i32 = arith.constant 43 : i32
    %355 = arith.addi %0, %c43_i32 : i32
    %356 = arith.index_cast %355 : i32 to index
    %357 = memref.load %arg1[%356] : memref<192xi32, #tpu.memory_space<smem>>
    %c43_i32_135 = arith.constant 43 : i32
    %358 = arith.addi %0, %c43_i32_135 : i32
    %c0_i32_136 = arith.constant 0 : i32
    %359 = tpu.memref_slice %arg3[%358, %c0_i32_136] : memref<192x128xf32, #tpu.memory_space<any>> -> memref<1x128xf32, #tpu.memory_space<any>>
    %c0_i32_137 = arith.constant 0 : i32
    %360 = tpu.memref_slice %arg4[%357, %c0_i32_137] : memref<256x128xf32, #tpu.memory_space<any>> -> memref<1x128xf32, #tpu.memory_space<any>>
    %361 = tpu.memref_slice %arg5[%10] : memref<2x!tpu.dma_semaphore, #tpu.memory_space<semaphore_mem>> -> memref<1x!tpu.dma_semaphore, #tpu.memory_space<semaphore_mem>>
    %362 = tpu.memref_squeeze %361 : memref<1x!tpu.dma_semaphore, #tpu.memory_space<semaphore_mem>> -> memref<!tpu.dma_semaphore, #tpu.memory_space<semaphore_mem>>
    tpu.enqueue_dma source(%359 : memref<1x128xf32, #tpu.memory_space<any>>) target(%360 : memref<1x128xf32, #tpu.memory_space<any>>) target_semaphore(%362 : memref<!tpu.dma_semaphore, #tpu.memory_space<semaphore_mem>>)
    %c44_i32 = arith.constant 44 : i32
    %363 = arith.addi %0, %c44_i32 : i32
    %364 = arith.index_cast %363 : i32 to index
    %365 = memref.load %arg1[%364] : memref<192xi32, #tpu.memory_space<smem>>
    %c44_i32_138 = arith.constant 44 : i32
    %366 = arith.addi %0, %c44_i32_138 : i32
    %c0_i32_139 = arith.constant 0 : i32
    %367 = tpu.memref_slice %arg3[%366, %c0_i32_139] : memref<192x128xf32, #tpu.memory_space<any>> -> memref<1x128xf32, #tpu.memory_space<any>>
    %c0_i32_140 = arith.constant 0 : i32
    %368 = tpu.memref_slice %arg4[%365, %c0_i32_140] : memref<256x128xf32, #tpu.memory_space<any>> -> memref<1x128xf32, #tpu.memory_space<any>>
    %369 = tpu.memref_slice %arg5[%10] : memref<2x!tpu.dma_semaphore, #tpu.memory_space<semaphore_mem>> -> memref<1x!tpu.dma_semaphore, #tpu.memory_space<semaphore_mem>>
    %370 = tpu.memref_squeeze %369 : memref<1x!tpu.dma_semaphore, #tpu.memory_space<semaphore_mem>> -> memref<!tpu.dma_semaphore, #tpu.memory_space<semaphore_mem>>
    tpu.enqueue_dma source(%367 : memref<1x128xf32, #tpu.memory_space<any>>) target(%368 : memref<1x128xf32, #tpu.memory_space<any>>) target_semaphore(%370 : memref<!tpu.dma_semaphore, #tpu.memory_space<semaphore_mem>>)
    %c45_i32 = arith.constant 45 : i32
    %371 = arith.addi %0, %c45_i32 : i32
    %372 = arith.index_cast %371 : i32 to index
    %373 = memref.load %arg1[%372] : memref<192xi32, #tpu.memory_space<smem>>
    %c45_i32_141 = arith.constant 45 : i32
    %374 = arith.addi %0, %c45_i32_141 : i32
    %c0_i32_142 = arith.constant 0 : i32
    %375 = tpu.memref_slice %arg3[%374, %c0_i32_142] : memref<192x128xf32, #tpu.memory_space<any>> -> memref<1x128xf32, #tpu.memory_space<any>>
    %c0_i32_143 = arith.constant 0 : i32
    %376 = tpu.memref_slice %arg4[%373, %c0_i32_143] : memref<256x128xf32, #tpu.memory_space<any>> -> memref<1x128xf32, #tpu.memory_space<any>>
    %377 = tpu.memref_slice %arg5[%10] : memref<2x!tpu.dma_semaphore, #tpu.memory_space<semaphore_mem>> -> memref<1x!tpu.dma_semaphore, #tpu.memory_space<semaphore_mem>>
    %378 = tpu.memref_squeeze %377 : memref<1x!tpu.dma_semaphore, #tpu.memory_space<semaphore_mem>> -> memref<!tpu.dma_semaphore, #tpu.memory_space<semaphore_mem>>
    tpu.enqueue_dma source(%375 : memref<1x128xf32, #tpu.memory_space<any>>) target(%376 : memref<1x128xf32, #tpu.memory_space<any>>) target_semaphore(%378 : memref<!tpu.dma_semaphore, #tpu.memory_space<semaphore_mem>>)
    %c46_i32 = arith.constant 46 : i32
    %379 = arith.addi %0, %c46_i32 : i32
    %380 = arith.index_cast %379 : i32 to index
    %381 = memref.load %arg1[%380] : memref<192xi32, #tpu.memory_space<smem>>
    %c46_i32_144 = arith.constant 46 : i32
    %382 = arith.addi %0, %c46_i32_144 : i32
    %c0_i32_145 = arith.constant 0 : i32
    %383 = tpu.memref_slice %arg3[%382, %c0_i32_145] : memref<192x128xf32, #tpu.memory_space<any>> -> memref<1x128xf32, #tpu.memory_space<any>>
    %c0_i32_146 = arith.constant 0 : i32
    %384 = tpu.memref_slice %arg4[%381, %c0_i32_146] : memref<256x128xf32, #tpu.memory_space<any>> -> memref<1x128xf32, #tpu.memory_space<any>>
    %385 = tpu.memref_slice %arg5[%10] : memref<2x!tpu.dma_semaphore, #tpu.memory_space<semaphore_mem>> -> memref<1x!tpu.dma_semaphore, #tpu.memory_space<semaphore_mem>>
    %386 = tpu.memref_squeeze %385 : memref<1x!tpu.dma_semaphore, #tpu.memory_space<semaphore_mem>> -> memref<!tpu.dma_semaphore, #tpu.memory_space<semaphore_mem>>
    tpu.enqueue_dma source(%383 : memref<1x128xf32, #tpu.memory_space<any>>) target(%384 : memref<1x128xf32, #tpu.memory_space<any>>) target_semaphore(%386 : memref<!tpu.dma_semaphore, #tpu.memory_space<semaphore_mem>>)
    %c47_i32 = arith.constant 47 : i32
    %387 = arith.addi %0, %c47_i32 : i32
    %388 = arith.index_cast %387 : i32 to index
    %389 = memref.load %arg1[%388] : memref<192xi32, #tpu.memory_space<smem>>
    %c47_i32_147 = arith.constant 47 : i32
    %390 = arith.addi %0, %c47_i32_147 : i32
    %c0_i32_148 = arith.constant 0 : i32
    %391 = tpu.memref_slice %arg3[%390, %c0_i32_148] : memref<192x128xf32, #tpu.memory_space<any>> -> memref<1x128xf32, #tpu.memory_space<any>>
    %c0_i32_149 = arith.constant 0 : i32
    %392 = tpu.memref_slice %arg4[%389, %c0_i32_149] : memref<256x128xf32, #tpu.memory_space<any>> -> memref<1x128xf32, #tpu.memory_space<any>>
    %393 = tpu.memref_slice %arg5[%10] : memref<2x!tpu.dma_semaphore, #tpu.memory_space<semaphore_mem>> -> memref<1x!tpu.dma_semaphore, #tpu.memory_space<semaphore_mem>>
    %394 = tpu.memref_squeeze %393 : memref<1x!tpu.dma_semaphore, #tpu.memory_space<semaphore_mem>> -> memref<!tpu.dma_semaphore, #tpu.memory_space<semaphore_mem>>
    tpu.enqueue_dma source(%391 : memref<1x128xf32, #tpu.memory_space<any>>) target(%392 : memref<1x128xf32, #tpu.memory_space<any>>) target_semaphore(%394 : memref<!tpu.dma_semaphore, #tpu.memory_space<semaphore_mem>>)
    %c48_i32 = arith.constant 48 : i32
    %395 = arith.addi %0, %c48_i32 : i32
    %396 = arith.index_cast %395 : i32 to index
    %397 = memref.load %arg1[%396] : memref<192xi32, #tpu.memory_space<smem>>
    %c48_i32_150 = arith.constant 48 : i32
    %398 = arith.addi %0, %c48_i32_150 : i32
    %c0_i32_151 = arith.constant 0 : i32
    %399 = tpu.memref_slice %arg3[%398, %c0_i32_151] : memref<192x128xf32, #tpu.memory_space<any>> -> memref<1x128xf32, #tpu.memory_space<any>>
    %c0_i32_152 = arith.constant 0 : i32
    %400 = tpu.memref_slice %arg4[%397, %c0_i32_152] : memref<256x128xf32, #tpu.memory_space<any>> -> memref<1x128xf32, #tpu.memory_space<any>>
    %401 = tpu.memref_slice %arg5[%10] : memref<2x!tpu.dma_semaphore, #tpu.memory_space<semaphore_mem>> -> memref<1x!tpu.dma_semaphore, #tpu.memory_space<semaphore_mem>>
    %402 = tpu.memref_squeeze %401 : memref<1x!tpu.dma_semaphore, #tpu.memory_space<semaphore_mem>> -> memref<!tpu.dma_semaphore, #tpu.memory_space<semaphore_mem>>
    tpu.enqueue_dma source(%399 : memref<1x128xf32, #tpu.memory_space<any>>) target(%400 : memref<1x128xf32, #tpu.memory_space<any>>) target_semaphore(%402 : memref<!tpu.dma_semaphore, #tpu.memory_space<semaphore_mem>>)
    %c49_i32 = arith.constant 49 : i32
    %403 = arith.addi %0, %c49_i32 : i32
    %404 = arith.index_cast %403 : i32 to index
    %405 = memref.load %arg1[%404] : memref<192xi32, #tpu.memory_space<smem>>
    %c49_i32_153 = arith.constant 49 : i32
    %406 = arith.addi %0, %c49_i32_153 : i32
    %c0_i32_154 = arith.constant 0 : i32
    %407 = tpu.memref_slice %arg3[%406, %c0_i32_154] : memref<192x128xf32, #tpu.memory_space<any>> -> memref<1x128xf32, #tpu.memory_space<any>>
    %c0_i32_155 = arith.constant 0 : i32
    %408 = tpu.memref_slice %arg4[%405, %c0_i32_155] : memref<256x128xf32, #tpu.memory_space<any>> -> memref<1x128xf32, #tpu.memory_space<any>>
    %409 = tpu.memref_slice %arg5[%10] : memref<2x!tpu.dma_semaphore, #tpu.memory_space<semaphore_mem>> -> memref<1x!tpu.dma_semaphore, #tpu.memory_space<semaphore_mem>>
    %410 = tpu.memref_squeeze %409 : memref<1x!tpu.dma_semaphore, #tpu.memory_space<semaphore_mem>> -> memref<!tpu.dma_semaphore, #tpu.memory_space<semaphore_mem>>
    tpu.enqueue_dma source(%407 : memref<1x128xf32, #tpu.memory_space<any>>) target(%408 : memref<1x128xf32, #tpu.memory_space<any>>) target_semaphore(%410 : memref<!tpu.dma_semaphore, #tpu.memory_space<semaphore_mem>>)
    %c50_i32 = arith.constant 50 : i32
    %411 = arith.addi %0, %c50_i32 : i32
    %412 = arith.index_cast %411 : i32 to index
    %413 = memref.load %arg1[%412] : memref<192xi32, #tpu.memory_space<smem>>
    %c50_i32_156 = arith.constant 50 : i32
    %414 = arith.addi %0, %c50_i32_156 : i32
    %c0_i32_157 = arith.constant 0 : i32
    %415 = tpu.memref_slice %arg3[%414, %c0_i32_157] : memref<192x128xf32, #tpu.memory_space<any>> -> memref<1x128xf32, #tpu.memory_space<any>>
    %c0_i32_158 = arith.constant 0 : i32
    %416 = tpu.memref_slice %arg4[%413, %c0_i32_158] : memref<256x128xf32, #tpu.memory_space<any>> -> memref<1x128xf32, #tpu.memory_space<any>>
    %417 = tpu.memref_slice %arg5[%10] : memref<2x!tpu.dma_semaphore, #tpu.memory_space<semaphore_mem>> -> memref<1x!tpu.dma_semaphore, #tpu.memory_space<semaphore_mem>>
    %418 = tpu.memref_squeeze %417 : memref<1x!tpu.dma_semaphore, #tpu.memory_space<semaphore_mem>> -> memref<!tpu.dma_semaphore, #tpu.memory_space<semaphore_mem>>
    tpu.enqueue_dma source(%415 : memref<1x128xf32, #tpu.memory_space<any>>) target(%416 : memref<1x128xf32, #tpu.memory_space<any>>) target_semaphore(%418 : memref<!tpu.dma_semaphore, #tpu.memory_space<semaphore_mem>>)
    %c51_i32 = arith.constant 51 : i32
    %419 = arith.addi %0, %c51_i32 : i32
    %420 = arith.index_cast %419 : i32 to index
    %421 = memref.load %arg1[%420] : memref<192xi32, #tpu.memory_space<smem>>
    %c51_i32_159 = arith.constant 51 : i32
    %422 = arith.addi %0, %c51_i32_159 : i32
    %c0_i32_160 = arith.constant 0 : i32
    %423 = tpu.memref_slice %arg3[%422, %c0_i32_160] : memref<192x128xf32, #tpu.memory_space<any>> -> memref<1x128xf32, #tpu.memory_space<any>>
    %c0_i32_161 = arith.constant 0 : i32
    %424 = tpu.memref_slice %arg4[%421, %c0_i32_161] : memref<256x128xf32, #tpu.memory_space<any>> -> memref<1x128xf32, #tpu.memory_space<any>>
    %425 = tpu.memref_slice %arg5[%10] : memref<2x!tpu.dma_semaphore, #tpu.memory_space<semaphore_mem>> -> memref<1x!tpu.dma_semaphore, #tpu.memory_space<semaphore_mem>>
    %426 = tpu.memref_squeeze %425 : memref<1x!tpu.dma_semaphore, #tpu.memory_space<semaphore_mem>> -> memref<!tpu.dma_semaphore, #tpu.memory_space<semaphore_mem>>
    tpu.enqueue_dma source(%423 : memref<1x128xf32, #tpu.memory_space<any>>) target(%424 : memref<1x128xf32, #tpu.memory_space<any>>) target_semaphore(%426 : memref<!tpu.dma_semaphore, #tpu.memory_space<semaphore_mem>>)
    %c52_i32 = arith.constant 52 : i32
    %427 = arith.addi %0, %c52_i32 : i32
    %428 = arith.index_cast %427 : i32 to index
    %429 = memref.load %arg1[%428] : memref<192xi32, #tpu.memory_space<smem>>
    %c52_i32_162 = arith.constant 52 : i32
    %430 = arith.addi %0, %c52_i32_162 : i32
    %c0_i32_163 = arith.constant 0 : i32
    %431 = tpu.memref_slice %arg3[%430, %c0_i32_163] : memref<192x128xf32, #tpu.memory_space<any>> -> memref<1x128xf32, #tpu.memory_space<any>>
    %c0_i32_164 = arith.constant 0 : i32
    %432 = tpu.memref_slice %arg4[%429, %c0_i32_164] : memref<256x128xf32, #tpu.memory_space<any>> -> memref<1x128xf32, #tpu.memory_space<any>>
    %433 = tpu.memref_slice %arg5[%10] : memref<2x!tpu.dma_semaphore, #tpu.memory_space<semaphore_mem>> -> memref<1x!tpu.dma_semaphore, #tpu.memory_space<semaphore_mem>>
    %434 = tpu.memref_squeeze %433 : memref<1x!tpu.dma_semaphore, #tpu.memory_space<semaphore_mem>> -> memref<!tpu.dma_semaphore, #tpu.memory_space<semaphore_mem>>
    tpu.enqueue_dma source(%431 : memref<1x128xf32, #tpu.memory_space<any>>) target(%432 : memref<1x128xf32, #tpu.memory_space<any>>) target_semaphore(%434 : memref<!tpu.dma_semaphore, #tpu.memory_space<semaphore_mem>>)
    %c53_i32 = arith.constant 53 : i32
    %435 = arith.addi %0, %c53_i32 : i32
    %436 = arith.index_cast %435 : i32 to index
    %437 = memref.load %arg1[%436] : memref<192xi32, #tpu.memory_space<smem>>
    %c53_i32_165 = arith.constant 53 : i32
    %438 = arith.addi %0, %c53_i32_165 : i32
    %c0_i32_166 = arith.constant 0 : i32
    %439 = tpu.memref_slice %arg3[%438, %c0_i32_166] : memref<192x128xf32, #tpu.memory_space<any>> -> memref<1x128xf32, #tpu.memory_space<any>>
    %c0_i32_167 = arith.constant 0 : i32
    %440 = tpu.memref_slice %arg4[%437, %c0_i32_167] : memref<256x128xf32, #tpu.memory_space<any>> -> memref<1x128xf32, #tpu.memory_space<any>>
    %441 = tpu.memref_slice %arg5[%10] : memref<2x!tpu.dma_semaphore, #tpu.memory_space<semaphore_mem>> -> memref<1x!tpu.dma_semaphore, #tpu.memory_space<semaphore_mem>>
    %442 = tpu.memref_squeeze %441 : memref<1x!tpu.dma_semaphore, #tpu.memory_space<semaphore_mem>> -> memref<!tpu.dma_semaphore, #tpu.memory_space<semaphore_mem>>
    tpu.enqueue_dma source(%439 : memref<1x128xf32, #tpu.memory_space<any>>) target(%440 : memref<1x128xf32, #tpu.memory_space<any>>) target_semaphore(%442 : memref<!tpu.dma_semaphore, #tpu.memory_space<semaphore_mem>>)
    %c54_i32 = arith.constant 54 : i32
    %443 = arith.addi %0, %c54_i32 : i32
    %444 = arith.index_cast %443 : i32 to index
    %445 = memref.load %arg1[%444] : memref<192xi32, #tpu.memory_space<smem>>
    %c54_i32_168 = arith.constant 54 : i32
    %446 = arith.addi %0, %c54_i32_168 : i32
    %c0_i32_169 = arith.constant 0 : i32
    %447 = tpu.memref_slice %arg3[%446, %c0_i32_169] : memref<192x128xf32, #tpu.memory_space<any>> -> memref<1x128xf32, #tpu.memory_space<any>>
    %c0_i32_170 = arith.constant 0 : i32
    %448 = tpu.memref_slice %arg4[%445, %c0_i32_170] : memref<256x128xf32, #tpu.memory_space<any>> -> memref<1x128xf32, #tpu.memory_space<any>>
    %449 = tpu.memref_slice %arg5[%10] : memref<2x!tpu.dma_semaphore, #tpu.memory_space<semaphore_mem>> -> memref<1x!tpu.dma_semaphore, #tpu.memory_space<semaphore_mem>>
    %450 = tpu.memref_squeeze %449 : memref<1x!tpu.dma_semaphore, #tpu.memory_space<semaphore_mem>> -> memref<!tpu.dma_semaphore, #tpu.memory_space<semaphore_mem>>
    tpu.enqueue_dma source(%447 : memref<1x128xf32, #tpu.memory_space<any>>) target(%448 : memref<1x128xf32, #tpu.memory_space<any>>) target_semaphore(%450 : memref<!tpu.dma_semaphore, #tpu.memory_space<semaphore_mem>>)
    %c55_i32 = arith.constant 55 : i32
    %451 = arith.addi %0, %c55_i32 : i32
    %452 = arith.index_cast %451 : i32 to index
    %453 = memref.load %arg1[%452] : memref<192xi32, #tpu.memory_space<smem>>
    %c55_i32_171 = arith.constant 55 : i32
    %454 = arith.addi %0, %c55_i32_171 : i32
    %c0_i32_172 = arith.constant 0 : i32
    %455 = tpu.memref_slice %arg3[%454, %c0_i32_172] : memref<192x128xf32, #tpu.memory_space<any>> -> memref<1x128xf32, #tpu.memory_space<any>>
    %c0_i32_173 = arith.constant 0 : i32
    %456 = tpu.memref_slice %arg4[%453, %c0_i32_173] : memref<256x128xf32, #tpu.memory_space<any>> -> memref<1x128xf32, #tpu.memory_space<any>>
    %457 = tpu.memref_slice %arg5[%10] : memref<2x!tpu.dma_semaphore, #tpu.memory_space<semaphore_mem>> -> memref<1x!tpu.dma_semaphore, #tpu.memory_space<semaphore_mem>>
    %458 = tpu.memref_squeeze %457 : memref<1x!tpu.dma_semaphore, #tpu.memory_space<semaphore_mem>> -> memref<!tpu.dma_semaphore, #tpu.memory_space<semaphore_mem>>
    tpu.enqueue_dma source(%455 : memref<1x128xf32, #tpu.memory_space<any>>) target(%456 : memref<1x128xf32, #tpu.memory_space<any>>) target_semaphore(%458 : memref<!tpu.dma_semaphore, #tpu.memory_space<semaphore_mem>>)
    %c56_i32 = arith.constant 56 : i32
    %459 = arith.addi %0, %c56_i32 : i32
    %460 = arith.index_cast %459 : i32 to index
    %461 = memref.load %arg1[%460] : memref<192xi32, #tpu.memory_space<smem>>
    %c56_i32_174 = arith.constant 56 : i32
    %462 = arith.addi %0, %c56_i32_174 : i32
    %c0_i32_175 = arith.constant 0 : i32
    %463 = tpu.memref_slice %arg3[%462, %c0_i32_175] : memref<192x128xf32, #tpu.memory_space<any>> -> memref<1x128xf32, #tpu.memory_space<any>>
    %c0_i32_176 = arith.constant 0 : i32
    %464 = tpu.memref_slice %arg4[%461, %c0_i32_176] : memref<256x128xf32, #tpu.memory_space<any>> -> memref<1x128xf32, #tpu.memory_space<any>>
    %465 = tpu.memref_slice %arg5[%10] : memref<2x!tpu.dma_semaphore, #tpu.memory_space<semaphore_mem>> -> memref<1x!tpu.dma_semaphore, #tpu.memory_space<semaphore_mem>>
    %466 = tpu.memref_squeeze %465 : memref<1x!tpu.dma_semaphore, #tpu.memory_space<semaphore_mem>> -> memref<!tpu.dma_semaphore, #tpu.memory_space<semaphore_mem>>
    tpu.enqueue_dma source(%463 : memref<1x128xf32, #tpu.memory_space<any>>) target(%464 : memref<1x128xf32, #tpu.memory_space<any>>) target_semaphore(%466 : memref<!tpu.dma_semaphore, #tpu.memory_space<semaphore_mem>>)
    %c57_i32 = arith.constant 57 : i32
    %467 = arith.addi %0, %c57_i32 : i32
    %468 = arith.index_cast %467 : i32 to index
    %469 = memref.load %arg1[%468] : memref<192xi32, #tpu.memory_space<smem>>
    %c57_i32_177 = arith.constant 57 : i32
    %470 = arith.addi %0, %c57_i32_177 : i32
    %c0_i32_178 = arith.constant 0 : i32
    %471 = tpu.memref_slice %arg3[%470, %c0_i32_178] : memref<192x128xf32, #tpu.memory_space<any>> -> memref<1x128xf32, #tpu.memory_space<any>>
    %c0_i32_179 = arith.constant 0 : i32
    %472 = tpu.memref_slice %arg4[%469, %c0_i32_179] : memref<256x128xf32, #tpu.memory_space<any>> -> memref<1x128xf32, #tpu.memory_space<any>>
    %473 = tpu.memref_slice %arg5[%10] : memref<2x!tpu.dma_semaphore, #tpu.memory_space<semaphore_mem>> -> memref<1x!tpu.dma_semaphore, #tpu.memory_space<semaphore_mem>>
    %474 = tpu.memref_squeeze %473 : memref<1x!tpu.dma_semaphore, #tpu.memory_space<semaphore_mem>> -> memref<!tpu.dma_semaphore, #tpu.memory_space<semaphore_mem>>
    tpu.enqueue_dma source(%471 : memref<1x128xf32, #tpu.memory_space<any>>) target(%472 : memref<1x128xf32, #tpu.memory_space<any>>) target_semaphore(%474 : memref<!tpu.dma_semaphore, #tpu.memory_space<semaphore_mem>>)
    %c58_i32 = arith.constant 58 : i32
    %475 = arith.addi %0, %c58_i32 : i32
    %476 = arith.index_cast %475 : i32 to index
    %477 = memref.load %arg1[%476] : memref<192xi32, #tpu.memory_space<smem>>
    %c58_i32_180 = arith.constant 58 : i32
    %478 = arith.addi %0, %c58_i32_180 : i32
    %c0_i32_181 = arith.constant 0 : i32
    %479 = tpu.memref_slice %arg3[%478, %c0_i32_181] : memref<192x128xf32, #tpu.memory_space<any>> -> memref<1x128xf32, #tpu.memory_space<any>>
    %c0_i32_182 = arith.constant 0 : i32
    %480 = tpu.memref_slice %arg4[%477, %c0_i32_182] : memref<256x128xf32, #tpu.memory_space<any>> -> memref<1x128xf32, #tpu.memory_space<any>>
    %481 = tpu.memref_slice %arg5[%10] : memref<2x!tpu.dma_semaphore, #tpu.memory_space<semaphore_mem>> -> memref<1x!tpu.dma_semaphore, #tpu.memory_space<semaphore_mem>>
    %482 = tpu.memref_squeeze %481 : memref<1x!tpu.dma_semaphore, #tpu.memory_space<semaphore_mem>> -> memref<!tpu.dma_semaphore, #tpu.memory_space<semaphore_mem>>
    tpu.enqueue_dma source(%479 : memref<1x128xf32, #tpu.memory_space<any>>) target(%480 : memref<1x128xf32, #tpu.memory_space<any>>) target_semaphore(%482 : memref<!tpu.dma_semaphore, #tpu.memory_space<semaphore_mem>>)
    %c59_i32 = arith.constant 59 : i32
    %483 = arith.addi %0, %c59_i32 : i32
    %484 = arith.index_cast %483 : i32 to index
    %485 = memref.load %arg1[%484] : memref<192xi32, #tpu.memory_space<smem>>
    %c59_i32_183 = arith.constant 59 : i32
    %486 = arith.addi %0, %c59_i32_183 : i32
    %c0_i32_184 = arith.constant 0 : i32
    %487 = tpu.memref_slice %arg3[%486, %c0_i32_184] : memref<192x128xf32, #tpu.memory_space<any>> -> memref<1x128xf32, #tpu.memory_space<any>>
    %c0_i32_185 = arith.constant 0 : i32
    %488 = tpu.memref_slice %arg4[%485, %c0_i32_185] : memref<256x128xf32, #tpu.memory_space<any>> -> memref<1x128xf32, #tpu.memory_space<any>>
    %489 = tpu.memref_slice %arg5[%10] : memref<2x!tpu.dma_semaphore, #tpu.memory_space<semaphore_mem>> -> memref<1x!tpu.dma_semaphore, #tpu.memory_space<semaphore_mem>>
    %490 = tpu.memref_squeeze %489 : memref<1x!tpu.dma_semaphore, #tpu.memory_space<semaphore_mem>> -> memref<!tpu.dma_semaphore, #tpu.memory_space<semaphore_mem>>
    tpu.enqueue_dma source(%487 : memref<1x128xf32, #tpu.memory_space<any>>) target(%488 : memref<1x128xf32, #tpu.memory_space<any>>) target_semaphore(%490 : memref<!tpu.dma_semaphore, #tpu.memory_space<semaphore_mem>>)
    %c60_i32 = arith.constant 60 : i32
    %491 = arith.addi %0, %c60_i32 : i32
    %492 = arith.index_cast %491 : i32 to index
    %493 = memref.load %arg1[%492] : memref<192xi32, #tpu.memory_space<smem>>
    %c60_i32_186 = arith.constant 60 : i32
    %494 = arith.addi %0, %c60_i32_186 : i32
    %c0_i32_187 = arith.constant 0 : i32
    %495 = tpu.memref_slice %arg3[%494, %c0_i32_187] : memref<192x128xf32, #tpu.memory_space<any>> -> memref<1x128xf32, #tpu.memory_space<any>>
    %c0_i32_188 = arith.constant 0 : i32
    %496 = tpu.memref_slice %arg4[%493, %c0_i32_188] : memref<256x128xf32, #tpu.memory_space<any>> -> memref<1x128xf32, #tpu.memory_space<any>>
    %497 = tpu.memref_slice %arg5[%10] : memref<2x!tpu.dma_semaphore, #tpu.memory_space<semaphore_mem>> -> memref<1x!tpu.dma_semaphore, #tpu.memory_space<semaphore_mem>>
    %498 = tpu.memref_squeeze %497 : memref<1x!tpu.dma_semaphore, #tpu.memory_space<semaphore_mem>> -> memref<!tpu.dma_semaphore, #tpu.memory_space<semaphore_mem>>
    tpu.enqueue_dma source(%495 : memref<1x128xf32, #tpu.memory_space<any>>) target(%496 : memref<1x128xf32, #tpu.memory_space<any>>) target_semaphore(%498 : memref<!tpu.dma_semaphore, #tpu.memory_space<semaphore_mem>>)
    %c61_i32 = arith.constant 61 : i32
    %499 = arith.addi %0, %c61_i32 : i32
    %500 = arith.index_cast %499 : i32 to index
    %501 = memref.load %arg1[%500] : memref<192xi32, #tpu.memory_space<smem>>
    %c61_i32_189 = arith.constant 61 : i32
    %502 = arith.addi %0, %c61_i32_189 : i32
    %c0_i32_190 = arith.constant 0 : i32
    %503 = tpu.memref_slice %arg3[%502, %c0_i32_190] : memref<192x128xf32, #tpu.memory_space<any>> -> memref<1x128xf32, #tpu.memory_space<any>>
    %c0_i32_191 = arith.constant 0 : i32
    %504 = tpu.memref_slice %arg4[%501, %c0_i32_191] : memref<256x128xf32, #tpu.memory_space<any>> -> memref<1x128xf32, #tpu.memory_space<any>>
    %505 = tpu.memref_slice %arg5[%10] : memref<2x!tpu.dma_semaphore, #tpu.memory_space<semaphore_mem>> -> memref<1x!tpu.dma_semaphore, #tpu.memory_space<semaphore_mem>>
    %506 = tpu.memref_squeeze %505 : memref<1x!tpu.dma_semaphore, #tpu.memory_space<semaphore_mem>> -> memref<!tpu.dma_semaphore, #tpu.memory_space<semaphore_mem>>
    tpu.enqueue_dma source(%503 : memref<1x128xf32, #tpu.memory_space<any>>) target(%504 : memref<1x128xf32, #tpu.memory_space<any>>) target_semaphore(%506 : memref<!tpu.dma_semaphore, #tpu.memory_space<semaphore_mem>>)
    %c62_i32 = arith.constant 62 : i32
    %507 = arith.addi %0, %c62_i32 : i32
    %508 = arith.index_cast %507 : i32 to index
    %509 = memref.load %arg1[%508] : memref<192xi32, #tpu.memory_space<smem>>
    %c62_i32_192 = arith.constant 62 : i32
    %510 = arith.addi %0, %c62_i32_192 : i32
    %c0_i32_193 = arith.constant 0 : i32
    %511 = tpu.memref_slice %arg3[%510, %c0_i32_193] : memref<192x128xf32, #tpu.memory_space<any>> -> memref<1x128xf32, #tpu.memory_space<any>>
    %c0_i32_194 = arith.constant 0 : i32
    %512 = tpu.memref_slice %arg4[%509, %c0_i32_194] : memref<256x128xf32, #tpu.memory_space<any>> -> memref<1x128xf32, #tpu.memory_space<any>>
    %513 = tpu.memref_slice %arg5[%10] : memref<2x!tpu.dma_semaphore, #tpu.memory_space<semaphore_mem>> -> memref<1x!tpu.dma_semaphore, #tpu.memory_space<semaphore_mem>>
    %514 = tpu.memref_squeeze %513 : memref<1x!tpu.dma_semaphore, #tpu.memory_space<semaphore_mem>> -> memref<!tpu.dma_semaphore, #tpu.memory_space<semaphore_mem>>
    tpu.enqueue_dma source(%511 : memref<1x128xf32, #tpu.memory_space<any>>) target(%512 : memref<1x128xf32, #tpu.memory_space<any>>) target_semaphore(%514 : memref<!tpu.dma_semaphore, #tpu.memory_space<semaphore_mem>>)
    %c63_i32 = arith.constant 63 : i32
    %515 = arith.addi %0, %c63_i32 : i32
    %516 = arith.index_cast %515 : i32 to index
    %517 = memref.load %arg1[%516] : memref<192xi32, #tpu.memory_space<smem>>
    %c63_i32_195 = arith.constant 63 : i32
    %518 = arith.addi %0, %c63_i32_195 : i32
    %c0_i32_196 = arith.constant 0 : i32
    %519 = tpu.memref_slice %arg3[%518, %c0_i32_196] : memref<192x128xf32, #tpu.memory_space<any>> -> memref<1x128xf32, #tpu.memory_space<any>>
    %c0_i32_197 = arith.constant 0 : i32
    %520 = tpu.memref_slice %arg4[%517, %c0_i32_197] : memref<256x128xf32, #tpu.memory_space<any>> -> memref<1x128xf32, #tpu.memory_space<any>>
    %521 = tpu.memref_slice %arg5[%10] : memref<2x!tpu.dma_semaphore, #tpu.memory_space<semaphore_mem>> -> memref<1x!tpu.dma_semaphore, #tpu.memory_space<semaphore_mem>>
    %522 = tpu.memref_squeeze %521 : memref<1x!tpu.dma_semaphore, #tpu.memory_space<semaphore_mem>> -> memref<!tpu.dma_semaphore, #tpu.memory_space<semaphore_mem>>
    tpu.enqueue_dma source(%519 : memref<1x128xf32, #tpu.memory_space<any>>) target(%520 : memref<1x128xf32, #tpu.memory_space<any>>) target_semaphore(%522 : memref<!tpu.dma_semaphore, #tpu.memory_space<semaphore_mem>>)
    %c0_i32_198 = arith.constant 0 : i32
    %c0_i32_199 = arith.constant 0 : i32
    %523 = tpu.memref_slice %arg3[%c0_i32_198, %c0_i32_199] : memref<192x128xf32, #tpu.memory_space<any>> -> memref<1x128xf32, #tpu.memory_space<any>>
    %c0_i32_200 = arith.constant 0 : i32
    %c0_i32_201 = arith.constant 0 : i32
    %524 = tpu.memref_slice %arg4[%c0_i32_200, %c0_i32_201] : memref<256x128xf32, #tpu.memory_space<any>> -> memref<1x128xf32, #tpu.memory_space<any>>
    %525 = tpu.memref_slice %arg5[%10] : memref<2x!tpu.dma_semaphore, #tpu.memory_space<semaphore_mem>> -> memref<1x!tpu.dma_semaphore, #tpu.memory_space<semaphore_mem>>
    %526 = tpu.memref_squeeze %525 : memref<1x!tpu.dma_semaphore, #tpu.memory_space<semaphore_mem>> -> memref<!tpu.dma_semaphore, #tpu.memory_space<semaphore_mem>>
    tpu.wait_dma2 semaphore(%526 : memref<!tpu.dma_semaphore, #tpu.memory_space<semaphore_mem>>) src(%523 : memref<1x128xf32, #tpu.memory_space<any>>) dst(%524 : memref<1x128xf32, #tpu.memory_space<any>>)
    %c0_i32_202 = arith.constant 0 : i32
    %c0_i32_203 = arith.constant 0 : i32
    %527 = tpu.memref_slice %arg3[%c0_i32_202, %c0_i32_203] : memref<192x128xf32, #tpu.memory_space<any>> -> memref<1x128xf32, #tpu.memory_space<any>>
    %c0_i32_204 = arith.constant 0 : i32
    %c0_i32_205 = arith.constant 0 : i32
    %528 = tpu.memref_slice %arg4[%c0_i32_204, %c0_i32_205] : memref<256x128xf32, #tpu.memory_space<any>> -> memref<1x128xf32, #tpu.memory_space<any>>
    %529 = tpu.memref_slice %arg5[%10] : memref<2x!tpu.dma_semaphore, #tpu.memory_space<semaphore_mem>> -> memref<1x!tpu.dma_semaphore, #tpu.memory_space<semaphore_mem>>
    %530 = tpu.memref_squeeze %529 : memref<1x!tpu.dma_semaphore, #tpu.memory_space<semaphore_mem>> -> memref<!tpu.dma_semaphore, #tpu.memory_space<semaphore_mem>>
    tpu.wait_dma2 semaphore(%530 : memref<!tpu.dma_semaphore, #tpu.memory_space<semaphore_mem>>) src(%527 : memref<1x128xf32, #tpu.memory_space<any>>) dst(%528 : memref<1x128xf32, #tpu.memory_space<any>>)
    %c0_i32_206 = arith.constant 0 : i32
    %c0_i32_207 = arith.constant 0 : i32
    %531 = tpu.memref_slice %arg3[%c0_i32_206, %c0_i32_207] : memref<192x128xf32, #tpu.memory_space<any>> -> memref<1x128xf32, #tpu.memory_space<any>>
    %c0_i32_208 = arith.constant 0 : i32
    %c0_i32_209 = arith.constant 0 : i32
    %532 = tpu.memref_slice %arg4[%c0_i32_208, %c0_i32_209] : memref<256x128xf32, #tpu.memory_space<any>> -> memref<1x128xf32, #tpu.memory_space<any>>
    %533 = tpu.memref_slice %arg5[%10] : memref<2x!tpu.dma_semaphore, #tpu.memory_space<semaphore_mem>> -> memref<1x!tpu.dma_semaphore, #tpu.memory_space<semaphore_mem>>
    %534 = tpu.memref_squeeze %533 : memref<1x!tpu.dma_semaphore, #tpu.memory_space<semaphore_mem>> -> memref<!tpu.dma_semaphore, #tpu.memory_space<semaphore_mem>>
    tpu.wait_dma2 semaphore(%534 : memref<!tpu.dma_semaphore, #tpu.memory_space<semaphore_mem>>) src(%531 : memref<1x128xf32, #tpu.memory_space<any>>) dst(%532 : memref<1x128xf32, #tpu.memory_space<any>>)
    %c0_i32_210 = arith.constant 0 : i32
    %c0_i32_211 = arith.constant 0 : i32
    %535 = tpu.memref_slice %arg3[%c0_i32_210, %c0_i32_211] : memref<192x128xf32, #tpu.memory_space<any>> -> memref<1x128xf32, #tpu.memory_space<any>>
    %c0_i32_212 = arith.constant 0 : i32
    %c0_i32_213 = arith.constant 0 : i32
    %536 = tpu.memref_slice %arg4[%c0_i32_212, %c0_i32_213] : memref<256x128xf32, #tpu.memory_space<any>> -> memref<1x128xf32, #tpu.memory_space<any>>
    %537 = tpu.memref_slice %arg5[%10] : memref<2x!tpu.dma_semaphore, #tpu.memory_space<semaphore_mem>> -> memref<1x!tpu.dma_semaphore, #tpu.memory_space<semaphore_mem>>
    %538 = tpu.memref_squeeze %537 : memref<1x!tpu.dma_semaphore, #tpu.memory_space<semaphore_mem>> -> memref<!tpu.dma_semaphore, #tpu.memory_space<semaphore_mem>>
    tpu.wait_dma2 semaphore(%538 : memref<!tpu.dma_semaphore, #tpu.memory_space<semaphore_mem>>) src(%535 : memref<1x128xf32, #tpu.memory_space<any>>) dst(%536 : memref<1x128xf32, #tpu.memory_space<any>>)
    %c0_i32_214 = arith.constant 0 : i32
    %c0_i32_215 = arith.constant 0 : i32
    %539 = tpu.memref_slice %arg3[%c0_i32_214, %c0_i32_215] : memref<192x128xf32, #tpu.memory_space<any>> -> memref<1x128xf32, #tpu.memory_space<any>>
    %c0_i32_216 = arith.constant 0 : i32
    %c0_i32_217 = arith.constant 0 : i32
    %540 = tpu.memref_slice %arg4[%c0_i32_216, %c0_i32_217] : memref<256x128xf32, #tpu.memory_space<any>> -> memref<1x128xf32, #tpu.memory_space<any>>
    %541 = tpu.memref_slice %arg5[%10] : memref<2x!tpu.dma_semaphore, #tpu.memory_space<semaphore_mem>> -> memref<1x!tpu.dma_semaphore, #tpu.memory_space<semaphore_mem>>
    %542 = tpu.memref_squeeze %541 : memref<1x!tpu.dma_semaphore, #tpu.memory_space<semaphore_mem>> -> memref<!tpu.dma_semaphore, #tpu.memory_space<semaphore_mem>>
    tpu.wait_dma2 semaphore(%542 : memref<!tpu.dma_semaphore, #tpu.memory_space<semaphore_mem>>) src(%539 : memref<1x128xf32, #tpu.memory_space<any>>) dst(%540 : memref<1x128xf32, #tpu.memory_space<any>>)
    %c0_i32_218 = arith.constant 0 : i32
    %c0_i32_219 = arith.constant 0 : i32
    %543 = tpu.memref_slice %arg3[%c0_i32_218, %c0_i32_219] : memref<192x128xf32, #tpu.memory_space<any>> -> memref<1x128xf32, #tpu.memory_space<any>>
    %c0_i32_220 = arith.constant 0 : i32
    %c0_i32_221 = arith.constant 0 : i32
    %544 = tpu.memref_slice %arg4[%c0_i32_220, %c0_i32_221] : memref<256x128xf32, #tpu.memory_space<any>> -> memref<1x128xf32, #tpu.memory_space<any>>
    %545 = tpu.memref_slice %arg5[%10] : memref<2x!tpu.dma_semaphore, #tpu.memory_space<semaphore_mem>> -> memref<1x!tpu.dma_semaphore, #tpu.memory_space<semaphore_mem>>
    %546 = tpu.memref_squeeze %545 : memref<1x!tpu.dma_semaphore, #tpu.memory_space<semaphore_mem>> -> memref<!tpu.dma_semaphore, #tpu.memory_space<semaphore_mem>>
    tpu.wait_dma2 semaphore(%546 : memref<!tpu.dma_semaphore, #tpu.memory_space<semaphore_mem>>) src(%543 : memref<1x128xf32, #tpu.memory_space<any>>) dst(%544 : memref<1x128xf32, #tpu.memory_space<any>>)
    %c0_i32_222 = arith.constant 0 : i32
    %c0_i32_223 = arith.constant 0 : i32
    %547 = tpu.memref_slice %arg3[%c0_i32_222, %c0_i32_223] : memref<192x128xf32, #tpu.memory_space<any>> -> memref<1x128xf32, #tpu.memory_space<any>>
    %c0_i32_224 = arith.constant 0 : i32
    %c0_i32_225 = arith.constant 0 : i32
    %548 = tpu.memref_slice %arg4[%c0_i32_224, %c0_i32_225] : memref<256x128xf32, #tpu.memory_space<any>> -> memref<1x128xf32, #tpu.memory_space<any>>
    %549 = tpu.memref_slice %arg5[%10] : memref<2x!tpu.dma_semaphore, #tpu.memory_space<semaphore_mem>> -> memref<1x!tpu.dma_semaphore, #tpu.memory_space<semaphore_mem>>
    %550 = tpu.memref_squeeze %549 : memref<1x!tpu.dma_semaphore, #tpu.memory_space<semaphore_mem>> -> memref<!tpu.dma_semaphore, #tpu.memory_space<semaphore_mem>>
    tpu.wait_dma2 semaphore(%550 : memref<!tpu.dma_semaphore, #tpu.memory_space<semaphore_mem>>) src(%547 : memref<1x128xf32, #tpu.memory_space<any>>) dst(%548 : memref<1x128xf32, #tpu.memory_space<any>>)
    %c0_i32_226 = arith.constant 0 : i32
    %c0_i32_227 = arith.constant 0 : i32
    %551 = tpu.memref_slice %arg3[%c0_i32_226, %c0_i32_227] : memref<192x128xf32, #tpu.memory_space<any>> -> memref<1x128xf32, #tpu.memory_space<any>>
    %c0_i32_228 = arith.constant 0 : i32
    %c0_i32_229 = arith.constant 0 : i32
    %552 = tpu.memref_slice %arg4[%c0_i32_228, %c0_i32_229] : memref<256x128xf32, #tpu.memory_space<any>> -> memref<1x128xf32, #tpu.memory_space<any>>
    %553 = tpu.memref_slice %arg5[%10] : memref<2x!tpu.dma_semaphore, #tpu.memory_space<semaphore_mem>> -> memref<1x!tpu.dma_semaphore, #tpu.memory_space<semaphore_mem>>
    %554 = tpu.memref_squeeze %553 : memref<1x!tpu.dma_semaphore, #tpu.memory_space<semaphore_mem>> -> memref<!tpu.dma_semaphore, #tpu.memory_space<semaphore_mem>>
    tpu.wait_dma2 semaphore(%554 : memref<!tpu.dma_semaphore, #tpu.memory_space<semaphore_mem>>) src(%551 : memref<1x128xf32, #tpu.memory_space<any>>) dst(%552 : memref<1x128xf32, #tpu.memory_space<any>>)
    %c0_i32_230 = arith.constant 0 : i32
    %c0_i32_231 = arith.constant 0 : i32
    %555 = tpu.memref_slice %arg3[%c0_i32_230, %c0_i32_231] : memref<192x128xf32, #tpu.memory_space<any>> -> memref<1x128xf32, #tpu.memory_space<any>>
    %c0_i32_232 = arith.constant 0 : i32
    %c0_i32_233 = arith.constant 0 : i32
    %556 = tpu.memref_slice %arg4[%c0_i32_232, %c0_i32_233] : memref<256x128xf32, #tpu.memory_space<any>> -> memref<1x128xf32, #tpu.memory_space<any>>
    %557 = tpu.memref_slice %arg5[%10] : memref<2x!tpu.dma_semaphore, #tpu.memory_space<semaphore_mem>> -> memref<1x!tpu.dma_semaphore, #tpu.memory_space<semaphore_mem>>
    %558 = tpu.memref_squeeze %557 : memref<1x!tpu.dma_semaphore, #tpu.memory_space<semaphore_mem>> -> memref<!tpu.dma_semaphore, #tpu.memory_space<semaphore_mem>>
    tpu.wait_dma2 semaphore(%558 : memref<!tpu.dma_semaphore, #tpu.memory_space<semaphore_mem>>) src(%555 : memref<1x128xf32, #tpu.memory_space<any>>) dst(%556 : memref<1x128xf32, #tpu.memory_space<any>>)
    %c0_i32_234 = arith.constant 0 : i32
    %c0_i32_235 = arith.constant 0 : i32
    %559 = tpu.memref_slice %arg3[%c0_i32_234, %c0_i32_235] : memref<192x128xf32, #tpu.memory_space<any>> -> memref<1x128xf32, #tpu.memory_space<any>>
    %c0_i32_236 = arith.constant 0 : i32
    %c0_i32_237 = arith.constant 0 : i32
    %560 = tpu.memref_slice %arg4[%c0_i32_236, %c0_i32_237] : memref<256x128xf32, #tpu.memory_space<any>> -> memref<1x128xf32, #tpu.memory_space<any>>
    %561 = tpu.memref_slice %arg5[%10] : memref<2x!tpu.dma_semaphore, #tpu.memory_space<semaphore_mem>> -> memref<1x!tpu.dma_semaphore, #tpu.memory_space<semaphore_mem>>
    %562 = tpu.memref_squeeze %561 : memref<1x!tpu.dma_semaphore, #tpu.memory_space<semaphore_mem>> -> memref<!tpu.dma_semaphore, #tpu.memory_space<semaphore_mem>>
    tpu.wait_dma2 semaphore(%562 : memref<!tpu.dma_semaphore, #tpu.memory_space<semaphore_mem>>) src(%559 : memref<1x128xf32, #tpu.memory_space<any>>) dst(%560 : memref<1x128xf32, #tpu.memory_space<any>>)
    %c0_i32_238 = arith.constant 0 : i32
    %c0_i32_239 = arith.constant 0 : i32
    %563 = tpu.memref_slice %arg3[%c0_i32_238, %c0_i32_239] : memref<192x128xf32, #tpu.memory_space<any>> -> memref<1x128xf32, #tpu.memory_space<any>>
    %c0_i32_240 = arith.constant 0 : i32
    %c0_i32_241 = arith.constant 0 : i32
    %564 = tpu.memref_slice %arg4[%c0_i32_240, %c0_i32_241] : memref<256x128xf32, #tpu.memory_space<any>> -> memref<1x128xf32, #tpu.memory_space<any>>
    %565 = tpu.memref_slice %arg5[%10] : memref<2x!tpu.dma_semaphore, #tpu.memory_space<semaphore_mem>> -> memref<1x!tpu.dma_semaphore, #tpu.memory_space<semaphore_mem>>
    %566 = tpu.memref_squeeze %565 : memref<1x!tpu.dma_semaphore, #tpu.memory_space<semaphore_mem>> -> memref<!tpu.dma_semaphore, #tpu.memory_space<semaphore_mem>>
    tpu.wait_dma2 semaphore(%566 : memref<!tpu.dma_semaphore, #tpu.memory_space<semaphore_mem>>) src(%563 : memref<1x128xf32, #tpu.memory_space<any>>) dst(%564 : memref<1x128xf32, #tpu.memory_space<any>>)
    %c0_i32_242 = arith.constant 0 : i32
    %c0_i32_243 = arith.constant 0 : i32
    %567 = tpu.memref_slice %arg3[%c0_i32_242, %c0_i32_243] : memref<192x128xf32, #tpu.memory_space<any>> -> memref<1x128xf32, #tpu.memory_space<any>>
    %c0_i32_244 = arith.constant 0 : i32
    %c0_i32_245 = arith.constant 0 : i32
    %568 = tpu.memref_slice %arg4[%c0_i32_244, %c0_i32_245] : memref<256x128xf32, #tpu.memory_space<any>> -> memref<1x128xf32, #tpu.memory_space<any>>
    %569 = tpu.memref_slice %arg5[%10] : memref<2x!tpu.dma_semaphore, #tpu.memory_space<semaphore_mem>> -> memref<1x!tpu.dma_semaphore, #tpu.memory_space<semaphore_mem>>
    %570 = tpu.memref_squeeze %569 : memref<1x!tpu.dma_semaphore, #tpu.memory_space<semaphore_mem>> -> memref<!tpu.dma_semaphore, #tpu.memory_space<semaphore_mem>>
    tpu.wait_dma2 semaphore(%570 : memref<!tpu.dma_semaphore, #tpu.memory_space<semaphore_mem>>) src(%567 : memref<1x128xf32, #tpu.memory_space<any>>) dst(%568 : memref<1x128xf32, #tpu.memory_space<any>>)
    %c0_i32_246 = arith.constant 0 : i32
    %c0_i32_247 = arith.constant 0 : i32
    %571 = tpu.memref_slice %arg3[%c0_i32_246, %c0_i32_247] : memref<192x128xf32, #tpu.memory_space<any>> -> memref<1x128xf32, #tpu.memory_space<any>>
    %c0_i32_248 = arith.constant 0 : i32
    %c0_i32_249 = arith.constant 0 : i32
    %572 = tpu.memref_slice %arg4[%c0_i32_248, %c0_i32_249] : memref<256x128xf32, #tpu.memory_space<any>> -> memref<1x128xf32, #tpu.memory_space<any>>
    %573 = tpu.memref_slice %arg5[%10] : memref<2x!tpu.dma_semaphore, #tpu.memory_space<semaphore_mem>> -> memref<1x!tpu.dma_semaphore, #tpu.memory_space<semaphore_mem>>
    %574 = tpu.memref_squeeze %573 : memref<1x!tpu.dma_semaphore, #tpu.memory_space<semaphore_mem>> -> memref<!tpu.dma_semaphore, #tpu.memory_space<semaphore_mem>>
    tpu.wait_dma2 semaphore(%574 : memref<!tpu.dma_semaphore, #tpu.memory_space<semaphore_mem>>) src(%571 : memref<1x128xf32, #tpu.memory_space<any>>) dst(%572 : memref<1x128xf32, #tpu.memory_space<any>>)
    %c0_i32_250 = arith.constant 0 : i32
    %c0_i32_251 = arith.constant 0 : i32
    %575 = tpu.memref_slice %arg3[%c0_i32_250, %c0_i32_251] : memref<192x128xf32, #tpu.memory_space<any>> -> memref<1x128xf32, #tpu.memory_space<any>>
    %c0_i32_252 = arith.constant 0 : i32
    %c0_i32_253 = arith.constant 0 : i32
    %576 = tpu.memref_slice %arg4[%c0_i32_252, %c0_i32_253] : memref<256x128xf32, #tpu.memory_space<any>> -> memref<1x128xf32, #tpu.memory_space<any>>
    %577 = tpu.memref_slice %arg5[%10] : memref<2x!tpu.dma_semaphore, #tpu.memory_space<semaphore_mem>> -> memref<1x!tpu.dma_semaphore, #tpu.memory_space<semaphore_mem>>
    %578 = tpu.memref_squeeze %577 : memref<1x!tpu.dma_semaphore, #tpu.memory_space<semaphore_mem>> -> memref<!tpu.dma_semaphore, #tpu.memory_space<semaphore_mem>>
    tpu.wait_dma2 semaphore(%578 : memref<!tpu.dma_semaphore, #tpu.memory_space<semaphore_mem>>) src(%575 : memref<1x128xf32, #tpu.memory_space<any>>) dst(%576 : memref<1x128xf32, #tpu.memory_space<any>>)
    %c0_i32_254 = arith.constant 0 : i32
    %c0_i32_255 = arith.constant 0 : i32
    %579 = tpu.memref_slice %arg3[%c0_i32_254, %c0_i32_255] : memref<192x128xf32, #tpu.memory_space<any>> -> memref<1x128xf32, #tpu.memory_space<any>>
    %c0_i32_256 = arith.constant 0 : i32
    %c0_i32_257 = arith.constant 0 : i32
    %580 = tpu.memref_slice %arg4[%c0_i32_256, %c0_i32_257] : memref<256x128xf32, #tpu.memory_space<any>> -> memref<1x128xf32, #tpu.memory_space<any>>
    %581 = tpu.memref_slice %arg5[%10] : memref<2x!tpu.dma_semaphore, #tpu.memory_space<semaphore_mem>> -> memref<1x!tpu.dma_semaphore, #tpu.memory_space<semaphore_mem>>
    %582 = tpu.memref_squeeze %581 : memref<1x!tpu.dma_semaphore, #tpu.memory_space<semaphore_mem>> -> memref<!tpu.dma_semaphore, #tpu.memory_space<semaphore_mem>>
    tpu.wait_dma2 semaphore(%582 : memref<!tpu.dma_semaphore, #tpu.memory_space<semaphore_mem>>) src(%579 : memref<1x128xf32, #tpu.memory_space<any>>) dst(%580 : memref<1x128xf32, #tpu.memory_space<any>>)
    %c0_i32_258 = arith.constant 0 : i32
    %c0_i32_259 = arith.constant 0 : i32
    %583 = tpu.memref_slice %arg3[%c0_i32_258, %c0_i32_259] : memref<192x128xf32, #tpu.memory_space<any>> -> memref<1x128xf32, #tpu.memory_space<any>>
    %c0_i32_260 = arith.constant 0 : i32
    %c0_i32_261 = arith.constant 0 : i32
    %584 = tpu.memref_slice %arg4[%c0_i32_260, %c0_i32_261] : memref<256x128xf32, #tpu.memory_space<any>> -> memref<1x128xf32, #tpu.memory_space<any>>
    %585 = tpu.memref_slice %arg5[%10] : memref<2x!tpu.dma_semaphore, #tpu.memory_space<semaphore_mem>> -> memref<1x!tpu.dma_semaphore, #tpu.memory_space<semaphore_mem>>
    %586 = tpu.memref_squeeze %585 : memref<1x!tpu.dma_semaphore, #tpu.memory_space<semaphore_mem>> -> memref<!tpu.dma_semaphore, #tpu.memory_space<semaphore_mem>>
    tpu.wait_dma2 semaphore(%586 : memref<!tpu.dma_semaphore, #tpu.memory_space<semaphore_mem>>) src(%583 : memref<1x128xf32, #tpu.memory_space<any>>) dst(%584 : memref<1x128xf32, #tpu.memory_space<any>>)
    %c0_i32_262 = arith.constant 0 : i32
    %c0_i32_263 = arith.constant 0 : i32
    %587 = tpu.memref_slice %arg3[%c0_i32_262, %c0_i32_263] : memref<192x128xf32, #tpu.memory_space<any>> -> memref<1x128xf32, #tpu.memory_space<any>>
    %c0_i32_264 = arith.constant 0 : i32
    %c0_i32_265 = arith.constant 0 : i32
    %588 = tpu.memref_slice %arg4[%c0_i32_264, %c0_i32_265] : memref<256x128xf32, #tpu.memory_space<any>> -> memref<1x128xf32, #tpu.memory_space<any>>
    %589 = tpu.memref_slice %arg5[%10] : memref<2x!tpu.dma_semaphore, #tpu.memory_space<semaphore_mem>> -> memref<1x!tpu.dma_semaphore, #tpu.memory_space<semaphore_mem>>
    %590 = tpu.memref_squeeze %589 : memref<1x!tpu.dma_semaphore, #tpu.memory_space<semaphore_mem>> -> memref<!tpu.dma_semaphore, #tpu.memory_space<semaphore_mem>>
    tpu.wait_dma2 semaphore(%590 : memref<!tpu.dma_semaphore, #tpu.memory_space<semaphore_mem>>) src(%587 : memref<1x128xf32, #tpu.memory_space<any>>) dst(%588 : memref<1x128xf32, #tpu.memory_space<any>>)
    %c0_i32_266 = arith.constant 0 : i32
    %c0_i32_267 = arith.constant 0 : i32
    %591 = tpu.memref_slice %arg3[%c0_i32_266, %c0_i32_267] : memref<192x128xf32, #tpu.memory_space<any>> -> memref<1x128xf32, #tpu.memory_space<any>>
    %c0_i32_268 = arith.constant 0 : i32
    %c0_i32_269 = arith.constant 0 : i32
    %592 = tpu.memref_slice %arg4[%c0_i32_268, %c0_i32_269] : memref<256x128xf32, #tpu.memory_space<any>> -> memref<1x128xf32, #tpu.memory_space<any>>
    %593 = tpu.memref_slice %arg5[%10] : memref<2x!tpu.dma_semaphore, #tpu.memory_space<semaphore_mem>> -> memref<1x!tpu.dma_semaphore, #tpu.memory_space<semaphore_mem>>
    %594 = tpu.memref_squeeze %593 : memref<1x!tpu.dma_semaphore, #tpu.memory_space<semaphore_mem>> -> memref<!tpu.dma_semaphore, #tpu.memory_space<semaphore_mem>>
    tpu.wait_dma2 semaphore(%594 : memref<!tpu.dma_semaphore, #tpu.memory_space<semaphore_mem>>) src(%591 : memref<1x128xf32, #tpu.memory_space<any>>) dst(%592 : memref<1x128xf32, #tpu.memory_space<any>>)
    %c0_i32_270 = arith.constant 0 : i32
    %c0_i32_271 = arith.constant 0 : i32
    %595 = tpu.memref_slice %arg3[%c0_i32_270, %c0_i32_271] : memref<192x128xf32, #tpu.memory_space<any>> -> memref<1x128xf32, #tpu.memory_space<any>>
    %c0_i32_272 = arith.constant 0 : i32
    %c0_i32_273 = arith.constant 0 : i32
    %596 = tpu.memref_slice %arg4[%c0_i32_272, %c0_i32_273] : memref<256x128xf32, #tpu.memory_space<any>> -> memref<1x128xf32, #tpu.memory_space<any>>
    %597 = tpu.memref_slice %arg5[%10] : memref<2x!tpu.dma_semaphore, #tpu.memory_space<semaphore_mem>> -> memref<1x!tpu.dma_semaphore, #tpu.memory_space<semaphore_mem>>
    %598 = tpu.memref_squeeze %597 : memref<1x!tpu.dma_semaphore, #tpu.memory_space<semaphore_mem>> -> memref<!tpu.dma_semaphore, #tpu.memory_space<semaphore_mem>>
    tpu.wait_dma2 semaphore(%598 : memref<!tpu.dma_semaphore, #tpu.memory_space<semaphore_mem>>) src(%595 : memref<1x128xf32, #tpu.memory_space<any>>) dst(%596 : memref<1x128xf32, #tpu.memory_space<any>>)
    %c0_i32_274 = arith.constant 0 : i32
    %c0_i32_275 = arith.constant 0 : i32
    %599 = tpu.memref_slice %arg3[%c0_i32_274, %c0_i32_275] : memref<192x128xf32, #tpu.memory_space<any>> -> memref<1x128xf32, #tpu.memory_space<any>>
    %c0_i32_276 = arith.constant 0 : i32
    %c0_i32_277 = arith.constant 0 : i32
    %600 = tpu.memref_slice %arg4[%c0_i32_276, %c0_i32_277] : memref<256x128xf32, #tpu.memory_space<any>> -> memref<1x128xf32, #tpu.memory_space<any>>
    %601 = tpu.memref_slice %arg5[%10] : memref<2x!tpu.dma_semaphore, #tpu.memory_space<semaphore_mem>> -> memref<1x!tpu.dma_semaphore, #tpu.memory_space<semaphore_mem>>
    %602 = tpu.memref_squeeze %601 : memref<1x!tpu.dma_semaphore, #tpu.memory_space<semaphore_mem>> -> memref<!tpu.dma_semaphore, #tpu.memory_space<semaphore_mem>>
    tpu.wait_dma2 semaphore(%602 : memref<!tpu.dma_semaphore, #tpu.memory_space<semaphore_mem>>) src(%599 : memref<1x128xf32, #tpu.memory_space<any>>) dst(%600 : memref<1x128xf32, #tpu.memory_space<any>>)
    %c0_i32_278 = arith.constant 0 : i32
    %c0_i32_279 = arith.constant 0 : i32
    %603 = tpu.memref_slice %arg3[%c0_i32_278, %c0_i32_279] : memref<192x128xf32, #tpu.memory_space<any>> -> memref<1x128xf32, #tpu.memory_space<any>>
    %c0_i32_280 = arith.constant 0 : i32
    %c0_i32_281 = arith.constant 0 : i32
    %604 = tpu.memref_slice %arg4[%c0_i32_280, %c0_i32_281] : memref<256x128xf32, #tpu.memory_space<any>> -> memref<1x128xf32, #tpu.memory_space<any>>
    %605 = tpu.memref_slice %arg5[%10] : memref<2x!tpu.dma_semaphore, #tpu.memory_space<semaphore_mem>> -> memref<1x!tpu.dma_semaphore, #tpu.memory_space<semaphore_mem>>
    %606 = tpu.memref_squeeze %605 : memref<1x!tpu.dma_semaphore, #tpu.memory_space<semaphore_mem>> -> memref<!tpu.dma_semaphore, #tpu.memory_space<semaphore_mem>>
    tpu.wait_dma2 semaphore(%606 : memref<!tpu.dma_semaphore, #tpu.memory_space<semaphore_mem>>) src(%603 : memref<1x128xf32, #tpu.memory_space<any>>) dst(%604 : memref<1x128xf32, #tpu.memory_space<any>>)
    %c0_i32_282 = arith.constant 0 : i32
    %c0_i32_283 = arith.constant 0 : i32
    %607 = tpu.memref_slice %arg3[%c0_i32_282, %c0_i32_283] : memref<192x128xf32, #tpu.memory_space<any>> -> memref<1x128xf32, #tpu.memory_space<any>>
    %c0_i32_284 = arith.constant 0 : i32
    %c0_i32_285 = arith.constant 0 : i32
    %608 = tpu.memref_slice %arg4[%c0_i32_284, %c0_i32_285] : memref<256x128xf32, #tpu.memory_space<any>> -> memref<1x128xf32, #tpu.memory_space<any>>
    %609 = tpu.memref_slice %arg5[%10] : memref<2x!tpu.dma_semaphore, #tpu.memory_space<semaphore_mem>> -> memref<1x!tpu.dma_semaphore, #tpu.memory_space<semaphore_mem>>
    %610 = tpu.memref_squeeze %609 : memref<1x!tpu.dma_semaphore, #tpu.memory_space<semaphore_mem>> -> memref<!tpu.dma_semaphore, #tpu.memory_space<semaphore_mem>>
    tpu.wait_dma2 semaphore(%610 : memref<!tpu.dma_semaphore, #tpu.memory_space<semaphore_mem>>) src(%607 : memref<1x128xf32, #tpu.memory_space<any>>) dst(%608 : memref<1x128xf32, #tpu.memory_space<any>>)
    %c0_i32_286 = arith.constant 0 : i32
    %c0_i32_287 = arith.constant 0 : i32
    %611 = tpu.memref_slice %arg3[%c0_i32_286, %c0_i32_287] : memref<192x128xf32, #tpu.memory_space<any>> -> memref<1x128xf32, #tpu.memory_space<any>>
    %c0_i32_288 = arith.constant 0 : i32
    %c0_i32_289 = arith.constant 0 : i32
    %612 = tpu.memref_slice %arg4[%c0_i32_288, %c0_i32_289] : memref<256x128xf32, #tpu.memory_space<any>> -> memref<1x128xf32, #tpu.memory_space<any>>
    %613 = tpu.memref_slice %arg5[%10] : memref<2x!tpu.dma_semaphore, #tpu.memory_space<semaphore_mem>> -> memref<1x!tpu.dma_semaphore, #tpu.memory_space<semaphore_mem>>
    %614 = tpu.memref_squeeze %613 : memref<1x!tpu.dma_semaphore, #tpu.memory_space<semaphore_mem>> -> memref<!tpu.dma_semaphore, #tpu.memory_space<semaphore_mem>>
    tpu.wait_dma2 semaphore(%614 : memref<!tpu.dma_semaphore, #tpu.memory_space<semaphore_mem>>) src(%611 : memref<1x128xf32, #tpu.memory_space<any>>) dst(%612 : memref<1x128xf32, #tpu.memory_space<any>>)
    %c0_i32_290 = arith.constant 0 : i32
    %c0_i32_291 = arith.constant 0 : i32
    %615 = tpu.memref_slice %arg3[%c0_i32_290, %c0_i32_291] : memref<192x128xf32, #tpu.memory_space<any>> -> memref<1x128xf32, #tpu.memory_space<any>>
    %c0_i32_292 = arith.constant 0 : i32
    %c0_i32_293 = arith.constant 0 : i32
    %616 = tpu.memref_slice %arg4[%c0_i32_292, %c0_i32_293] : memref<256x128xf32, #tpu.memory_space<any>> -> memref<1x128xf32, #tpu.memory_space<any>>
    %617 = tpu.memref_slice %arg5[%10] : memref<2x!tpu.dma_semaphore, #tpu.memory_space<semaphore_mem>> -> memref<1x!tpu.dma_semaphore, #tpu.memory_space<semaphore_mem>>
    %618 = tpu.memref_squeeze %617 : memref<1x!tpu.dma_semaphore, #tpu.memory_space<semaphore_mem>> -> memref<!tpu.dma_semaphore, #tpu.memory_space<semaphore_mem>>
    tpu.wait_dma2 semaphore(%618 : memref<!tpu.dma_semaphore, #tpu.memory_space<semaphore_mem>>) src(%615 : memref<1x128xf32, #tpu.memory_space<any>>) dst(%616 : memref<1x128xf32, #tpu.memory_space<any>>)
    %c0_i32_294 = arith.constant 0 : i32
    %c0_i32_295 = arith.constant 0 : i32
    %619 = tpu.memref_slice %arg3[%c0_i32_294, %c0_i32_295] : memref<192x128xf32, #tpu.memory_space<any>> -> memref<1x128xf32, #tpu.memory_space<any>>
    %c0_i32_296 = arith.constant 0 : i32
    %c0_i32_297 = arith.constant 0 : i32
    %620 = tpu.memref_slice %arg4[%c0_i32_296, %c0_i32_297] : memref<256x128xf32, #tpu.memory_space<any>> -> memref<1x128xf32, #tpu.memory_space<any>>
    %621 = tpu.memref_slice %arg5[%10] : memref<2x!tpu.dma_semaphore, #tpu.memory_space<semaphore_mem>> -> memref<1x!tpu.dma_semaphore, #tpu.memory_space<semaphore_mem>>
    %622 = tpu.memref_squeeze %621 : memref<1x!tpu.dma_semaphore, #tpu.memory_space<semaphore_mem>> -> memref<!tpu.dma_semaphore, #tpu.memory_space<semaphore_mem>>
    tpu.wait_dma2 semaphore(%622 : memref<!tpu.dma_semaphore, #tpu.memory_space<semaphore_mem>>) src(%619 : memref<1x128xf32, #tpu.memory_space<any>>) dst(%620 : memref<1x128xf32, #tpu.memory_space<any>>)
    %c0_i32_298 = arith.constant 0 : i32
    %c0_i32_299 = arith.constant 0 : i32
    %623 = tpu.memref_slice %arg3[%c0_i32_298, %c0_i32_299] : memref<192x128xf32, #tpu.memory_space<any>> -> memref<1x128xf32, #tpu.memory_space<any>>
    %c0_i32_300 = arith.constant 0 : i32
    %c0_i32_301 = arith.constant 0 : i32
    %624 = tpu.memref_slice %arg4[%c0_i32_300, %c0_i32_301] : memref<256x128xf32, #tpu.memory_space<any>> -> memref<1x128xf32, #tpu.memory_space<any>>
    %625 = tpu.memref_slice %arg5[%10] : memref<2x!tpu.dma_semaphore, #tpu.memory_space<semaphore_mem>> -> memref<1x!tpu.dma_semaphore, #tpu.memory_space<semaphore_mem>>
    %626 = tpu.memref_squeeze %625 : memref<1x!tpu.dma_semaphore, #tpu.memory_space<semaphore_mem>> -> memref<!tpu.dma_semaphore, #tpu.memory_space<semaphore_mem>>
    tpu.wait_dma2 semaphore(%626 : memref<!tpu.dma_semaphore, #tpu.memory_space<semaphore_mem>>) src(%623 : memref<1x128xf32, #tpu.memory_space<any>>) dst(%624 : memref<1x128xf32, #tpu.memory_space<any>>)
    %c0_i32_302 = arith.constant 0 : i32
    %c0_i32_303 = arith.constant 0 : i32
    %627 = tpu.memref_slice %arg3[%c0_i32_302, %c0_i32_303] : memref<192x128xf32, #tpu.memory_space<any>> -> memref<1x128xf32, #tpu.memory_space<any>>
    %c0_i32_304 = arith.constant 0 : i32
    %c0_i32_305 = arith.constant 0 : i32
    %628 = tpu.memref_slice %arg4[%c0_i32_304, %c0_i32_305] : memref<256x128xf32, #tpu.memory_space<any>> -> memref<1x128xf32, #tpu.memory_space<any>>
    %629 = tpu.memref_slice %arg5[%10] : memref<2x!tpu.dma_semaphore, #tpu.memory_space<semaphore_mem>> -> memref<1x!tpu.dma_semaphore, #tpu.memory_space<semaphore_mem>>
    %630 = tpu.memref_squeeze %629 : memref<1x!tpu.dma_semaphore, #tpu.memory_space<semaphore_mem>> -> memref<!tpu.dma_semaphore, #tpu.memory_space<semaphore_mem>>
    tpu.wait_dma2 semaphore(%630 : memref<!tpu.dma_semaphore, #tpu.memory_space<semaphore_mem>>) src(%627 : memref<1x128xf32, #tpu.memory_space<any>>) dst(%628 : memref<1x128xf32, #tpu.memory_space<any>>)
    %c0_i32_306 = arith.constant 0 : i32
    %c0_i32_307 = arith.constant 0 : i32
    %631 = tpu.memref_slice %arg3[%c0_i32_306, %c0_i32_307] : memref<192x128xf32, #tpu.memory_space<any>> -> memref<1x128xf32, #tpu.memory_space<any>>
    %c0_i32_308 = arith.constant 0 : i32
    %c0_i32_309 = arith.constant 0 : i32
    %632 = tpu.memref_slice %arg4[%c0_i32_308, %c0_i32_309] : memref<256x128xf32, #tpu.memory_space<any>> -> memref<1x128xf32, #tpu.memory_space<any>>
    %633 = tpu.memref_slice %arg5[%10] : memref<2x!tpu.dma_semaphore, #tpu.memory_space<semaphore_mem>> -> memref<1x!tpu.dma_semaphore, #tpu.memory_space<semaphore_mem>>
    %634 = tpu.memref_squeeze %633 : memref<1x!tpu.dma_semaphore, #tpu.memory_space<semaphore_mem>> -> memref<!tpu.dma_semaphore, #tpu.memory_space<semaphore_mem>>
    tpu.wait_dma2 semaphore(%634 : memref<!tpu.dma_semaphore, #tpu.memory_space<semaphore_mem>>) src(%631 : memref<1x128xf32, #tpu.memory_space<any>>) dst(%632 : memref<1x128xf32, #tpu.memory_space<any>>)
    %c0_i32_310 = arith.constant 0 : i32
    %c0_i32_311 = arith.constant 0 : i32
    %635 = tpu.memref_slice %arg3[%c0_i32_310, %c0_i32_311] : memref<192x128xf32, #tpu.memory_space<any>> -> memref<1x128xf32, #tpu.memory_space<any>>
    %c0_i32_312 = arith.constant 0 : i32
    %c0_i32_313 = arith.constant 0 : i32
    %636 = tpu.memref_slice %arg4[%c0_i32_312, %c0_i32_313] : memref<256x128xf32, #tpu.memory_space<any>> -> memref<1x128xf32, #tpu.memory_space<any>>
    %637 = tpu.memref_slice %arg5[%10] : memref<2x!tpu.dma_semaphore, #tpu.memory_space<semaphore_mem>> -> memref<1x!tpu.dma_semaphore, #tpu.memory_space<semaphore_mem>>
    %638 = tpu.memref_squeeze %637 : memref<1x!tpu.dma_semaphore, #tpu.memory_space<semaphore_mem>> -> memref<!tpu.dma_semaphore, #tpu.memory_space<semaphore_mem>>
    tpu.wait_dma2 semaphore(%638 : memref<!tpu.dma_semaphore, #tpu.memory_space<semaphore_mem>>) src(%635 : memref<1x128xf32, #tpu.memory_space<any>>) dst(%636 : memref<1x128xf32, #tpu.memory_space<any>>)
    %c0_i32_314 = arith.constant 0 : i32
    %c0_i32_315 = arith.constant 0 : i32
    %639 = tpu.memref_slice %arg3[%c0_i32_314, %c0_i32_315] : memref<192x128xf32, #tpu.memory_space<any>> -> memref<1x128xf32, #tpu.memory_space<any>>
    %c0_i32_316 = arith.constant 0 : i32
    %c0_i32_317 = arith.constant 0 : i32
    %640 = tpu.memref_slice %arg4[%c0_i32_316, %c0_i32_317] : memref<256x128xf32, #tpu.memory_space<any>> -> memref<1x128xf32, #tpu.memory_space<any>>
    %641 = tpu.memref_slice %arg5[%10] : memref<2x!tpu.dma_semaphore, #tpu.memory_space<semaphore_mem>> -> memref<1x!tpu.dma_semaphore, #tpu.memory_space<semaphore_mem>>
    %642 = tpu.memref_squeeze %641 : memref<1x!tpu.dma_semaphore, #tpu.memory_space<semaphore_mem>> -> memref<!tpu.dma_semaphore, #tpu.memory_space<semaphore_mem>>
    tpu.wait_dma2 semaphore(%642 : memref<!tpu.dma_semaphore, #tpu.memory_space<semaphore_mem>>) src(%639 : memref<1x128xf32, #tpu.memory_space<any>>) dst(%640 : memref<1x128xf32, #tpu.memory_space<any>>)
    %c0_i32_318 = arith.constant 0 : i32
    %c0_i32_319 = arith.constant 0 : i32
    %643 = tpu.memref_slice %arg3[%c0_i32_318, %c0_i32_319] : memref<192x128xf32, #tpu.memory_space<any>> -> memref<1x128xf32, #tpu.memory_space<any>>
    %c0_i32_320 = arith.constant 0 : i32
    %c0_i32_321 = arith.constant 0 : i32
    %644 = tpu.memref_slice %arg4[%c0_i32_320, %c0_i32_321] : memref<256x128xf32, #tpu.memory_space<any>> -> memref<1x128xf32, #tpu.memory_space<any>>
    %645 = tpu.memref_slice %arg5[%10] : memref<2x!tpu.dma_semaphore, #tpu.memory_space<semaphore_mem>> -> memref<1x!tpu.dma_semaphore, #tpu.memory_space<semaphore_mem>>
    %646 = tpu.memref_squeeze %645 : memref<1x!tpu.dma_semaphore, #tpu.memory_space<semaphore_mem>> -> memref<!tpu.dma_semaphore, #tpu.memory_space<semaphore_mem>>
    tpu.wait_dma2 semaphore(%646 : memref<!tpu.dma_semaphore, #tpu.memory_space<semaphore_mem>>) src(%643 : memref<1x128xf32, #tpu.memory_space<any>>) dst(%644 : memref<1x128xf32, #tpu.memory_space<any>>)
    %c0_i32_322 = arith.constant 0 : i32
    %c0_i32_323 = arith.constant 0 : i32
    %647 = tpu.memref_slice %arg3[%c0_i32_322, %c0_i32_323] : memref<192x128xf32, #tpu.memory_space<any>> -> memref<1x128xf32, #tpu.memory_space<any>>
    %c0_i32_324 = arith.constant 0 : i32
    %c0_i32_325 = arith.constant 0 : i32
    %648 = tpu.memref_slice %arg4[%c0_i32_324, %c0_i32_325] : memref<256x128xf32, #tpu.memory_space<any>> -> memref<1x128xf32, #tpu.memory_space<any>>
    %649 = tpu.memref_slice %arg5[%10] : memref<2x!tpu.dma_semaphore, #tpu.memory_space<semaphore_mem>> -> memref<1x!tpu.dma_semaphore, #tpu.memory_space<semaphore_mem>>
    %650 = tpu.memref_squeeze %649 : memref<1x!tpu.dma_semaphore, #tpu.memory_space<semaphore_mem>> -> memref<!tpu.dma_semaphore, #tpu.memory_space<semaphore_mem>>
    tpu.wait_dma2 semaphore(%650 : memref<!tpu.dma_semaphore, #tpu.memory_space<semaphore_mem>>) src(%647 : memref<1x128xf32, #tpu.memory_space<any>>) dst(%648 : memref<1x128xf32, #tpu.memory_space<any>>)
    %c0_i32_326 = arith.constant 0 : i32
    %c0_i32_327 = arith.constant 0 : i32
    %651 = tpu.memref_slice %arg3[%c0_i32_326, %c0_i32_327] : memref<192x128xf32, #tpu.memory_space<any>> -> memref<1x128xf32, #tpu.memory_space<any>>
    %c0_i32_328 = arith.constant 0 : i32
    %c0_i32_329 = arith.constant 0 : i32
    %652 = tpu.memref_slice %arg4[%c0_i32_328, %c0_i32_329] : memref<256x128xf32, #tpu.memory_space<any>> -> memref<1x128xf32, #tpu.memory_space<any>>
    %653 = tpu.memref_slice %arg5[%10] : memref<2x!tpu.dma_semaphore, #tpu.memory_space<semaphore_mem>> -> memref<1x!tpu.dma_semaphore, #tpu.memory_space<semaphore_mem>>
    %654 = tpu.memref_squeeze %653 : memref<1x!tpu.dma_semaphore, #tpu.memory_space<semaphore_mem>> -> memref<!tpu.dma_semaphore, #tpu.memory_space<semaphore_mem>>
    tpu.wait_dma2 semaphore(%654 : memref<!tpu.dma_semaphore, #tpu.memory_space<semaphore_mem>>) src(%651 : memref<1x128xf32, #tpu.memory_space<any>>) dst(%652 : memref<1x128xf32, #tpu.memory_space<any>>)
    %c0_i32_330 = arith.constant 0 : i32
    %c0_i32_331 = arith.constant 0 : i32
    %655 = tpu.memref_slice %arg3[%c0_i32_330, %c0_i32_331] : memref<192x128xf32, #tpu.memory_space<any>> -> memref<1x128xf32, #tpu.memory_space<any>>
    %c0_i32_332 = arith.constant 0 : i32
    %c0_i32_333 = arith.constant 0 : i32
    %656 = tpu.memref_slice %arg4[%c0_i32_332, %c0_i32_333] : memref<256x128xf32, #tpu.memory_space<any>> -> memref<1x128xf32, #tpu.memory_space<any>>
    %657 = tpu.memref_slice %arg5[%10] : memref<2x!tpu.dma_semaphore, #tpu.memory_space<semaphore_mem>> -> memref<1x!tpu.dma_semaphore, #tpu.memory_space<semaphore_mem>>
    %658 = tpu.memref_squeeze %657 : memref<1x!tpu.dma_semaphore, #tpu.memory_space<semaphore_mem>> -> memref<!tpu.dma_semaphore, #tpu.memory_space<semaphore_mem>>
    tpu.wait_dma2 semaphore(%658 : memref<!tpu.dma_semaphore, #tpu.memory_space<semaphore_mem>>) src(%655 : memref<1x128xf32, #tpu.memory_space<any>>) dst(%656 : memref<1x128xf32, #tpu.memory_space<any>>)
    %c0_i32_334 = arith.constant 0 : i32
    %c0_i32_335 = arith.constant 0 : i32
    %659 = tpu.memref_slice %arg3[%c0_i32_334, %c0_i32_335] : memref<192x128xf32, #tpu.memory_space<any>> -> memref<1x128xf32, #tpu.memory_space<any>>
    %c0_i32_336 = arith.constant 0 : i32
    %c0_i32_337 = arith.constant 0 : i32
    %660 = tpu.memref_slice %arg4[%c0_i32_336, %c0_i32_337] : memref<256x128xf32, #tpu.memory_space<any>> -> memref<1x128xf32, #tpu.memory_space<any>>
    %661 = tpu.memref_slice %arg5[%10] : memref<2x!tpu.dma_semaphore, #tpu.memory_space<semaphore_mem>> -> memref<1x!tpu.dma_semaphore, #tpu.memory_space<semaphore_mem>>
    %662 = tpu.memref_squeeze %661 : memref<1x!tpu.dma_semaphore, #tpu.memory_space<semaphore_mem>> -> memref<!tpu.dma_semaphore, #tpu.memory_space<semaphore_mem>>
    tpu.wait_dma2 semaphore(%662 : memref<!tpu.dma_semaphore, #tpu.memory_space<semaphore_mem>>) src(%659 : memref<1x128xf32, #tpu.memory_space<any>>) dst(%660 : memref<1x128xf32, #tpu.memory_space<any>>)
    %c0_i32_338 = arith.constant 0 : i32
    %c0_i32_339 = arith.constant 0 : i32
    %663 = tpu.memref_slice %arg3[%c0_i32_338, %c0_i32_339] : memref<192x128xf32, #tpu.memory_space<any>> -> memref<1x128xf32, #tpu.memory_space<any>>
    %c0_i32_340 = arith.constant 0 : i32
    %c0_i32_341 = arith.constant 0 : i32
    %664 = tpu.memref_slice %arg4[%c0_i32_340, %c0_i32_341] : memref<256x128xf32, #tpu.memory_space<any>> -> memref<1x128xf32, #tpu.memory_space<any>>
    %665 = tpu.memref_slice %arg5[%10] : memref<2x!tpu.dma_semaphore, #tpu.memory_space<semaphore_mem>> -> memref<1x!tpu.dma_semaphore, #tpu.memory_space<semaphore_mem>>
    %666 = tpu.memref_squeeze %665 : memref<1x!tpu.dma_semaphore, #tpu.memory_space<semaphore_mem>> -> memref<!tpu.dma_semaphore, #tpu.memory_space<semaphore_mem>>
    tpu.wait_dma2 semaphore(%666 : memref<!tpu.dma_semaphore, #tpu.memory_space<semaphore_mem>>) src(%663 : memref<1x128xf32, #tpu.memory_space<any>>) dst(%664 : memref<1x128xf32, #tpu.memory_space<any>>)
    %c0_i32_342 = arith.constant 0 : i32
    %c0_i32_343 = arith.constant 0 : i32
    %667 = tpu.memref_slice %arg3[%c0_i32_342, %c0_i32_343] : memref<192x128xf32, #tpu.memory_space<any>> -> memref<1x128xf32, #tpu.memory_space<any>>
    %c0_i32_344 = arith.constant 0 : i32
    %c0_i32_345 = arith.constant 0 : i32
    %668 = tpu.memref_slice %arg4[%c0_i32_344, %c0_i32_345] : memref<256x128xf32, #tpu.memory_space<any>> -> memref<1x128xf32, #tpu.memory_space<any>>
    %669 = tpu.memref_slice %arg5[%10] : memref<2x!tpu.dma_semaphore, #tpu.memory_space<semaphore_mem>> -> memref<1x!tpu.dma_semaphore, #tpu.memory_space<semaphore_mem>>
    %670 = tpu.memref_squeeze %669 : memref<1x!tpu.dma_semaphore, #tpu.memory_space<semaphore_mem>> -> memref<!tpu.dma_semaphore, #tpu.memory_space<semaphore_mem>>
    tpu.wait_dma2 semaphore(%670 : memref<!tpu.dma_semaphore, #tpu.memory_space<semaphore_mem>>) src(%667 : memref<1x128xf32, #tpu.memory_space<any>>) dst(%668 : memref<1x128xf32, #tpu.memory_space<any>>)
    %c0_i32_346 = arith.constant 0 : i32
    %c0_i32_347 = arith.constant 0 : i32
    %671 = tpu.memref_slice %arg3[%c0_i32_346, %c0_i32_347] : memref<192x128xf32, #tpu.memory_space<any>> -> memref<1x128xf32, #tpu.memory_space<any>>
    %c0_i32_348 = arith.constant 0 : i32
    %c0_i32_349 = arith.constant 0 : i32
    %672 = tpu.memref_slice %arg4[%c0_i32_348, %c0_i32_349] : memref<256x128xf32, #tpu.memory_space<any>> -> memref<1x128xf32, #tpu.memory_space<any>>
    %673 = tpu.memref_slice %arg5[%10] : memref<2x!tpu.dma_semaphore, #tpu.memory_space<semaphore_mem>> -> memref<1x!tpu.dma_semaphore, #tpu.memory_space<semaphore_mem>>
    %674 = tpu.memref_squeeze %673 : memref<1x!tpu.dma_semaphore, #tpu.memory_space<semaphore_mem>> -> memref<!tpu.dma_semaphore, #tpu.memory_space<semaphore_mem>>
    tpu.wait_dma2 semaphore(%674 : memref<!tpu.dma_semaphore, #tpu.memory_space<semaphore_mem>>) src(%671 : memref<1x128xf32, #tpu.memory_space<any>>) dst(%672 : memref<1x128xf32, #tpu.memory_space<any>>)
    %c0_i32_350 = arith.constant 0 : i32
    %c0_i32_351 = arith.constant 0 : i32
    %675 = tpu.memref_slice %arg3[%c0_i32_350, %c0_i32_351] : memref<192x128xf32, #tpu.memory_space<any>> -> memref<1x128xf32, #tpu.memory_space<any>>
    %c0_i32_352 = arith.constant 0 : i32
    %c0_i32_353 = arith.constant 0 : i32
    %676 = tpu.memref_slice %arg4[%c0_i32_352, %c0_i32_353] : memref<256x128xf32, #tpu.memory_space<any>> -> memref<1x128xf32, #tpu.memory_space<any>>
    %677 = tpu.memref_slice %arg5[%10] : memref<2x!tpu.dma_semaphore, #tpu.memory_space<semaphore_mem>> -> memref<1x!tpu.dma_semaphore, #tpu.memory_space<semaphore_mem>>
    %678 = tpu.memref_squeeze %677 : memref<1x!tpu.dma_semaphore, #tpu.memory_space<semaphore_mem>> -> memref<!tpu.dma_semaphore, #tpu.memory_space<semaphore_mem>>
    tpu.wait_dma2 semaphore(%678 : memref<!tpu.dma_semaphore, #tpu.memory_space<semaphore_mem>>) src(%675 : memref<1x128xf32, #tpu.memory_space<any>>) dst(%676 : memref<1x128xf32, #tpu.memory_space<any>>)
    %c0_i32_354 = arith.constant 0 : i32
    %c0_i32_355 = arith.constant 0 : i32
    %679 = tpu.memref_slice %arg3[%c0_i32_354, %c0_i32_355] : memref<192x128xf32, #tpu.memory_space<any>> -> memref<1x128xf32, #tpu.memory_space<any>>
    %c0_i32_356 = arith.constant 0 : i32
    %c0_i32_357 = arith.constant 0 : i32
    %680 = tpu.memref_slice %arg4[%c0_i32_356, %c0_i32_357] : memref<256x128xf32, #tpu.memory_space<any>> -> memref<1x128xf32, #tpu.memory_space<any>>
    %681 = tpu.memref_slice %arg5[%10] : memref<2x!tpu.dma_semaphore, #tpu.memory_space<semaphore_mem>> -> memref<1x!tpu.dma_semaphore, #tpu.memory_space<semaphore_mem>>
    %682 = tpu.memref_squeeze %681 : memref<1x!tpu.dma_semaphore, #tpu.memory_space<semaphore_mem>> -> memref<!tpu.dma_semaphore, #tpu.memory_space<semaphore_mem>>
    tpu.wait_dma2 semaphore(%682 : memref<!tpu.dma_semaphore, #tpu.memory_space<semaphore_mem>>) src(%679 : memref<1x128xf32, #tpu.memory_space<any>>) dst(%680 : memref<1x128xf32, #tpu.memory_space<any>>)
    %c0_i32_358 = arith.constant 0 : i32
    %c0_i32_359 = arith.constant 0 : i32
    %683 = tpu.memref_slice %arg3[%c0_i32_358, %c0_i32_359] : memref<192x128xf32, #tpu.memory_space<any>> -> memref<1x128xf32, #tpu.memory_space<any>>
    %c0_i32_360 = arith.constant 0 : i32
    %c0_i32_361 = arith.constant 0 : i32
    %684 = tpu.memref_slice %arg4[%c0_i32_360, %c0_i32_361] : memref<256x128xf32, #tpu.memory_space<any>> -> memref<1x128xf32, #tpu.memory_space<any>>
    %685 = tpu.memref_slice %arg5[%10] : memref<2x!tpu.dma_semaphore, #tpu.memory_space<semaphore_mem>> -> memref<1x!tpu.dma_semaphore, #tpu.memory_space<semaphore_mem>>
    %686 = tpu.memref_squeeze %685 : memref<1x!tpu.dma_semaphore, #tpu.memory_space<semaphore_mem>> -> memref<!tpu.dma_semaphore, #tpu.memory_space<semaphore_mem>>
    tpu.wait_dma2 semaphore(%686 : memref<!tpu.dma_semaphore, #tpu.memory_space<semaphore_mem>>) src(%683 : memref<1x128xf32, #tpu.memory_space<any>>) dst(%684 : memref<1x128xf32, #tpu.memory_space<any>>)
    %c0_i32_362 = arith.constant 0 : i32
    %c0_i32_363 = arith.constant 0 : i32
    %687 = tpu.memref_slice %arg3[%c0_i32_362, %c0_i32_363] : memref<192x128xf32, #tpu.memory_space<any>> -> memref<1x128xf32, #tpu.memory_space<any>>
    %c0_i32_364 = arith.constant 0 : i32
    %c0_i32_365 = arith.constant 0 : i32
    %688 = tpu.memref_slice %arg4[%c0_i32_364, %c0_i32_365] : memref<256x128xf32, #tpu.memory_space<any>> -> memref<1x128xf32, #tpu.memory_space<any>>
    %689 = tpu.memref_slice %arg5[%10] : memref<2x!tpu.dma_semaphore, #tpu.memory_space<semaphore_mem>> -> memref<1x!tpu.dma_semaphore, #tpu.memory_space<semaphore_mem>>
    %690 = tpu.memref_squeeze %689 : memref<1x!tpu.dma_semaphore, #tpu.memory_space<semaphore_mem>> -> memref<!tpu.dma_semaphore, #tpu.memory_space<semaphore_mem>>
    tpu.wait_dma2 semaphore(%690 : memref<!tpu.dma_semaphore, #tpu.memory_space<semaphore_mem>>) src(%687 : memref<1x128xf32, #tpu.memory_space<any>>) dst(%688 : memref<1x128xf32, #tpu.memory_space<any>>)
    %c0_i32_366 = arith.constant 0 : i32
    %c0_i32_367 = arith.constant 0 : i32
    %691 = tpu.memref_slice %arg3[%c0_i32_366, %c0_i32_367] : memref<192x128xf32, #tpu.memory_space<any>> -> memref<1x128xf32, #tpu.memory_space<any>>
    %c0_i32_368 = arith.constant 0 : i32
    %c0_i32_369 = arith.constant 0 : i32
    %692 = tpu.memref_slice %arg4[%c0_i32_368, %c0_i32_369] : memref<256x128xf32, #tpu.memory_space<any>> -> memref<1x128xf32, #tpu.memory_space<any>>
    %693 = tpu.memref_slice %arg5[%10] : memref<2x!tpu.dma_semaphore, #tpu.memory_space<semaphore_mem>> -> memref<1x!tpu.dma_semaphore, #tpu.memory_space<semaphore_mem>>
    %694 = tpu.memref_squeeze %693 : memref<1x!tpu.dma_semaphore, #tpu.memory_space<semaphore_mem>> -> memref<!tpu.dma_semaphore, #tpu.memory_space<semaphore_mem>>
    tpu.wait_dma2 semaphore(%694 : memref<!tpu.dma_semaphore, #tpu.memory_space<semaphore_mem>>) src(%691 : memref<1x128xf32, #tpu.memory_space<any>>) dst(%692 : memref<1x128xf32, #tpu.memory_space<any>>)
    %c0_i32_370 = arith.constant 0 : i32
    %c0_i32_371 = arith.constant 0 : i32
    %695 = tpu.memref_slice %arg3[%c0_i32_370, %c0_i32_371] : memref<192x128xf32, #tpu.memory_space<any>> -> memref<1x128xf32, #tpu.memory_space<any>>
    %c0_i32_372 = arith.constant 0 : i32
    %c0_i32_373 = arith.constant 0 : i32
    %696 = tpu.memref_slice %arg4[%c0_i32_372, %c0_i32_373] : memref<256x128xf32, #tpu.memory_space<any>> -> memref<1x128xf32, #tpu.memory_space<any>>
    %697 = tpu.memref_slice %arg5[%10] : memref<2x!tpu.dma_semaphore, #tpu.memory_space<semaphore_mem>> -> memref<1x!tpu.dma_semaphore, #tpu.memory_space<semaphore_mem>>
    %698 = tpu.memref_squeeze %697 : memref<1x!tpu.dma_semaphore, #tpu.memory_space<semaphore_mem>> -> memref<!tpu.dma_semaphore, #tpu.memory_space<semaphore_mem>>
    tpu.wait_dma2 semaphore(%698 : memref<!tpu.dma_semaphore, #tpu.memory_space<semaphore_mem>>) src(%695 : memref<1x128xf32, #tpu.memory_space<any>>) dst(%696 : memref<1x128xf32, #tpu.memory_space<any>>)
    %c0_i32_374 = arith.constant 0 : i32
    %c0_i32_375 = arith.constant 0 : i32
    %699 = tpu.memref_slice %arg3[%c0_i32_374, %c0_i32_375] : memref<192x128xf32, #tpu.memory_space<any>> -> memref<1x128xf32, #tpu.memory_space<any>>
    %c0_i32_376 = arith.constant 0 : i32
    %c0_i32_377 = arith.constant 0 : i32
    %700 = tpu.memref_slice %arg4[%c0_i32_376, %c0_i32_377] : memref<256x128xf32, #tpu.memory_space<any>> -> memref<1x128xf32, #tpu.memory_space<any>>
    %701 = tpu.memref_slice %arg5[%10] : memref<2x!tpu.dma_semaphore, #tpu.memory_space<semaphore_mem>> -> memref<1x!tpu.dma_semaphore, #tpu.memory_space<semaphore_mem>>
    %702 = tpu.memref_squeeze %701 : memref<1x!tpu.dma_semaphore, #tpu.memory_space<semaphore_mem>> -> memref<!tpu.dma_semaphore, #tpu.memory_space<semaphore_mem>>
    tpu.wait_dma2 semaphore(%702 : memref<!tpu.dma_semaphore, #tpu.memory_space<semaphore_mem>>) src(%699 : memref<1x128xf32, #tpu.memory_space<any>>) dst(%700 : memref<1x128xf32, #tpu.memory_space<any>>)
    %c0_i32_378 = arith.constant 0 : i32
    %c0_i32_379 = arith.constant 0 : i32
    %703 = tpu.memref_slice %arg3[%c0_i32_378, %c0_i32_379] : memref<192x128xf32, #tpu.memory_space<any>> -> memref<1x128xf32, #tpu.memory_space<any>>
    %c0_i32_380 = arith.constant 0 : i32
    %c0_i32_381 = arith.constant 0 : i32
    %704 = tpu.memref_slice %arg4[%c0_i32_380, %c0_i32_381] : memref<256x128xf32, #tpu.memory_space<any>> -> memref<1x128xf32, #tpu.memory_space<any>>
    %705 = tpu.memref_slice %arg5[%10] : memref<2x!tpu.dma_semaphore, #tpu.memory_space<semaphore_mem>> -> memref<1x!tpu.dma_semaphore, #tpu.memory_space<semaphore_mem>>
    %706 = tpu.memref_squeeze %705 : memref<1x!tpu.dma_semaphore, #tpu.memory_space<semaphore_mem>> -> memref<!tpu.dma_semaphore, #tpu.memory_space<semaphore_mem>>
    tpu.wait_dma2 semaphore(%706 : memref<!tpu.dma_semaphore, #tpu.memory_space<semaphore_mem>>) src(%703 : memref<1x128xf32, #tpu.memory_space<any>>) dst(%704 : memref<1x128xf32, #tpu.memory_space<any>>)
    %c0_i32_382 = arith.constant 0 : i32
    %c0_i32_383 = arith.constant 0 : i32
    %707 = tpu.memref_slice %arg3[%c0_i32_382, %c0_i32_383] : memref<192x128xf32, #tpu.memory_space<any>> -> memref<1x128xf32, #tpu.memory_space<any>>
    %c0_i32_384 = arith.constant 0 : i32
    %c0_i32_385 = arith.constant 0 : i32
    %708 = tpu.memref_slice %arg4[%c0_i32_384, %c0_i32_385] : memref<256x128xf32, #tpu.memory_space<any>> -> memref<1x128xf32, #tpu.memory_space<any>>
    %709 = tpu.memref_slice %arg5[%10] : memref<2x!tpu.dma_semaphore, #tpu.memory_space<semaphore_mem>> -> memref<1x!tpu.dma_semaphore, #tpu.memory_space<semaphore_mem>>
    %710 = tpu.memref_squeeze %709 : memref<1x!tpu.dma_semaphore, #tpu.memory_space<semaphore_mem>> -> memref<!tpu.dma_semaphore, #tpu.memory_space<semaphore_mem>>
    tpu.wait_dma2 semaphore(%710 : memref<!tpu.dma_semaphore, #tpu.memory_space<semaphore_mem>>) src(%707 : memref<1x128xf32, #tpu.memory_space<any>>) dst(%708 : memref<1x128xf32, #tpu.memory_space<any>>)
    %c0_i32_386 = arith.constant 0 : i32
    %c0_i32_387 = arith.constant 0 : i32
    %711 = tpu.memref_slice %arg3[%c0_i32_386, %c0_i32_387] : memref<192x128xf32, #tpu.memory_space<any>> -> memref<1x128xf32, #tpu.memory_space<any>>
    %c0_i32_388 = arith.constant 0 : i32
    %c0_i32_389 = arith.constant 0 : i32
    %712 = tpu.memref_slice %arg4[%c0_i32_388, %c0_i32_389] : memref<256x128xf32, #tpu.memory_space<any>> -> memref<1x128xf32, #tpu.memory_space<any>>
    %713 = tpu.memref_slice %arg5[%10] : memref<2x!tpu.dma_semaphore, #tpu.memory_space<semaphore_mem>> -> memref<1x!tpu.dma_semaphore, #tpu.memory_space<semaphore_mem>>
    %714 = tpu.memref_squeeze %713 : memref<1x!tpu.dma_semaphore, #tpu.memory_space<semaphore_mem>> -> memref<!tpu.dma_semaphore, #tpu.memory_space<semaphore_mem>>
    tpu.wait_dma2 semaphore(%714 : memref<!tpu.dma_semaphore, #tpu.memory_space<semaphore_mem>>) src(%711 : memref<1x128xf32, #tpu.memory_space<any>>) dst(%712 : memref<1x128xf32, #tpu.memory_space<any>>)
    %c0_i32_390 = arith.constant 0 : i32
    %c0_i32_391 = arith.constant 0 : i32
    %715 = tpu.memref_slice %arg3[%c0_i32_390, %c0_i32_391] : memref<192x128xf32, #tpu.memory_space<any>> -> memref<1x128xf32, #tpu.memory_space<any>>
    %c0_i32_392 = arith.constant 0 : i32
    %c0_i32_393 = arith.constant 0 : i32
    %716 = tpu.memref_slice %arg4[%c0_i32_392, %c0_i32_393] : memref<256x128xf32, #tpu.memory_space<any>> -> memref<1x128xf32, #tpu.memory_space<any>>
    %717 = tpu.memref_slice %arg5[%10] : memref<2x!tpu.dma_semaphore, #tpu.memory_space<semaphore_mem>> -> memref<1x!tpu.dma_semaphore, #tpu.memory_space<semaphore_mem>>
    %718 = tpu.memref_squeeze %717 : memref<1x!tpu.dma_semaphore, #tpu.memory_space<semaphore_mem>> -> memref<!tpu.dma_semaphore, #tpu.memory_space<semaphore_mem>>
    tpu.wait_dma2 semaphore(%718 : memref<!tpu.dma_semaphore, #tpu.memory_space<semaphore_mem>>) src(%715 : memref<1x128xf32, #tpu.memory_space<any>>) dst(%716 : memref<1x128xf32, #tpu.memory_space<any>>)
    %c0_i32_394 = arith.constant 0 : i32
    %c0_i32_395 = arith.constant 0 : i32
    %719 = tpu.memref_slice %arg3[%c0_i32_394, %c0_i32_395] : memref<192x128xf32, #tpu.memory_space<any>> -> memref<1x128xf32, #tpu.memory_space<any>>
    %c0_i32_396 = arith.constant 0 : i32
    %c0_i32_397 = arith.constant 0 : i32
    %720 = tpu.memref_slice %arg4[%c0_i32_396, %c0_i32_397] : memref<256x128xf32, #tpu.memory_space<any>> -> memref<1x128xf32, #tpu.memory_space<any>>
    %721 = tpu.memref_slice %arg5[%10] : memref<2x!tpu.dma_semaphore, #tpu.memory_space<semaphore_mem>> -> memref<1x!tpu.dma_semaphore, #tpu.memory_space<semaphore_mem>>
    %722 = tpu.memref_squeeze %721 : memref<1x!tpu.dma_semaphore, #tpu.memory_space<semaphore_mem>> -> memref<!tpu.dma_semaphore, #tpu.memory_space<semaphore_mem>>
    tpu.wait_dma2 semaphore(%722 : memref<!tpu.dma_semaphore, #tpu.memory_space<semaphore_mem>>) src(%719 : memref<1x128xf32, #tpu.memory_space<any>>) dst(%720 : memref<1x128xf32, #tpu.memory_space<any>>)
    %c0_i32_398 = arith.constant 0 : i32
    %c0_i32_399 = arith.constant 0 : i32
    %723 = tpu.memref_slice %arg3[%c0_i32_398, %c0_i32_399] : memref<192x128xf32, #tpu.memory_space<any>> -> memref<1x128xf32, #tpu.memory_space<any>>
    %c0_i32_400 = arith.constant 0 : i32
    %c0_i32_401 = arith.constant 0 : i32
    %724 = tpu.memref_slice %arg4[%c0_i32_400, %c0_i32_401] : memref<256x128xf32, #tpu.memory_space<any>> -> memref<1x128xf32, #tpu.memory_space<any>>
    %725 = tpu.memref_slice %arg5[%10] : memref<2x!tpu.dma_semaphore, #tpu.memory_space<semaphore_mem>> -> memref<1x!tpu.dma_semaphore, #tpu.memory_space<semaphore_mem>>
    %726 = tpu.memref_squeeze %725 : memref<1x!tpu.dma_semaphore, #tpu.memory_space<semaphore_mem>> -> memref<!tpu.dma_semaphore, #tpu.memory_space<semaphore_mem>>
    tpu.wait_dma2 semaphore(%726 : memref<!tpu.dma_semaphore, #tpu.memory_space<semaphore_mem>>) src(%723 : memref<1x128xf32, #tpu.memory_space<any>>) dst(%724 : memref<1x128xf32, #tpu.memory_space<any>>)
    %c0_i32_402 = arith.constant 0 : i32
    %c0_i32_403 = arith.constant 0 : i32
    %727 = tpu.memref_slice %arg3[%c0_i32_402, %c0_i32_403] : memref<192x128xf32, #tpu.memory_space<any>> -> memref<1x128xf32, #tpu.memory_space<any>>
    %c0_i32_404 = arith.constant 0 : i32
    %c0_i32_405 = arith.constant 0 : i32
    %728 = tpu.memref_slice %arg4[%c0_i32_404, %c0_i32_405] : memref<256x128xf32, #tpu.memory_space<any>> -> memref<1x128xf32, #tpu.memory_space<any>>
    %729 = tpu.memref_slice %arg5[%10] : memref<2x!tpu.dma_semaphore, #tpu.memory_space<semaphore_mem>> -> memref<1x!tpu.dma_semaphore, #tpu.memory_space<semaphore_mem>>
    %730 = tpu.memref_squeeze %729 : memref<1x!tpu.dma_semaphore, #tpu.memory_space<semaphore_mem>> -> memref<!tpu.dma_semaphore, #tpu.memory_space<semaphore_mem>>
    tpu.wait_dma2 semaphore(%730 : memref<!tpu.dma_semaphore, #tpu.memory_space<semaphore_mem>>) src(%727 : memref<1x128xf32, #tpu.memory_space<any>>) dst(%728 : memref<1x128xf32, #tpu.memory_space<any>>)
    %c0_i32_406 = arith.constant 0 : i32
    %c0_i32_407 = arith.constant 0 : i32
    %731 = tpu.memref_slice %arg3[%c0_i32_406, %c0_i32_407] : memref<192x128xf32, #tpu.memory_space<any>> -> memref<1x128xf32, #tpu.memory_space<any>>
    %c0_i32_408 = arith.constant 0 : i32
    %c0_i32_409 = arith.constant 0 : i32
    %732 = tpu.memref_slice %arg4[%c0_i32_408, %c0_i32_409] : memref<256x128xf32, #tpu.memory_space<any>> -> memref<1x128xf32, #tpu.memory_space<any>>
    %733 = tpu.memref_slice %arg5[%10] : memref<2x!tpu.dma_semaphore, #tpu.memory_space<semaphore_mem>> -> memref<1x!tpu.dma_semaphore, #tpu.memory_space<semaphore_mem>>
    %734 = tpu.memref_squeeze %733 : memref<1x!tpu.dma_semaphore, #tpu.memory_space<semaphore_mem>> -> memref<!tpu.dma_semaphore, #tpu.memory_space<semaphore_mem>>
    tpu.wait_dma2 semaphore(%734 : memref<!tpu.dma_semaphore, #tpu.memory_space<semaphore_mem>>) src(%731 : memref<1x128xf32, #tpu.memory_space<any>>) dst(%732 : memref<1x128xf32, #tpu.memory_space<any>>)
    %c0_i32_410 = arith.constant 0 : i32
    %c0_i32_411 = arith.constant 0 : i32
    %735 = tpu.memref_slice %arg3[%c0_i32_410, %c0_i32_411] : memref<192x128xf32, #tpu.memory_space<any>> -> memref<1x128xf32, #tpu.memory_space<any>>
    %c0_i32_412 = arith.constant 0 : i32
    %c0_i32_413 = arith.constant 0 : i32
    %736 = tpu.memref_slice %arg4[%c0_i32_412, %c0_i32_413] : memref<256x128xf32, #tpu.memory_space<any>> -> memref<1x128xf32, #tpu.memory_space<any>>
    %737 = tpu.memref_slice %arg5[%10] : memref<2x!tpu.dma_semaphore, #tpu.memory_space<semaphore_mem>> -> memref<1x!tpu.dma_semaphore, #tpu.memory_space<semaphore_mem>>
    %738 = tpu.memref_squeeze %737 : memref<1x!tpu.dma_semaphore, #tpu.memory_space<semaphore_mem>> -> memref<!tpu.dma_semaphore, #tpu.memory_space<semaphore_mem>>
    tpu.wait_dma2 semaphore(%738 : memref<!tpu.dma_semaphore, #tpu.memory_space<semaphore_mem>>) src(%735 : memref<1x128xf32, #tpu.memory_space<any>>) dst(%736 : memref<1x128xf32, #tpu.memory_space<any>>)
    %c0_i32_414 = arith.constant 0 : i32
    %c0_i32_415 = arith.constant 0 : i32
    %739 = tpu.memref_slice %arg3[%c0_i32_414, %c0_i32_415] : memref<192x128xf32, #tpu.memory_space<any>> -> memref<1x128xf32, #tpu.memory_space<any>>
    %c0_i32_416 = arith.constant 0 : i32
    %c0_i32_417 = arith.constant 0 : i32
    %740 = tpu.memref_slice %arg4[%c0_i32_416, %c0_i32_417] : memref<256x128xf32, #tpu.memory_space<any>> -> memref<1x128xf32, #tpu.memory_space<any>>
    %741 = tpu.memref_slice %arg5[%10] : memref<2x!tpu.dma_semaphore, #tpu.memory_space<semaphore_mem>> -> memref<1x!tpu.dma_semaphore, #tpu.memory_space<semaphore_mem>>
    %742 = tpu.memref_squeeze %741 : memref<1x!tpu.dma_semaphore, #tpu.memory_space<semaphore_mem>> -> memref<!tpu.dma_semaphore, #tpu.memory_space<semaphore_mem>>
    tpu.wait_dma2 semaphore(%742 : memref<!tpu.dma_semaphore, #tpu.memory_space<semaphore_mem>>) src(%739 : memref<1x128xf32, #tpu.memory_space<any>>) dst(%740 : memref<1x128xf32, #tpu.memory_space<any>>)
    %c0_i32_418 = arith.constant 0 : i32
    %c0_i32_419 = arith.constant 0 : i32
    %743 = tpu.memref_slice %arg3[%c0_i32_418, %c0_i32_419] : memref<192x128xf32, #tpu.memory_space<any>> -> memref<1x128xf32, #tpu.memory_space<any>>
    %c0_i32_420 = arith.constant 0 : i32
    %c0_i32_421 = arith.constant 0 : i32
    %744 = tpu.memref_slice %arg4[%c0_i32_420, %c0_i32_421] : memref<256x128xf32, #tpu.memory_space<any>> -> memref<1x128xf32, #tpu.memory_space<any>>
    %745 = tpu.memref_slice %arg5[%10] : memref<2x!tpu.dma_semaphore, #tpu.memory_space<semaphore_mem>> -> memref<1x!tpu.dma_semaphore, #tpu.memory_space<semaphore_mem>>
    %746 = tpu.memref_squeeze %745 : memref<1x!tpu.dma_semaphore, #tpu.memory_space<semaphore_mem>> -> memref<!tpu.dma_semaphore, #tpu.memory_space<semaphore_mem>>
    tpu.wait_dma2 semaphore(%746 : memref<!tpu.dma_semaphore, #tpu.memory_space<semaphore_mem>>) src(%743 : memref<1x128xf32, #tpu.memory_space<any>>) dst(%744 : memref<1x128xf32, #tpu.memory_space<any>>)
    %c0_i32_422 = arith.constant 0 : i32
    %c0_i32_423 = arith.constant 0 : i32
    %747 = tpu.memref_slice %arg3[%c0_i32_422, %c0_i32_423] : memref<192x128xf32, #tpu.memory_space<any>> -> memref<1x128xf32, #tpu.memory_space<any>>
    %c0_i32_424 = arith.constant 0 : i32
    %c0_i32_425 = arith.constant 0 : i32
    %748 = tpu.memref_slice %arg4[%c0_i32_424, %c0_i32_425] : memref<256x128xf32, #tpu.memory_space<any>> -> memref<1x128xf32, #tpu.memory_space<any>>
    %749 = tpu.memref_slice %arg5[%10] : memref<2x!tpu.dma_semaphore, #tpu.memory_space<semaphore_mem>> -> memref<1x!tpu.dma_semaphore, #tpu.memory_space<semaphore_mem>>
    %750 = tpu.memref_squeeze %749 : memref<1x!tpu.dma_semaphore, #tpu.memory_space<semaphore_mem>> -> memref<!tpu.dma_semaphore, #tpu.memory_space<semaphore_mem>>
    tpu.wait_dma2 semaphore(%750 : memref<!tpu.dma_semaphore, #tpu.memory_space<semaphore_mem>>) src(%747 : memref<1x128xf32, #tpu.memory_space<any>>) dst(%748 : memref<1x128xf32, #tpu.memory_space<any>>)
    %c0_i32_426 = arith.constant 0 : i32
    %c0_i32_427 = arith.constant 0 : i32
    %751 = tpu.memref_slice %arg3[%c0_i32_426, %c0_i32_427] : memref<192x128xf32, #tpu.memory_space<any>> -> memref<1x128xf32, #tpu.memory_space<any>>
    %c0_i32_428 = arith.constant 0 : i32
    %c0_i32_429 = arith.constant 0 : i32
    %752 = tpu.memref_slice %arg4[%c0_i32_428, %c0_i32_429] : memref<256x128xf32, #tpu.memory_space<any>> -> memref<1x128xf32, #tpu.memory_space<any>>
    %753 = tpu.memref_slice %arg5[%10] : memref<2x!tpu.dma_semaphore, #tpu.memory_space<semaphore_mem>> -> memref<1x!tpu.dma_semaphore, #tpu.memory_space<semaphore_mem>>
    %754 = tpu.memref_squeeze %753 : memref<1x!tpu.dma_semaphore, #tpu.memory_space<semaphore_mem>> -> memref<!tpu.dma_semaphore, #tpu.memory_space<semaphore_mem>>
    tpu.wait_dma2 semaphore(%754 : memref<!tpu.dma_semaphore, #tpu.memory_space<semaphore_mem>>) src(%751 : memref<1x128xf32, #tpu.memory_space<any>>) dst(%752 : memref<1x128xf32, #tpu.memory_space<any>>)
    %c0_i32_430 = arith.constant 0 : i32
    %c0_i32_431 = arith.constant 0 : i32
    %755 = tpu.memref_slice %arg3[%c0_i32_430, %c0_i32_431] : memref<192x128xf32, #tpu.memory_space<any>> -> memref<1x128xf32, #tpu.memory_space<any>>
    %c0_i32_432 = arith.constant 0 : i32
    %c0_i32_433 = arith.constant 0 : i32
    %756 = tpu.memref_slice %arg4[%c0_i32_432, %c0_i32_433] : memref<256x128xf32, #tpu.memory_space<any>> -> memref<1x128xf32, #tpu.memory_space<any>>
    %757 = tpu.memref_slice %arg5[%10] : memref<2x!tpu.dma_semaphore, #tpu.memory_space<semaphore_mem>> -> memref<1x!tpu.dma_semaphore, #tpu.memory_space<semaphore_mem>>
    %758 = tpu.memref_squeeze %757 : memref<1x!tpu.dma_semaphore, #tpu.memory_space<semaphore_mem>> -> memref<!tpu.dma_semaphore, #tpu.memory_space<semaphore_mem>>
    tpu.wait_dma2 semaphore(%758 : memref<!tpu.dma_semaphore, #tpu.memory_space<semaphore_mem>>) src(%755 : memref<1x128xf32, #tpu.memory_space<any>>) dst(%756 : memref<1x128xf32, #tpu.memory_space<any>>)
    %c0_i32_434 = arith.constant 0 : i32
    %c0_i32_435 = arith.constant 0 : i32
    %759 = tpu.memref_slice %arg3[%c0_i32_434, %c0_i32_435] : memref<192x128xf32, #tpu.memory_space<any>> -> memref<1x128xf32, #tpu.memory_space<any>>
    %c0_i32_436 = arith.constant 0 : i32
    %c0_i32_437 = arith.constant 0 : i32
    %760 = tpu.memref_slice %arg4[%c0_i32_436, %c0_i32_437] : memref<256x128xf32, #tpu.memory_space<any>> -> memref<1x128xf32, #tpu.memory_space<any>>
    %761 = tpu.memref_slice %arg5[%10] : memref<2x!tpu.dma_semaphore, #tpu.memory_space<semaphore_mem>> -> memref<1x!tpu.dma_semaphore, #tpu.memory_space<semaphore_mem>>
    %762 = tpu.memref_squeeze %761 : memref<1x!tpu.dma_semaphore, #tpu.memory_space<semaphore_mem>> -> memref<!tpu.dma_semaphore, #tpu.memory_space<semaphore_mem>>
    tpu.wait_dma2 semaphore(%762 : memref<!tpu.dma_semaphore, #tpu.memory_space<semaphore_mem>>) src(%759 : memref<1x128xf32, #tpu.memory_space<any>>) dst(%760 : memref<1x128xf32, #tpu.memory_space<any>>)
    %c0_i32_438 = arith.constant 0 : i32
    %c0_i32_439 = arith.constant 0 : i32
    %763 = tpu.memref_slice %arg3[%c0_i32_438, %c0_i32_439] : memref<192x128xf32, #tpu.memory_space<any>> -> memref<1x128xf32, #tpu.memory_space<any>>
    %c0_i32_440 = arith.constant 0 : i32
    %c0_i32_441 = arith.constant 0 : i32
    %764 = tpu.memref_slice %arg4[%c0_i32_440, %c0_i32_441] : memref<256x128xf32, #tpu.memory_space<any>> -> memref<1x128xf32, #tpu.memory_space<any>>
    %765 = tpu.memref_slice %arg5[%10] : memref<2x!tpu.dma_semaphore, #tpu.memory_space<semaphore_mem>> -> memref<1x!tpu.dma_semaphore, #tpu.memory_space<semaphore_mem>>
    %766 = tpu.memref_squeeze %765 : memref<1x!tpu.dma_semaphore, #tpu.memory_space<semaphore_mem>> -> memref<!tpu.dma_semaphore, #tpu.memory_space<semaphore_mem>>
    tpu.wait_dma2 semaphore(%766 : memref<!tpu.dma_semaphore, #tpu.memory_space<semaphore_mem>>) src(%763 : memref<1x128xf32, #tpu.memory_space<any>>) dst(%764 : memref<1x128xf32, #tpu.memory_space<any>>)
    %c0_i32_442 = arith.constant 0 : i32
    %c0_i32_443 = arith.constant 0 : i32
    %767 = tpu.memref_slice %arg3[%c0_i32_442, %c0_i32_443] : memref<192x128xf32, #tpu.memory_space<any>> -> memref<1x128xf32, #tpu.memory_space<any>>
    %c0_i32_444 = arith.constant 0 : i32
    %c0_i32_445 = arith.constant 0 : i32
    %768 = tpu.memref_slice %arg4[%c0_i32_444, %c0_i32_445] : memref<256x128xf32, #tpu.memory_space<any>> -> memref<1x128xf32, #tpu.memory_space<any>>
    %769 = tpu.memref_slice %arg5[%10] : memref<2x!tpu.dma_semaphore, #tpu.memory_space<semaphore_mem>> -> memref<1x!tpu.dma_semaphore, #tpu.memory_space<semaphore_mem>>
    %770 = tpu.memref_squeeze %769 : memref<1x!tpu.dma_semaphore, #tpu.memory_space<semaphore_mem>> -> memref<!tpu.dma_semaphore, #tpu.memory_space<semaphore_mem>>
    tpu.wait_dma2 semaphore(%770 : memref<!tpu.dma_semaphore, #tpu.memory_space<semaphore_mem>>) src(%767 : memref<1x128xf32, #tpu.memory_space<any>>) dst(%768 : memref<1x128xf32, #tpu.memory_space<any>>)
    %c0_i32_446 = arith.constant 0 : i32
    %c0_i32_447 = arith.constant 0 : i32
    %771 = tpu.memref_slice %arg3[%c0_i32_446, %c0_i32_447] : memref<192x128xf32, #tpu.memory_space<any>> -> memref<1x128xf32, #tpu.memory_space<any>>
    %c0_i32_448 = arith.constant 0 : i32
    %c0_i32_449 = arith.constant 0 : i32
    %772 = tpu.memref_slice %arg4[%c0_i32_448, %c0_i32_449] : memref<256x128xf32, #tpu.memory_space<any>> -> memref<1x128xf32, #tpu.memory_space<any>>
    %773 = tpu.memref_slice %arg5[%10] : memref<2x!tpu.dma_semaphore, #tpu.memory_space<semaphore_mem>> -> memref<1x!tpu.dma_semaphore, #tpu.memory_space<semaphore_mem>>
    %774 = tpu.memref_squeeze %773 : memref<1x!tpu.dma_semaphore, #tpu.memory_space<semaphore_mem>> -> memref<!tpu.dma_semaphore, #tpu.memory_space<semaphore_mem>>
    tpu.wait_dma2 semaphore(%774 : memref<!tpu.dma_semaphore, #tpu.memory_space<semaphore_mem>>) src(%771 : memref<1x128xf32, #tpu.memory_space<any>>) dst(%772 : memref<1x128xf32, #tpu.memory_space<any>>)
    %c0_i32_450 = arith.constant 0 : i32
    %c0_i32_451 = arith.constant 0 : i32
    %775 = tpu.memref_slice %arg3[%c0_i32_450, %c0_i32_451] : memref<192x128xf32, #tpu.memory_space<any>> -> memref<1x128xf32, #tpu.memory_space<any>>
    %c0_i32_452 = arith.constant 0 : i32
    %c0_i32_453 = arith.constant 0 : i32
    %776 = tpu.memref_slice %arg4[%c0_i32_452, %c0_i32_453] : memref<256x128xf32, #tpu.memory_space<any>> -> memref<1x128xf32, #tpu.memory_space<any>>
    %777 = tpu.memref_slice %arg5[%10] : memref<2x!tpu.dma_semaphore, #tpu.memory_space<semaphore_mem>> -> memref<1x!tpu.dma_semaphore, #tpu.memory_space<semaphore_mem>>
    %778 = tpu.memref_squeeze %777 : memref<1x!tpu.dma_semaphore, #tpu.memory_space<semaphore_mem>> -> memref<!tpu.dma_semaphore, #tpu.memory_space<semaphore_mem>>
    tpu.wait_dma2 semaphore(%778 : memref<!tpu.dma_semaphore, #tpu.memory_space<semaphore_mem>>) src(%775 : memref<1x128xf32, #tpu.memory_space<any>>) dst(%776 : memref<1x128xf32, #tpu.memory_space<any>>)
    return
  }
}

</mosaic_0001>

<llo_original>
// kernel: tpu_custom_call.1
$region0: #{tpu_custom_call.1}
  #allocation0 [shape = 'u32[]', space=smem, size = 0x4, offset = 0x4, fixed_abs, tag = 'smem constant byte address 0x4 - core index']
  #allocation1 [shape = 'u32[144,128]{1,0:T(1,128)}', space=vmem, size = 0x12000, scoped, tag = 'internal scratch']
  #allocation2 [shape = 's32[2]{0}', space=sflag, size = 0x8, scoped, tag = 'scratch operand']
  #allocation3 [shape = 's32[1]{0}', space=sflag, size = 0x4, scoped, tag = 'scoped memory for tpu_custom_call.1']
  #allocation4 [shape = 'u8[1024]{0}', space=smem, size = 0x400, scoped, tag = 'prefetched SMEM operand 0']
  #allocation5 [shape = 's32[]', space=sflag, size = 0x4, offset = 0, fixed_abs, tag = 'sflag constant byte address 0x0 - dummy sync flag']
  #allocation6 [shape = 's32[]', space=sflag, size = 0x4, offset = 0, fixed_abs, tag = 'sflag constant byte address 0x0 - dummy sync flag']
  #allocation7 [shape = 'u32[]', space=smem, size = 0x4, offset = 0x44, fixed_abs, tag = 'smem constant byte address 0x44 - assertion arg 0']
  #allocation8 [shape = 'u32[]', space=smem, size = 0x4, offset = 0x48, fixed_abs, tag = 'smem constant byte address 0x48 - assertion arg 1']
  #allocation9 [shape = 's32[]', space=sflag, size = 0x4, offset = 0, fixed_abs, tag = 'sflag constant byte address 0x0 - dummy sync flag']
  #allocation10 [shape = 's32[]', space=sflag, size = 0x4, offset = 0, fixed_abs, tag = 'sflag constant byte address 0x0 - dummy sync flag']
  #allocation11 [shape = 's32[]', space=sflag, size = 0x4, offset = 0, fixed_abs, tag = 'sflag constant byte address 0x0 - dummy sync flag']
  #allocation12 [shape = 's32[]', space=sflag, size = 0x4, offset = 0, fixed_abs, tag = 'sflag constant byte address 0x0 - dummy sync flag']
  #allocation13 [shape = 's32[]', space=sflag, size = 0x4, offset = 0, fixed_abs, tag = 'sflag constant byte address 0x0 - dummy sync flag']
  #allocation14 [shape = 's32[]', space=sflag, size = 0x4, offset = 0, fixed_abs, tag = 'sflag constant byte address 0x0 - dummy sync flag']
  #allocation15 [shape = 's32[]', space=sflag, size = 0x4, offset = 0, fixed_abs, tag = 'sflag constant byte address 0x0 - dummy sync flag']
  #allocation16 [shape = 's32[]', space=sflag, size = 0x4, offset = 0, fixed_abs, tag = 'sflag constant byte address 0x0 - dummy sync flag']
  #allocation17 [shape = 's32[]', space=sflag, size = 0x4, offset = 0, fixed_abs, tag = 'sflag constant byte address 0x0 - dummy sync flag']
  #allocation18 [shape = 's32[]', space=sflag, size = 0x4, offset = 0, fixed_abs, tag = 'sflag constant byte address 0x0 - dummy sync flag']
  #allocation19 [shape = 's32[]', space=sflag, size = 0x4, offset = 0, fixed_abs, tag = 'sflag constant byte address 0x0 - dummy sync flag']
  #allocation20 [shape = 's32[]', space=sflag, size = 0x4, offset = 0, fixed_abs, tag = 'sflag constant byte address 0x0 - dummy sync flag']
  #allocation21 [shape = 's32[]', space=sflag, size = 0x4, offset = 0, fixed_abs, tag = 'sflag constant byte address 0x0 - dummy sync flag']
  #allocation22 [shape = 's32[]', space=sflag, size = 0x4, offset = 0, fixed_abs, tag = 'sflag constant byte address 0x0 - dummy sync flag']
  #allocation23 [shape = 's32[]', space=sflag, size = 0x4, offset = 0, fixed_abs, tag = 'sflag constant byte address 0x0 - dummy sync flag']
  #allocation24 [shape = 's32[]', space=sflag, size = 0x4, offset = 0, fixed_abs, tag = 'sflag constant byte address 0x0 - dummy sync flag']
  #allocation25 [shape = 's32[]', space=sflag, size = 0x4, offset = 0, fixed_abs, tag = 'sflag constant byte address 0x0 - dummy sync flag']
  #allocation26 [shape = 's32[]', space=sflag, size = 0x4, offset = 0, fixed_abs, tag = 'sflag constant byte address 0x0 - dummy sync flag']
  #allocation27 [shape = 's32[]', space=sflag, size = 0x4, offset = 0, fixed_abs, tag = 'sflag constant byte address 0x0 - dummy sync flag']
  #allocation28 [shape = 's32[]', space=sflag, size = 0x4, offset = 0, fixed_abs, tag = 'sflag constant byte address 0x0 - dummy sync flag']
  #allocation29 [shape = 's32[]', space=sflag, size = 0x4, offset = 0, fixed_abs, tag = 'sflag constant byte address 0x0 - dummy sync flag']
  #allocation30 [shape = 's32[]', space=sflag, size = 0x4, offset = 0, fixed_abs, tag = 'sflag constant byte address 0x0 - dummy sync flag']
  #allocation31 [shape = 's32[]', space=sflag, size = 0x4, offset = 0, fixed_abs, tag = 'sflag constant byte address 0x0 - dummy sync flag']
  #allocation32 [shape = 's32[]', space=sflag, size = 0x4, offset = 0, fixed_abs, tag = 'sflag constant byte address 0x0 - dummy sync flag']
  #allocation33 [shape = 's32[]', space=sflag, size = 0x4, offset = 0, fixed_abs, tag = 'sflag constant byte address 0x0 - dummy sync flag']
  #allocation34 [shape = 's32[]', space=sflag, size = 0x4, offset = 0, fixed_abs, tag = 'sflag constant byte address 0x0 - dummy sync flag']
  #allocation35 [shape = 's32[]', space=sflag, size = 0x4, offset = 0, fixed_abs, tag = 'sflag constant byte address 0x0 - dummy sync flag']
  #allocation36 [shape = 's32[]', space=sflag, size = 0x4, offset = 0, fixed_abs, tag = 'sflag constant byte address 0x0 - dummy sync flag']
  #allocation37 [shape = 's32[]', space=sflag, size = 0x4, offset = 0, fixed_abs, tag = 'sflag constant byte address 0x0 - dummy sync flag']
  #allocation38 [shape = 's32[]', space=sflag, size = 0x4, offset = 0, fixed_abs, tag = 'sflag constant byte address 0x0 - dummy sync flag']
  #allocation39 [shape = 's32[]', space=sflag, size = 0x4, offset = 0, fixed_abs, tag = 'sflag constant byte address 0x0 - dummy sync flag']
  #allocation40 [shape = 's32[]', space=sflag, size = 0x4, offset = 0, fixed_abs, tag = 'sflag constant byte address 0x0 - dummy sync flag']
  #allocation41 [shape = 's32[]', space=sflag, size = 0x4, offset = 0, fixed_abs, tag = 'sflag constant byte address 0x0 - dummy sync flag']
  #allocation42 [shape = 's32[]', space=sflag, size = 0x4, offset = 0, fixed_abs, tag = 'sflag constant byte address 0x0 - dummy sync flag']
  #allocation43 [shape = 's32[]', space=sflag, size = 0x4, offset = 0, fixed_abs, tag = 'sflag constant byte address 0x0 - dummy sync flag']
  #allocation44 [shape = 's32[]', space=sflag, size = 0x4, offset = 0, fixed_abs, tag = 'sflag constant byte address 0x0 - dummy sync flag']
  #allocation45 [shape = 's32[]', space=sflag, size = 0x4, offset = 0, fixed_abs, tag = 'sflag constant byte address 0x0 - dummy sync flag']
  #allocation46 [shape = 's32[]', space=sflag, size = 0x4, offset = 0, fixed_abs, tag = 'sflag constant byte address 0x0 - dummy sync flag']
  #allocation47 [shape = 's32[]', space=sflag, size = 0x4, offset = 0, fixed_abs, tag = 'sflag constant byte address 0x0 - dummy sync flag']
  #allocation48 [shape = 's32[]', space=sflag, size = 0x4, offset = 0, fixed_abs, tag = 'sflag constant byte address 0x0 - dummy sync flag']
  #allocation49 [shape = 's32[]', space=sflag, size = 0x4, offset = 0, fixed_abs, tag = 'sflag constant byte address 0x0 - dummy sync flag']
  #allocation50 [shape = 's32[]', space=sflag, size = 0x4, offset = 0, fixed_abs, tag = 'sflag constant byte address 0x0 - dummy sync flag']
  #allocation51 [shape = 's32[]', space=sflag, size = 0x4, offset = 0, fixed_abs, tag = 'sflag constant byte address 0x0 - dummy sync flag']
  #allocation52 [shape = 's32[]', space=sflag, size = 0x4, offset = 0, fixed_abs, tag = 'sflag constant byte address 0x0 - dummy sync flag']
  #allocation53 [shape = 's32[]', space=sflag, size = 0x4, offset = 0, fixed_abs, tag = 'sflag constant byte address 0x0 - dummy sync flag']
  #allocation54 [shape = 's32[]', space=sflag, size = 0x4, offset = 0, fixed_abs, tag = 'sflag constant byte address 0x0 - dummy sync flag']
  #allocation55 [shape = 's32[]', space=sflag, size = 0x4, offset = 0, fixed_abs, tag = 'sflag constant byte address 0x0 - dummy sync flag']
  #allocation56 [shape = 's32[]', space=sflag, size = 0x4, offset = 0, fixed_abs, tag = 'sflag constant byte address 0x0 - dummy sync flag']
  #allocation57 [shape = 's32[]', space=sflag, size = 0x4, offset = 0, fixed_abs, tag = 'sflag constant byte address 0x0 - dummy sync flag']
  #allocation58 [shape = 's32[]', space=sflag, size = 0x4, offset = 0, fixed_abs, tag = 'sflag constant byte address 0x0 - dummy sync flag']
  #allocation59 [shape = 's32[]', space=sflag, size = 0x4, offset = 0, fixed_abs, tag = 'sflag constant byte address 0x0 - dummy sync flag']
  #allocation60 [shape = 's32[]', space=sflag, size = 0x4, offset = 0, fixed_abs, tag = 'sflag constant byte address 0x0 - dummy sync flag']
  #allocation61 [shape = 's32[]', space=sflag, size = 0x4, offset = 0, fixed_abs, tag = 'sflag constant byte address 0x0 - dummy sync flag']
  #allocation62 [shape = 's32[]', space=sflag, size = 0x4, offset = 0, fixed_abs, tag = 'sflag constant byte address 0x0 - dummy sync flag']
  #allocation63 [shape = 's32[]', space=sflag, size = 0x4, offset = 0, fixed_abs, tag = 'sflag constant byte address 0x0 - dummy sync flag']
  #allocation64 [shape = 's32[]', space=sflag, size = 0x4, offset = 0, fixed_abs, tag = 'sflag constant byte address 0x0 - dummy sync flag']
  #allocation65 [shape = 's32[]', space=sflag, size = 0x4, offset = 0, fixed_abs, tag = 'sflag constant byte address 0x0 - dummy sync flag']
  #allocation66 [shape = 's32[]', space=sflag, size = 0x4, offset = 0, fixed_abs, tag = 'sflag constant byte address 0x0 - dummy sync flag']
  #allocation67 [shape = 's32[]', space=sflag, size = 0x4, offset = 0, fixed_abs, tag = 'sflag constant byte address 0x0 - dummy sync flag']
  #allocation68 [shape = 's32[]', space=sflag, size = 0x4, offset = 0, fixed_abs, tag = 'sflag constant byte address 0x0 - dummy sync flag']
  #allocation69 [shape = 's32[]', space=sflag, size = 0x4, offset = 0, fixed_abs, tag = 'sflag constant byte address 0x0 - dummy sync flag']
  #allocation70 [shape = 's32[]', space=sflag, size = 0x4, offset = 0, fixed_abs, tag = 'sflag constant byte address 0x0 - dummy sync flag']
  #allocation71 [shape = 's32[]', space=sflag, size = 0x4, offset = 0, fixed_abs, tag = 'sflag constant byte address 0x0 - dummy sync flag']
  #allocation72 [shape = 's32[]', space=sflag, size = 0x4, offset = 0, fixed_abs, tag = 'sflag constant byte address 0x0 - dummy sync flag']
  #allocation73 [shape = 's32[]', space=sflag, size = 0x4, offset = 0, fixed_abs, tag = 'sflag constant byte address 0x0 - dummy sync flag']
  #allocation74 [shape = 's32[]', space=sflag, size = 0x4, offset = 0, fixed_abs, tag = 'sflag constant byte address 0x0 - dummy sync flag']
  #allocation75 [shape = 's32[]', space=sflag, size = 0x4, offset = 0, fixed_abs, tag = 'sflag constant byte address 0x0 - dummy sync flag']
  #allocation76 [shape = 's32[]', space=sflag, size = 0x4, offset = 0, fixed_abs, tag = 'sflag constant byte address 0x0 - dummy sync flag']
  #allocation77 [shape = 's32[]', space=sflag, size = 0x4, offset = 0, fixed_abs, tag = 'sflag constant byte address 0x0 - dummy sync flag']
  #allocation78 [shape = 's32[]', space=sflag, size = 0x4, offset = 0, fixed_abs, tag = 'sflag constant byte address 0x0 - dummy sync flag']
  #allocation79 [shape = 's32[]', space=sflag, size = 0x4, offset = 0, fixed_abs, tag = 'sflag constant byte address 0x0 - dummy sync flag']
  #allocation80 [shape = 's32[]', space=sflag, size = 0x4, offset = 0, fixed_abs, tag = 'sflag constant byte address 0x0 - dummy sync flag']
  #allocation81 [shape = 's32[]', space=sflag, size = 0x4, offset = 0, fixed_abs, tag = 'sflag constant byte address 0x0 - dummy sync flag']
  #allocation82 [shape = 's32[]', space=sflag, size = 0x4, offset = 0, fixed_abs, tag = 'sflag constant byte address 0x0 - dummy sync flag']
  #allocation83 [shape = 's32[]', space=sflag, size = 0x4, offset = 0, fixed_abs, tag = 'sflag constant byte address 0x0 - dummy sync flag']
  #allocation84 [shape = 's32[]', space=sflag, size = 0x4, offset = 0, fixed_abs, tag = 'sflag constant byte address 0x0 - dummy sync flag']
  #allocation85 [shape = 's32[]', space=sflag, size = 0x4, offset = 0, fixed_abs, tag = 'sflag constant byte address 0x0 - dummy sync flag']
  #allocation86 [shape = 's32[]', space=sflag, size = 0x4, offset = 0, fixed_abs, tag = 'sflag constant byte address 0x0 - dummy sync flag']
  #allocation87 [shape = 's32[]', space=sflag, size = 0x4, offset = 0, fixed_abs, tag = 'sflag constant byte address 0x0 - dummy sync flag']
  #allocation88 [shape = 's32[]', space=sflag, size = 0x4, offset = 0, fixed_abs, tag = 'sflag constant byte address 0x0 - dummy sync flag']
  #allocation89 [shape = 's32[]', space=sflag, size = 0x4, offset = 0, fixed_abs, tag = 'sflag constant byte address 0x0 - dummy sync flag']
  #allocation90 [shape = 's32[]', space=sflag, size = 0x4, offset = 0, fixed_abs, tag = 'sflag constant byte address 0x0 - dummy sync flag']
  #allocation91 [shape = 's32[]', space=sflag, size = 0x4, offset = 0, fixed_abs, tag = 'sflag constant byte address 0x0 - dummy sync flag']
  #allocation92 [shape = 's32[]', space=sflag, size = 0x4, offset = 0, fixed_abs, tag = 'sflag constant byte address 0x0 - dummy sync flag']
  #allocation93 [shape = 's32[]', space=sflag, size = 0x4, offset = 0, fixed_abs, tag = 'sflag constant byte address 0x0 - dummy sync flag']
  #allocation94 [shape = 's32[]', space=sflag, size = 0x4, offset = 0, fixed_abs, tag = 'sflag constant byte address 0x0 - dummy sync flag']
  #allocation95 [shape = 's32[]', space=sflag, size = 0x4, offset = 0, fixed_abs, tag = 'sflag constant byte address 0x0 - dummy sync flag']
  #allocation96 [shape = 's32[]', space=sflag, size = 0x4, offset = 0, fixed_abs, tag = 'sflag constant byte address 0x0 - dummy sync flag']
  #allocation97 [shape = 's32[]', space=sflag, size = 0x4, offset = 0, fixed_abs, tag = 'sflag constant byte address 0x0 - dummy sync flag']
  #allocation98 [shape = 's32[]', space=sflag, size = 0x4, offset = 0, fixed_abs, tag = 'sflag constant byte address 0x0 - dummy sync flag']
  #allocation99 [shape = 's32[]', space=sflag, size = 0x4, offset = 0, fixed_abs, tag = 'sflag constant byte address 0x0 - dummy sync flag']
  #allocation100 [shape = 's32[]', space=sflag, size = 0x4, offset = 0, fixed_abs, tag = 'sflag constant byte address 0x0 - dummy sync flag']
  #allocation101 [shape = 's32[]', space=sflag, size = 0x4, offset = 0, fixed_abs, tag = 'sflag constant byte address 0x0 - dummy sync flag']
  #allocation102 [shape = 's32[]', space=sflag, size = 0x4, offset = 0, fixed_abs, tag = 'sflag constant byte address 0x0 - dummy sync flag']
  #allocation103 [shape = 's32[]', space=sflag, size = 0x4, offset = 0, fixed_abs, tag = 'sflag constant byte address 0x0 - dummy sync flag']
  #allocation104 [shape = 's32[]', space=sflag, size = 0x4, offset = 0, fixed_abs, tag = 'sflag constant byte address 0x0 - dummy sync flag']
  #allocation105 [shape = 's32[]', space=sflag, size = 0x4, offset = 0, fixed_abs, tag = 'sflag constant byte address 0x0 - dummy sync flag']
  #allocation106 [shape = 's32[]', space=sflag, size = 0x4, offset = 0, fixed_abs, tag = 'sflag constant byte address 0x0 - dummy sync flag']
  #allocation107 [shape = 's32[]', space=sflag, size = 0x4, offset = 0, fixed_abs, tag = 'sflag constant byte address 0x0 - dummy sync flag']
  #allocation108 [shape = 's32[]', space=sflag, size = 0x4, offset = 0, fixed_abs, tag = 'sflag constant byte address 0x0 - dummy sync flag']
  #allocation109 [shape = 's32[]', space=sflag, size = 0x4, offset = 0, fixed_abs, tag = 'sflag constant byte address 0x0 - dummy sync flag']
  #allocation110 [shape = 's32[]', space=sflag, size = 0x4, offset = 0, fixed_abs, tag = 'sflag constant byte address 0x0 - dummy sync flag']
  #allocation111 [shape = 's32[]', space=sflag, size = 0x4, offset = 0, fixed_abs, tag = 'sflag constant byte address 0x0 - dummy sync flag']
  #allocation112 [shape = 's32[]', space=sflag, size = 0x4, offset = 0, fixed_abs, tag = 'sflag constant byte address 0x0 - dummy sync flag']
  #allocation113 [shape = 's32[]', space=sflag, size = 0x4, offset = 0, fixed_abs, tag = 'sflag constant byte address 0x0 - dummy sync flag']
  #allocation114 [shape = 's32[]', space=sflag, size = 0x4, offset = 0, fixed_abs, tag = 'sflag constant byte address 0x0 - dummy sync flag']
  #allocation115 [shape = 's32[]', space=sflag, size = 0x4, offset = 0, fixed_abs, tag = 'sflag constant byte address 0x0 - dummy sync flag']
  #allocation116 [shape = 's32[]', space=sflag, size = 0x4, offset = 0, fixed_abs, tag = 'sflag constant byte address 0x0 - dummy sync flag']
  #allocation117 [shape = 's32[]', space=sflag, size = 0x4, offset = 0, fixed_abs, tag = 'sflag constant byte address 0x0 - dummy sync flag']
  #allocation118 [shape = 's32[]', space=sflag, size = 0x4, offset = 0, fixed_abs, tag = 'sflag constant byte address 0x0 - dummy sync flag']
  #allocation119 [shape = 's32[]', space=sflag, size = 0x4, offset = 0, fixed_abs, tag = 'sflag constant byte address 0x0 - dummy sync flag']
  #allocation120 [shape = 's32[]', space=sflag, size = 0x4, offset = 0, fixed_abs, tag = 'sflag constant byte address 0x0 - dummy sync flag']
  #allocation121 [shape = 's32[]', space=sflag, size = 0x4, offset = 0, fixed_abs, tag = 'sflag constant byte address 0x0 - dummy sync flag']
  #allocation122 [shape = 's32[]', space=sflag, size = 0x4, offset = 0, fixed_abs, tag = 'sflag constant byte address 0x0 - dummy sync flag']
  #allocation123 [shape = 's32[]', space=sflag, size = 0x4, offset = 0, fixed_abs, tag = 'sflag constant byte address 0x0 - dummy sync flag']
  #allocation124 [shape = 's32[]', space=sflag, size = 0x4, offset = 0, fixed_abs, tag = 'sflag constant byte address 0x0 - dummy sync flag']
  #allocation125 [shape = 's32[]', space=sflag, size = 0x4, offset = 0, fixed_abs, tag = 'sflag constant byte address 0x0 - dummy sync flag']
  #allocation126 [shape = 's32[]', space=sflag, size = 0x4, offset = 0, fixed_abs, tag = 'sflag constant byte address 0x0 - dummy sync flag']
  #allocation127 [shape = 's32[]', space=sflag, size = 0x4, offset = 0, fixed_abs, tag = 'sflag constant byte address 0x0 - dummy sync flag']
  #allocation128 [shape = 's32[]', space=sflag, size = 0x4, offset = 0, fixed_abs, tag = 'sflag constant byte address 0x0 - dummy sync flag']
  #allocation129 [shape = 's32[]', space=sflag, size = 0x4, offset = 0, fixed_abs, tag = 'sflag constant byte address 0x0 - dummy sync flag']
  #allocation130 [shape = 's32[]', space=sflag, size = 0x4, offset = 0, fixed_abs, tag = 'sflag constant byte address 0x0 - dummy sync flag']
  #allocation131 [shape = 's32[]', space=sflag, size = 0x4, offset = 0, fixed_abs, tag = 'sflag constant byte address 0x0 - dummy sync flag']
  #allocation132 [shape = 's32[]', space=sflag, size = 0x4, offset = 0, fixed_abs, tag = 'sflag constant byte address 0x0 - dummy sync flag']
  #allocation133 [shape = 's32[]', space=sflag, size = 0x4, offset = 0, fixed_abs, tag = 'sflag constant byte address 0x0 - dummy sync flag']
  #allocation134 [shape = 's32[]', space=sflag, size = 0x4, offset = 0, fixed_abs, tag = 'sflag constant byte address 0x0 - dummy sync flag']
  %s0 = inlined_call_operand.vmem [shape: s32[192], index: 0, kind: input, shape index: {}]
  %s1 = inlined_call_operand.hbm [shape: f32[256,128], index: 1, kind: input, shape index: {}, may-alias: {1,3}]
  %s2 = inlined_call_operand.vmem [shape: f32[192,128], index: 2, kind: input, shape index: {}]
  %s3 = inlined_call_operand.hbm [shape: f32[256,128], index: 3, kind: output, shape index: {}, may-alias: {1,3}]
  %s4 = sld [smem:[#allocation0]]
  $region265: #{tpu_custom_call.1} parent=0
    _
  %s6 = ssub.s32 1, %s4
  %s7 = scalar_select 0, %s6, %s4
  %s8 = sshll.u32 %s0, 4
  %s9 = int_to_ptr.vmem [resolvable:$true] %s8
  %11 = dma.vmem_to_smem %s9, 32, [#allocation4], [#allocation3]
  %12 = dma.done [#allocation3], 32
  %13 = sfence
  loop: start=0, step=1, limit=3
  $region2: #{tpu_custom_call.1} parent=0 // loop_pre_header
    _
  $region3: #{tpu_custom_call.1} parent=0 // loop_header
    %s15 = sphi 0, %s19
    %p16 = scmp.ge.s32.totalorder %s15, 3
  $region4: #{tpu_custom_call.1} parent=0 // loop_header_branch
    %18 = sbr.rel (%p16) target = $region8
  $region5: #{tpu_custom_call.1} parent=0 // loop_body
    %s20 = sadd.s32 %s15, 1
    %s21 = smul.u32 %s15, 64
    %p22 = scmp.lt.s32.totalorder %s15, 0
    %s23 = ssub.s32 0, %s15
    %s24 = scalar_select %p22, %s23, %s15
    %s25 = sand.u32 %s24, 1
    %s26 = ssub.s32 0, %s25
    %s27 = scalar_select %p22, %s26, %s25
    %p28 = scmp.ne.s32.totalorder %s27, 0
    %p29 = scmp.lt.s32.totalorder %s27, 0
    %p30 = pnand %p29, %p28
    %p31 = pneg %p30
    %s32 = sadd.s32 %s27, 2
    %s33 = scalar_select %p31, %s32, %s27
    %s34 = sld [smem:[#allocation4 + %s21]]
    %s35 = scalar_lea.vmem %s2, %s21
    %s36 = smul.addr %s34, 16
    %s37 = scalar_lea.hbm %s3, %s36
    %s38 = scalar_lea.sflag [#allocation2], %s33
    // Predicated region
    $region9: #{tpu_custom_call.1} parent=5 // pred_check
      _
    $region10: #{tpu_custom_call.1} parent=5 // pred_check_branch
      %40 = sbr.rel target = $region12
    $region11: #{tpu_custom_call.1} parent=5 // pred_region
      %41 = sst [smem:[#allocation7]] [#allocation6]
      %42 = sst [smem:[#allocation8]] [#allocation5]
    $region12: #{tpu_custom_call.1} parent=5 // pred_fallthru
      _
    %44 = shalt.err (0)
    %s46 = sshll.u32 %s35, 4
    %s47 = int_to_ptr.vmem [resolvable:$true] %s46
    %49 = dma.vmem_to_hbm [thread:$0]  %s47, 16, %s37, %s38
    %s50 = sadd.s32 %s21, 1
    %s51 = sld [smem:[#allocation4 + %s50]]
    %s52 = scalar_lea.vmem %s2, %s50
    %s53 = smul.addr %s51, 16
    %s54 = scalar_lea.hbm %s3, %s53
    // Predicated region
    $region13: #{tpu_custom_call.1} parent=5 // pred_check
      _
    $region14: #{tpu_custom_call.1} parent=5 // pred_check_branch
      %56 = sbr.rel target = $region16
    $region15: #{tpu_custom_call.1} parent=5 // pred_region
      %57 = sst [smem:[#allocation7]] [#allocation10]
      %58 = sst [smem:[#allocation8]] [#allocation9]
    $region16: #{tpu_custom_call.1} parent=5 // pred_fallthru
      _
    %60 = shalt.err (0)
    %s62 = sshll.u32 %s52, 4
    %s63 = int_to_ptr.vmem [resolvable:$true] %s62
    %65 = dma.vmem_to_hbm [thread:$0]  %s63, 16, %s54, %s38
    %s66 = sadd.s32 %s21, 2
    %s67 = sld [smem:[#allocation4 + %s66]]
    %s68 = scalar_lea.vmem %s2, %s66
    %s69 = smul.addr %s67, 16
    %s70 = scalar_lea.hbm %s3, %s69
    // Predicated region
    $region17: #{tpu_custom_call.1} parent=5 // pred_check
      _
    $region18: #{tpu_custom_call.1} parent=5 // pred_check_branch
      %72 = sbr.rel target = $region20
    $region19: #{tpu_custom_call.1} parent=5 // pred_region
      %73 = sst [smem:[#allocation7]] [#allocation12]
      %74 = sst [smem:[#allocation8]] [#allocation11]
    $region20: #{tpu_custom_call.1} parent=5 // pred_fallthru
      _
    %76 = shalt.err (0)
    %s78 = sshll.u32 %s68, 4
    %s79 = int_to_ptr.vmem [resolvable:$true] %s78
    %81 = dma.vmem_to_hbm [thread:$0]  %s79, 16, %s70, %s38
    %s82 = sadd.s32 %s21, 3
    %s83 = sld [smem:[#allocation4 + %s82]]
    %s84 = scalar_lea.vmem %s2, %s82
    %s85 = smul.addr %s83, 16
    %s86 = scalar_lea.hbm %s3, %s85
    // Predicated region
    $region21: #{tpu_custom_call.1} parent=5 // pred_check
      _
    $region22: #{tpu_custom_call.1} parent=5 // pred_check_branch
      %88 = sbr.rel target = $region24
    $region23: #{tpu_custom_call.1} parent=5 // pred_region
      %89 = sst [smem:[#allocation7]] [#allocation14]
      %90 = sst [smem:[#allocation8]] [#allocation13]
    $region24: #{tpu_custom_call.1} parent=5 // pred_fallthru
      _
    %92 = shalt.err (0)
    %s94 = sshll.u32 %s84, 4
    %s95 = int_to_ptr.vmem [resolvable:$true] %s94
    %97 = dma.vmem_to_hbm [thread:$0]  %s95, 16, %s86, %s38
    %s98 = sadd.s32 %s21, 4
    %s99 = sld [smem:[#allocation4 + %s98]]
    %s100 = scalar_lea.vmem %s2, %s98
    %s101 = smul.addr %s99, 16
    %s102 = scalar_lea.hbm %s3, %s101
    // Predicated region
    $region25: #{tpu_custom_call.1} parent=5 // pred_check
      _
    $region26: #{tpu_custom_call.1} parent=5 // pred_check_branch
      %104 = sbr.rel target = $region28
    $region27: #{tpu_custom_call.1} parent=5 // pred_region
      %105 = sst [smem:[#allocation7]] [#allocation16]
      %106 = sst [smem:[#allocation8]] [#allocation15]
    $region28: #{tpu_custom_call.1} parent=5 // pred_fallthru
      _
    %108 = shalt.err (0)
    %s110 = sshll.u32 %s100, 4
    %s111 = int_to_ptr.vmem [resolvable:$true] %s110
    %113 = dma.vmem_to_hbm [thread:$0]  %s111, 16, %s102, %s38
    %s114 = sadd.s32 %s21, 5
    %s115 = sld [smem:[#allocation4 + %s114]]
    %s116 = scalar_lea.vmem %s2, %s114
    %s117 = smul.addr %s115, 16
    %s118 = scalar_lea.hbm %s3, %s117
    // Predicated region
    $region29: #{tpu_custom_call.1} parent=5 // pred_check
      _
    $region30: #{tpu_custom_call.1} parent=5 // pred_check_branch
      %120 = sbr.rel target = $region32
    $region31: #{tpu_custom_call.1} parent=5 // pred_region
      %121 = sst [smem:[#allocation7]] [#allocation18]
      %122 = sst [smem:[#allocation8]] [#allocation17]
    $region32: #{tpu_custom_call.1} parent=5 // pred_fallthru
      _
    %124 = shalt.err (0)
    %s126 = sshll.u32 %s116, 4
    %s127 = int_to_ptr.vmem [resolvable:$true] %s126
    %129 = dma.vmem_to_hbm [thread:$0]  %s127, 16, %s118, %s38
    %s130 = sadd.s32 %s21, 6
    %s131 = sld [smem:[#allocation4 + %s130]]
    %s132 = scalar_lea.vmem %s2, %s130
    %s133 = smul.addr %s131, 16
    %s134 = scalar_lea.hbm %s3, %s133
    // Predicated region
    $region33: #{tpu_custom_call.1} parent=5 // pred_check
      _
    $region34: #{tpu_custom_call.1} parent=5 // pred_check_branch
      %136 = sbr.rel target = $region36
    $region35: #{tpu_custom_call.1} parent=5 // pred_region
      %137 = sst [smem:[#allocation7]] [#allocation20]
      %138 = sst [smem:[#allocation8]] [#allocation19]
    $region36: #{tpu_custom_call.1} parent=5 // pred_fallthru
      _
    %140 = shalt.err (0)
    %s142 = sshll.u32 %s132, 4
    %s143 = int_to_ptr.vmem [resolvable:$true] %s142
    %145 = dma.vmem_to_hbm [thread:$0]  %s143, 16, %s134, %s38
    %s146 = sadd.s32 %s21, 7
    %s147 = sld [smem:[#allocation4 + %s146]]
    %s148 = scalar_lea.vmem %s2, %s146
    %s149 = smul.addr %s147, 16
    %s150 = scalar_lea.hbm %s3, %s149
    // Predicated region
    $region37: #{tpu_custom_call.1} parent=5 // pred_check
      _
    $region38: #{tpu_custom_call.1} parent=5 // pred_check_branch
      %152 = sbr.rel target = $region40
    $region39: #{tpu_custom_call.1} parent=5 // pred_region
      %153 = sst [smem:[#allocation7]] [#allocation22]
      %154 = sst [smem:[#allocation8]] [#allocation21]
    $region40: #{tpu_custom_call.1} parent=5 // pred_fallthru
      _
    %156 = shalt.err (0)
    %s158 = sshll.u32 %s148, 4
    %s159 = int_to_ptr.vmem [resolvable:$true] %s158
    %161 = dma.vmem_to_hbm [thread:$0]  %s159, 16, %s150, %s38
    %s162 = sadd.s32 %s21, 8
    %s163 = sld [smem:[#allocation4 + %s162]]
    %s164 = scalar_lea.vmem %s2, %s162
    %s165 = smul.addr %s163, 16
    %s166 = scalar_lea.hbm %s3, %s165
    // Predicated region
    $region41: #{tpu_custom_call.1} parent=5 // pred_check
      _
    $region42: #{tpu_custom_call.1} parent=5 // pred_check_branch
      %168 = sbr.rel target = $region44
    $region43: #{tpu_custom_call.1} parent=5 // pred_region
      %169 = sst [smem:[#allocation7]] [#allocation24]
      %170 = sst [smem:[#allocation8]] [#allocation23]
    $region44: #{tpu_custom_call.1} parent=5 // pred_fallthru
      _
    %172 = shalt.err (0)
    %s174 = sshll.u32 %s164, 4
    %s175 = int_to_ptr.vmem [resolvable:$true] %s174
    %177 = dma.vmem_to_hbm [thread:$0]  %s175, 16, %s166, %s38
    %s178 = sadd.s32 %s21, 9
    %s179 = sld [smem:[#allocation4 + %s178]]
    %s180 = scalar_lea.vmem %s2, %s178
    %s181 = smul.addr %s179, 16
    %s182 = scalar_lea.hbm %s3, %s181
    // Predicated region
    $region45: #{tpu_custom_call.1} parent=5 // pred_check
      _
    $region46: #{tpu_custom_call.1} parent=5 // pred_check_branch
      %184 = sbr.rel target = $region48
    $region47: #{tpu_custom_call.1} parent=5 // pred_region
      %185 = sst [smem:[#allocation7]] [#allocation26]
      %186 = sst [smem:[#allocation8]] [#allocation25]
    $region48: #{tpu_custom_call.1} parent=5 // pred_fallthru
      _
    %188 = shalt.err (0)
    %s190 = sshll.u32 %s180, 4
    %s191 = int_to_ptr.vmem [resolvable:$true] %s190
    %193 = dma.vmem_to_hbm [thread:$0]  %s191, 16, %s182, %s38
    %s194 = sadd.s32 %s21, 10
    %s195 = sld [smem:[#allocation4 + %s194]]
    %s196 = scalar_lea.vmem %s2, %s194
    %s197 = smul.addr %s195, 16
    %s198 = scalar_lea.hbm %s3, %s197
    // Predicated region
    $region49: #{tpu_custom_call.1} parent=5 // pred_check
      _
    $region50: #{tpu_custom_call.1} parent=5 // pred_check_branch
      %200 = sbr.rel target = $region52
    $region51: #{tpu_custom_call.1} parent=5 // pred_region
      %201 = sst [smem:[#allocation7]] [#allocation28]
      %202 = sst [smem:[#allocation8]] [#allocation27]
    $region52: #{tpu_custom_call.1} parent=5 // pred_fallthru
      _
    %204 = shalt.err (0)
    %s206 = sshll.u32 %s196, 4
    %s207 = int_to_ptr.vmem [resolvable:$true] %s206
    %209 = dma.vmem_to_hbm [thread:$0]  %s207, 16, %s198, %s38
    %s210 = sadd.s32 %s21, 11
    %s211 = sld [smem:[#allocation4 + %s210]]
    %s212 = scalar_lea.vmem %s2, %s210
    %s213 = smul.addr %s211, 16
    %s214 = scalar_lea.hbm %s3, %s213
    // Predicated region
    $region53: #{tpu_custom_call.1} parent=5 // pred_check
      _
    $region54: #{tpu_custom_call.1} parent=5 // pred_check_branch
      %216 = sbr.rel target = $region56
    $region55: #{tpu_custom_call.1} parent=5 // pred_region
      %217 = sst [smem:[#allocation7]] [#allocation30]
      %218 = sst [smem:[#allocation8]] [#allocation29]
    $region56: #{tpu_custom_call.1} parent=5 // pred_fallthru
      _
    %220 = shalt.err (0)
    %s222 = sshll.u32 %s212, 4
    %s223 = int_to_ptr.vmem [resolvable:$true] %s222
    %225 = dma.vmem_to_hbm [thread:$0]  %s223, 16, %s214, %s38
    %s226 = sadd.s32 %s21, 12
    %s227 = sld [smem:[#allocation4 + %s226]]
    %s228 = scalar_lea.vmem %s2, %s226
    %s229 = smul.addr %s227, 16
    %s230 = scalar_lea.hbm %s3, %s229
    // Predicated region
    $region57: #{tpu_custom_call.1} parent=5 // pred_check
      _
    $region58: #{tpu_custom_call.1} parent=5 // pred_check_branch
      %232 = sbr.rel target = $region60
    $region59: #{tpu_custom_call.1} parent=5 // pred_region
      %233 = sst [smem:[#allocation7]] [#allocation32]
      %234 = sst [smem:[#allocation8]] [#allocation31]
    $region60: #{tpu_custom_call.1} parent=5 // pred_fallthru
      _
    %236 = shalt.err (0)
    %s238 = sshll.u32 %s228, 4
    %s239 = int_to_ptr.vmem [resolvable:$true] %s238
    %241 = dma.vmem_to_hbm [thread:$0]  %s239, 16, %s230, %s38
    %s242 = sadd.s32 %s21, 13
    %s243 = sld [smem:[#allocation4 + %s242]]
    %s244 = scalar_lea.vmem %s2, %s242
    %s245 = smul.addr %s243, 16
    %s246 = scalar_lea.hbm %s3, %s245
    // Predicated region
    $region61: #{tpu_custom_call.1} parent=5 // pred_check
      _
    $region62: #{tpu_custom_call.1} parent=5 // pred_check_branch
      %248 = sbr.rel target = $region64
    $region63: #{tpu_custom_call.1} parent=5 // pred_region
      %249 = sst [smem:[#allocation7]] [#allocation34]
      %250 = sst [smem:[#allocation8]] [#allocation33]
    $region64: #{tpu_custom_call.1} parent=5 // pred_fallthru
      _
    %252 = shalt.err (0)
    %s254 = sshll.u32 %s244, 4
    %s255 = int_to_ptr.vmem [resolvable:$true] %s254
    %257 = dma.vmem_to_hbm [thread:$0]  %s255, 16, %s246, %s38
    %s258 = sadd.s32 %s21, 14
    %s259 = sld [smem:[#allocation4 + %s258]]
    %s260 = scalar_lea.vmem %s2, %s258
    %s261 = smul.addr %s259, 16
    %s262 = scalar_lea.hbm %s3, %s261
    // Predicated region
    $region65: #{tpu_custom_call.1} parent=5 // pred_check
      _
    $region66: #{tpu_custom_call.1} parent=5 // pred_check_branch
      %264 = sbr.rel target = $region68
    $region67: #{tpu_custom_call.1} parent=5 // pred_region
      %265 = sst [smem:[#allocation7]] [#allocation36]
      %266 = sst [smem:[#allocation8]] [#allocation35]
    $region68: #{tpu_custom_call.1} parent=5 // pred_fallthru
      _
    %268 = shalt.err (0)
    %s270 = sshll.u32 %s260, 4
    %s271 = int_to_ptr.vmem [resolvable:$true] %s270
    %273 = dma.vmem_to_hbm [thread:$0]  %s271, 16, %s262, %s38
    %s274 = sadd.s32 %s21, 15
    %s275 = sld [smem:[#allocation4 + %s274]]
    %s276 = scalar_lea.vmem %s2, %s274
    %s277 = smul.addr %s275, 16
    %s278 = scalar_lea.hbm %s3, %s277
    // Predicated region
    $region69: #{tpu_custom_call.1} parent=5 // pred_check
      _
    $region70: #{tpu_custom_call.1} parent=5 // pred_check_branch
      %280 = sbr.rel target = $region72
    $region71: #{tpu_custom_call.1} parent=5 // pred_region
      %281 = sst [smem:[#allocation7]] [#allocation38]
      %282 = sst [smem:[#allocation8]] [#allocation37]
    $region72: #{tpu_custom_call.1} parent=5 // pred_fallthru
      _
    %284 = shalt.err (0)
    %s286 = sshll.u32 %s276, 4
    %s287 = int_to_ptr.vmem [resolvable:$true] %s286
    %289 = dma.vmem_to_hbm [thread:$0]  %s287, 16, %s278, %s38
    %s290 = sadd.s32 %s21, 16
    %s291 = sld [smem:[#allocation4 + %s290]]
    %s292 = scalar_lea.vmem %s2, %s290
    %s293 = smul.addr %s291, 16
    %s294 = scalar_lea.hbm %s3, %s293
    // Predicated region
    $region73: #{tpu_custom_call.1} parent=5 // pred_check
      _
    $region74: #{tpu_custom_call.1} parent=5 // pred_check_branch
      %296 = sbr.rel target = $region76
    $region75: #{tpu_custom_call.1} parent=5 // pred_region
      %297 = sst [smem:[#allocation7]] [#allocation40]
      %298 = sst [smem:[#allocation8]] [#allocation39]
    $region76: #{tpu_custom_call.1} parent=5 // pred_fallthru
      _
    %300 = shalt.err (0)
    %s302 = sshll.u32 %s292, 4
    %s303 = int_to_ptr.vmem [resolvable:$true] %s302
    %305 = dma.vmem_to_hbm [thread:$0]  %s303, 16, %s294, %s38
    %s306 = sadd.s32 %s21, 17
    %s307 = sld [smem:[#allocation4 + %s306]]
    %s308 = scalar_lea.vmem %s2, %s306
    %s309 = smul.addr %s307, 16
    %s310 = scalar_lea.hbm %s3, %s309
    // Predicated region
    $region77: #{tpu_custom_call.1} parent=5 // pred_check
      _
    $region78: #{tpu_custom_call.1} parent=5 // pred_check_branch
      %312 = sbr.rel target = $region80
    $region79: #{tpu_custom_call.1} parent=5 // pred_region
      %313 = sst [smem:[#allocation7]] [#allocation42]
      %314 = sst [smem:[#allocation8]] [#allocation41]
    $region80: #{tpu_custom_call.1} parent=5 // pred_fallthru
      _
    %316 = shalt.err (0)
    %s318 = sshll.u32 %s308, 4
    %s319 = int_to_ptr.vmem [resolvable:$true] %s318
    %321 = dma.vmem_to_hbm [thread:$0]  %s319, 16, %s310, %s38
    %s322 = sadd.s32 %s21, 18
    %s323 = sld [smem:[#allocation4 + %s322]]
    %s324 = scalar_lea.vmem %s2, %s322
    %s325 = smul.addr %s323, 16
    %s326 = scalar_lea.hbm %s3, %s325
    // Predicated region
    $region81: #{tpu_custom_call.1} parent=5 // pred_check
      _
    $region82: #{tpu_custom_call.1} parent=5 // pred_check_branch
      %328 = sbr.rel target = $region84
    $region83: #{tpu_custom_call.1} parent=5 // pred_region
      %329 = sst [smem:[#allocation7]] [#allocation44]
      %330 = sst [smem:[#allocation8]] [#allocation43]
    $region84: #{tpu_custom_call.1} parent=5 // pred_fallthru
      _
    %332 = shalt.err (0)
    %s334 = sshll.u32 %s324, 4
    %s335 = int_to_ptr.vmem [resolvable:$true] %s334
    %337 = dma.vmem_to_hbm [thread:$0]  %s335, 16, %s326, %s38
    %s338 = sadd.s32 %s21, 19
    %s339 = sld [smem:[#allocation4 + %s338]]
    %s340 = scalar_lea.vmem %s2, %s338
    %s341 = smul.addr %s339, 16
    %s342 = scalar_lea.hbm %s3, %s341
    // Predicated region
    $region85: #{tpu_custom_call.1} parent=5 // pred_check
      _
    $region86: #{tpu_custom_call.1} parent=5 // pred_check_branch
      %344 = sbr.rel target = $region88
    $region87: #{tpu_custom_call.1} parent=5 // pred_region
      %345 = sst [smem:[#allocation7]] [#allocation46]
      %346 = sst [smem:[#allocation8]] [#allocation45]
    $region88: #{tpu_custom_call.1} parent=5 // pred_fallthru
      _
    %348 = shalt.err (0)
    %s350 = sshll.u32 %s340, 4
    %s351 = int_to_ptr.vmem [resolvable:$true] %s350
    %353 = dma.vmem_to_hbm [thread:$0]  %s351, 16, %s342, %s38
    %s354 = sadd.s32 %s21, 20
    %s355 = sld [smem:[#allocation4 + %s354]]
    %s356 = scalar_lea.vmem %s2, %s354
    %s357 = smul.addr %s355, 16
    %s358 = scalar_lea.hbm %s3, %s357
    // Predicated region
    $region89: #{tpu_custom_call.1} parent=5 // pred_check
      _
    $region90: #{tpu_custom_call.1} parent=5 // pred_check_branch
      %360 = sbr.rel target = $region92
    $region91: #{tpu_custom_call.1} parent=5 // pred_region
      %361 = sst [smem:[#allocation7]] [#allocation48]
      %362 = sst [smem:[#allocation8]] [#allocation47]
    $region92: #{tpu_custom_call.1} parent=5 // pred_fallthru
      _
    %364 = shalt.err (0)
    %s366 = sshll.u32 %s356, 4
    %s367 = int_to_ptr.vmem [resolvable:$true] %s366
    %369 = dma.vmem_to_hbm [thread:$0]  %s367, 16, %s358, %s38
    %s370 = sadd.s32 %s21, 21
    %s371 = sld [smem:[#allocation4 + %s370]]
    %s372 = scalar_lea.vmem %s2, %s370
    %s373 = smul.addr %s371, 16
    %s374 = scalar_lea.hbm %s3, %s373
    // Predicated region
    $region93: #{tpu_custom_call.1} parent=5 // pred_check
      _
    $region94: #{tpu_custom_call.1} parent=5 // pred_check_branch
      %376 = sbr.rel target = $region96
    $region95: #{tpu_custom_call.1} parent=5 // pred_region
      %377 = sst [smem:[#allocation7]] [#allocation50]
      %378 = sst [smem:[#allocation8]] [#allocation49]
    $region96: #{tpu_custom_call.1} parent=5 // pred_fallthru
      _
    %380 = shalt.err (0)
    %s382 = sshll.u32 %s372, 4
    %s383 = int_to_ptr.vmem [resolvable:$true] %s382
    %385 = dma.vmem_to_hbm [thread:$0]  %s383, 16, %s374, %s38
    %s386 = sadd.s32 %s21, 22
    %s387 = sld [smem:[#allocation4 + %s386]]
    %s388 = scalar_lea.vmem %s2, %s386
    %s389 = smul.addr %s387, 16
    %s390 = scalar_lea.hbm %s3, %s389
    // Predicated region
    $region97: #{tpu_custom_call.1} parent=5 // pred_check
      _
    $region98: #{tpu_custom_call.1} parent=5 // pred_check_branch
      %392 = sbr.rel target = $region100
    $region99: #{tpu_custom_call.1} parent=5 // pred_region
      %393 = sst [smem:[#allocation7]] [#allocation52]
      %394 = sst [smem:[#allocation8]] [#allocation51]
    $region100: #{tpu_custom_call.1} parent=5 // pred_fallthru
      _
    %396 = shalt.err (0)
    %s398 = sshll.u32 %s388, 4
    %s399 = int_to_ptr.vmem [resolvable:$true] %s398
    %401 = dma.vmem_to_hbm [thread:$0]  %s399, 16, %s390, %s38
    %s402 = sadd.s32 %s21, 23
    %s403 = sld [smem:[#allocation4 + %s402]]
    %s404 = scalar_lea.vmem %s2, %s402
    %s405 = smul.addr %s403, 16
    %s406 = scalar_lea.hbm %s3, %s405
    // Predicated region
    $region101: #{tpu_custom_call.1} parent=5 // pred_check
      _
    $region102: #{tpu_custom_call.1} parent=5 // pred_check_branch
      %408 = sbr.rel target = $region104
    $region103: #{tpu_custom_call.1} parent=5 // pred_region
      %409 = sst [smem:[#allocation7]] [#allocation54]
      %410 = sst [smem:[#allocation8]] [#allocation53]
    $region104: #{tpu_custom_call.1} parent=5 // pred_fallthru
      _
    %412 = shalt.err (0)
    %s414 = sshll.u32 %s404, 4
    %s415 = int_to_ptr.vmem [resolvable:$true] %s414
    %417 = dma.vmem_to_hbm [thread:$0]  %s415, 16, %s406, %s38
    %s418 = sadd.s32 %s21, 24
    %s419 = sld [smem:[#allocation4 + %s418]]
    %s420 = scalar_lea.vmem %s2, %s418
    %s421 = smul.addr %s419, 16
    %s422 = scalar_lea.hbm %s3, %s421
    // Predicated region
    $region105: #{tpu_custom_call.1} parent=5 // pred_check
      _
    $region106: #{tpu_custom_call.1} parent=5 // pred_check_branch
      %424 = sbr.rel target = $region108
    $region107: #{tpu_custom_call.1} parent=5 // pred_region
      %425 = sst [smem:[#allocation7]] [#allocation56]
      %426 = sst [smem:[#allocation8]] [#allocation55]
    $region108: #{tpu_custom_call.1} parent=5 // pred_fallthru
      _
    %428 = shalt.err (0)
    %s430 = sshll.u32 %s420, 4
    %s431 = int_to_ptr.vmem [resolvable:$true] %s430
    %433 = dma.vmem_to_hbm [thread:$0]  %s431, 16, %s422, %s38
    %s434 = sadd.s32 %s21, 25
    %s435 = sld [smem:[#allocation4 + %s434]]
    %s436 = scalar_lea.vmem %s2, %s434
    %s437 = smul.addr %s435, 16
    %s438 = scalar_lea.hbm %s3, %s437
    // Predicated region
    $region109: #{tpu_custom_call.1} parent=5 // pred_check
      _
    $region110: #{tpu_custom_call.1} parent=5 // pred_check_branch
      %440 = sbr.rel target = $region112
    $region111: #{tpu_custom_call.1} parent=5 // pred_region
      %441 = sst [smem:[#allocation7]] [#allocation58]
      %442 = sst [smem:[#allocation8]] [#allocation57]
    $region112: #{tpu_custom_call.1} parent=5 // pred_fallthru
      _
    %444 = shalt.err (0)
    %s446 = sshll.u32 %s436, 4
    %s447 = int_to_ptr.vmem [resolvable:$true] %s446
    %449 = dma.vmem_to_hbm [thread:$0]  %s447, 16, %s438, %s38
    %s450 = sadd.s32 %s21, 26
    %s451 = sld [smem:[#allocation4 + %s450]]
    %s452 = scalar_lea.vmem %s2, %s450
    %s453 = smul.addr %s451, 16
    %s454 = scalar_lea.hbm %s3, %s453
    // Predicated region
    $region113: #{tpu_custom_call.1} parent=5 // pred_check
      _
    $region114: #{tpu_custom_call.1} parent=5 // pred_check_branch
      %456 = sbr.rel target = $region116
    $region115: #{tpu_custom_call.1} parent=5 // pred_region
      %457 = sst [smem:[#allocation7]] [#allocation60]
      %458 = sst [smem:[#allocation8]] [#allocation59]
    $region116: #{tpu_custom_call.1} parent=5 // pred_fallthru
      _
    %460 = shalt.err (0)
    %s462 = sshll.u32 %s452, 4
    %s463 = int_to_ptr.vmem [resolvable:$true] %s462
    %465 = dma.vmem_to_hbm [thread:$0]  %s463, 16, %s454, %s38
    %s466 = sadd.s32 %s21, 27
    %s467 = sld [smem:[#allocation4 + %s466]]
    %s468 = scalar_lea.vmem %s2, %s466
    %s469 = smul.addr %s467, 16
    %s470 = scalar_lea.hbm %s3, %s469
    // Predicated region
    $region117: #{tpu_custom_call.1} parent=5 // pred_check
      _
    $region118: #{tpu_custom_call.1} parent=5 // pred_check_branch
      %472 = sbr.rel target = $region120
    $region119: #{tpu_custom_call.1} parent=5 // pred_region
      %473 = sst [smem:[#allocation7]] [#allocation62]
      %474 = sst [smem:[#allocation8]] [#allocation61]
    $region120: #{tpu_custom_call.1} parent=5 // pred_fallthru
      _
    %476 = shalt.err (0)
    %s478 = sshll.u32 %s468, 4
    %s479 = int_to_ptr.vmem [resolvable:$true] %s478
    %481 = dma.vmem_to_hbm [thread:$0]  %s479, 16, %s470, %s38
    %s482 = sadd.s32 %s21, 28
    %s483 = sld [smem:[#allocation4 + %s482]]
    %s484 = scalar_lea.vmem %s2, %s482
    %s485 = smul.addr %s483, 16
    %s486 = scalar_lea.hbm %s3, %s485
    // Predicated region
    $region121: #{tpu_custom_call.1} parent=5 // pred_check
      _
    $region122: #{tpu_custom_call.1} parent=5 // pred_check_branch
      %488 = sbr.rel target = $region124
    $region123: #{tpu_custom_call.1} parent=5 // pred_region
      %489 = sst [smem:[#allocation7]] [#allocation64]
      %490 = sst [smem:[#allocation8]] [#allocation63]
    $region124: #{tpu_custom_call.1} parent=5 // pred_fallthru
      _
    %492 = shalt.err (0)
    %s494 = sshll.u32 %s484, 4
    %s495 = int_to_ptr.vmem [resolvable:$true] %s494
    %497 = dma.vmem_to_hbm [thread:$0]  %s495, 16, %s486, %s38
    %s498 = sadd.s32 %s21, 29
    %s499 = sld [smem:[#allocation4 + %s498]]
    %s500 = scalar_lea.vmem %s2, %s498
    %s501 = smul.addr %s499, 16
    %s502 = scalar_lea.hbm %s3, %s501
    // Predicated region
    $region125: #{tpu_custom_call.1} parent=5 // pred_check
      _
    $region126: #{tpu_custom_call.1} parent=5 // pred_check_branch
      %504 = sbr.rel target = $region128
    $region127: #{tpu_custom_call.1} parent=5 // pred_region
      %505 = sst [smem:[#allocation7]] [#allocation66]
      %506 = sst [smem:[#allocation8]] [#allocation65]
    $region128: #{tpu_custom_call.1} parent=5 // pred_fallthru
      _
    %508 = shalt.err (0)
    %s510 = sshll.u32 %s500, 4
    %s511 = int_to_ptr.vmem [resolvable:$true] %s510
    %513 = dma.vmem_to_hbm [thread:$0]  %s511, 16, %s502, %s38
    %s514 = sadd.s32 %s21, 30
    %s515 = sld [smem:[#allocation4 + %s514]]
    %s516 = scalar_lea.vmem %s2, %s514
    %s517 = smul.addr %s515, 16
    %s518 = scalar_lea.hbm %s3, %s517
    // Predicated region
    $region129: #{tpu_custom_call.1} parent=5 // pred_check
      _
    $region130: #{tpu_custom_call.1} parent=5 // pred_check_branch
      %520 = sbr.rel target = $region132
    $region131: #{tpu_custom_call.1} parent=5 // pred_region
      %521 = sst [smem:[#allocation7]] [#allocation68]
      %522 = sst [smem:[#allocation8]] [#allocation67]
    $region132: #{tpu_custom_call.1} parent=5 // pred_fallthru
      _
    %524 = shalt.err (0)
    %s526 = sshll.u32 %s516, 4
    %s527 = int_to_ptr.vmem [resolvable:$true] %s526
    %529 = dma.vmem_to_hbm [thread:$0]  %s527, 16, %s518, %s38
    %s530 = sadd.s32 %s21, 31
    %s531 = sld [smem:[#allocation4 + %s530]]
    %s532 = scalar_lea.vmem %s2, %s530
    %s533 = smul.addr %s531, 16
    %s534 = scalar_lea.hbm %s3, %s533
    // Predicated region
    $region133: #{tpu_custom_call.1} parent=5 // pred_check
      _
    $region134: #{tpu_custom_call.1} parent=5 // pred_check_branch
      %536 = sbr.rel target = $region136
    $region135: #{tpu_custom_call.1} parent=5 // pred_region
      %537 = sst [smem:[#allocation7]] [#allocation70]
      %538 = sst [smem:[#allocation8]] [#allocation69]
    $region136: #{tpu_custom_call.1} parent=5 // pred_fallthru
      _
    %540 = shalt.err (0)
    %s542 = sshll.u32 %s532, 4
    %s543 = int_to_ptr.vmem [resolvable:$true] %s542
    %545 = dma.vmem_to_hbm [thread:$0]  %s543, 16, %s534, %s38
    %s546 = sadd.s32 %s21, 32
    %s547 = sld [smem:[#allocation4 + %s546]]
    %s548 = scalar_lea.vmem %s2, %s546
    %s549 = smul.addr %s547, 16
    %s550 = scalar_lea.hbm %s3, %s549
    // Predicated region
    $region137: #{tpu_custom_call.1} parent=5 // pred_check
      _
    $region138: #{tpu_custom_call.1} parent=5 // pred_check_branch
      %552 = sbr.rel target = $region140
    $region139: #{tpu_custom_call.1} parent=5 // pred_region
      %553 = sst [smem:[#allocation7]] [#allocation72]
      %554 = sst [smem:[#allocation8]] [#allocation71]
    $region140: #{tpu_custom_call.1} parent=5 // pred_fallthru
      _
    %556 = shalt.err (0)
    %s558 = sshll.u32 %s548, 4
    %s559 = int_to_ptr.vmem [resolvable:$true] %s558
    %561 = dma.vmem_to_hbm [thread:$0]  %s559, 16, %s550, %s38
    %s562 = sadd.s32 %s21, 33
    %s563 = sld [smem:[#allocation4 + %s562]]
    %s564 = scalar_lea.vmem %s2, %s562
    %s565 = smul.addr %s563, 16
    %s566 = scalar_lea.hbm %s3, %s565
    // Predicated region
    $region141: #{tpu_custom_call.1} parent=5 // pred_check
      _
    $region142: #{tpu_custom_call.1} parent=5 // pred_check_branch
      %568 = sbr.rel target = $region144
    $region143: #{tpu_custom_call.1} parent=5 // pred_region
      %569 = sst [smem:[#allocation7]] [#allocation74]
      %570 = sst [smem:[#allocation8]] [#allocation73]
    $region144: #{tpu_custom_call.1} parent=5 // pred_fallthru
      _
    %572 = shalt.err (0)
    %s574 = sshll.u32 %s564, 4
    %s575 = int_to_ptr.vmem [resolvable:$true] %s574
    %577 = dma.vmem_to_hbm [thread:$0]  %s575, 16, %s566, %s38
    %s578 = sadd.s32 %s21, 34
    %s579 = sld [smem:[#allocation4 + %s578]]
    %s580 = scalar_lea.vmem %s2, %s578
    %s581 = smul.addr %s579, 16
    %s582 = scalar_lea.hbm %s3, %s581
    // Predicated region
    $region145: #{tpu_custom_call.1} parent=5 // pred_check
      _
    $region146: #{tpu_custom_call.1} parent=5 // pred_check_branch
      %584 = sbr.rel target = $region148
    $region147: #{tpu_custom_call.1} parent=5 // pred_region
      %585 = sst [smem:[#allocation7]] [#allocation76]
      %586 = sst [smem:[#allocation8]] [#allocation75]
    $region148: #{tpu_custom_call.1} parent=5 // pred_fallthru
      _
    %588 = shalt.err (0)
    %s590 = sshll.u32 %s580, 4
    %s591 = int_to_ptr.vmem [resolvable:$true] %s590
    %593 = dma.vmem_to_hbm [thread:$0]  %s591, 16, %s582, %s38
    %s594 = sadd.s32 %s21, 35
    %s595 = sld [smem:[#allocation4 + %s594]]
    %s596 = scalar_lea.vmem %s2, %s594
    %s597 = smul.addr %s595, 16
    %s598 = scalar_lea.hbm %s3, %s597
    // Predicated region
    $region149: #{tpu_custom_call.1} parent=5 // pred_check
      _
    $region150: #{tpu_custom_call.1} parent=5 // pred_check_branch
      %600 = sbr.rel target = $region152
    $region151: #{tpu_custom_call.1} parent=5 // pred_region
      %601 = sst [smem:[#allocation7]] [#allocation78]
      %602 = sst [smem:[#allocation8]] [#allocation77]
    $region152: #{tpu_custom_call.1} parent=5 // pred_fallthru
      _
    %604 = shalt.err (0)
    %s606 = sshll.u32 %s596, 4
    %s607 = int_to_ptr.vmem [resolvable:$true] %s606
    %609 = dma.vmem_to_hbm [thread:$0]  %s607, 16, %s598, %s38
    %s610 = sadd.s32 %s21, 36
    %s611 = sld [smem:[#allocation4 + %s610]]
    %s612 = scalar_lea.vmem %s2, %s610
    %s613 = smul.addr %s611, 16
    %s614 = scalar_lea.hbm %s3, %s613
    // Predicated region
    $region153: #{tpu_custom_call.1} parent=5 // pred_check
      _
    $region154: #{tpu_custom_call.1} parent=5 // pred_check_branch
      %616 = sbr.rel target = $region156
    $region155: #{tpu_custom_call.1} parent=5 // pred_region
      %617 = sst [smem:[#allocation7]] [#allocation80]
      %618 = sst [smem:[#allocation8]] [#allocation79]
    $region156: #{tpu_custom_call.1} parent=5 // pred_fallthru
      _
    %620 = shalt.err (0)
    %s622 = sshll.u32 %s612, 4
    %s623 = int_to_ptr.vmem [resolvable:$true] %s622
    %625 = dma.vmem_to_hbm [thread:$0]  %s623, 16, %s614, %s38
    %s626 = sadd.s32 %s21, 37
    %s627 = sld [smem:[#allocation4 + %s626]]
    %s628 = scalar_lea.vmem %s2, %s626
    %s629 = smul.addr %s627, 16
    %s630 = scalar_lea.hbm %s3, %s629
    // Predicated region
    $region157: #{tpu_custom_call.1} parent=5 // pred_check
      _
    $region158: #{tpu_custom_call.1} parent=5 // pred_check_branch
      %632 = sbr.rel target = $region160
    $region159: #{tpu_custom_call.1} parent=5 // pred_region
      %633 = sst [smem:[#allocation7]] [#allocation82]
      %634 = sst [smem:[#allocation8]] [#allocation81]
    $region160: #{tpu_custom_call.1} parent=5 // pred_fallthru
      _
    %636 = shalt.err (0)
    %s638 = sshll.u32 %s628, 4
    %s639 = int_to_ptr.vmem [resolvable:$true] %s638
    %641 = dma.vmem_to_hbm [thread:$0]  %s639, 16, %s630, %s38
    %s642 = sadd.s32 %s21, 38
    %s643 = sld [smem:[#allocation4 + %s642]]
    %s644 = scalar_lea.vmem %s2, %s642
    %s645 = smul.addr %s643, 16
    %s646 = scalar_lea.hbm %s3, %s645
    // Predicated region
    $region161: #{tpu_custom_call.1} parent=5 // pred_check
      _
    $region162: #{tpu_custom_call.1} parent=5 // pred_check_branch
      %648 = sbr.rel target = $region164
    $region163: #{tpu_custom_call.1} parent=5 // pred_region
      %649 = sst [smem:[#allocation7]] [#allocation84]
      %650 = sst [smem:[#allocation8]] [#allocation83]
    $region164: #{tpu_custom_call.1} parent=5 // pred_fallthru
      _
    %652 = shalt.err (0)
    %s654 = sshll.u32 %s644, 4
    %s655 = int_to_ptr.vmem [resolvable:$true] %s654
    %657 = dma.vmem_to_hbm [thread:$0]  %s655, 16, %s646, %s38
    %s658 = sadd.s32 %s21, 39
    %s659 = sld [smem:[#allocation4 + %s658]]
    %s660 = scalar_lea.vmem %s2, %s658
    %s661 = smul.addr %s659, 16
    %s662 = scalar_lea.hbm %s3, %s661
    // Predicated region
    $region165: #{tpu_custom_call.1} parent=5 // pred_check
      _
    $region166: #{tpu_custom_call.1} parent=5 // pred_check_branch
      %664 = sbr.rel target = $region168
    $region167: #{tpu_custom_call.1} parent=5 // pred_region
      %665 = sst [smem:[#allocation7]] [#allocation86]
      %666 = sst [smem:[#allocation8]] [#allocation85]
    $region168: #{tpu_custom_call.1} parent=5 // pred_fallthru
      _
    %668 = shalt.err (0)
    %s670 = sshll.u32 %s660, 4
    %s671 = int_to_ptr.vmem [resolvable:$true] %s670
    %673 = dma.vmem_to_hbm [thread:$0]  %s671, 16, %s662, %s38
    %s674 = sadd.s32 %s21, 40
    %s675 = sld [smem:[#allocation4 + %s674]]
    %s676 = scalar_lea.vmem %s2, %s674
    %s677 = smul.addr %s675, 16
    %s678 = scalar_lea.hbm %s3, %s677
    // Predicated region
    $region169: #{tpu_custom_call.1} parent=5 // pred_check
      _
    $region170: #{tpu_custom_call.1} parent=5 // pred_check_branch
      %680 = sbr.rel target = $region172
    $region171: #{tpu_custom_call.1} parent=5 // pred_region
      %681 = sst [smem:[#allocation7]] [#allocation88]
      %682 = sst [smem:[#allocation8]] [#allocation87]
    $region172: #{tpu_custom_call.1} parent=5 // pred_fallthru
      _
    %684 = shalt.err (0)
    %s686 = sshll.u32 %s676, 4
    %s687 = int_to_ptr.vmem [resolvable:$true] %s686
    %689 = dma.vmem_to_hbm [thread:$0]  %s687, 16, %s678, %s38
    %s690 = sadd.s32 %s21, 41
    %s691 = sld [smem:[#allocation4 + %s690]]
    %s692 = scalar_lea.vmem %s2, %s690
    %s693 = smul.addr %s691, 16
    %s694 = scalar_lea.hbm %s3, %s693
    // Predicated region
    $region173: #{tpu_custom_call.1} parent=5 // pred_check
      _
    $region174: #{tpu_custom_call.1} parent=5 // pred_check_branch
      %696 = sbr.rel target = $region176
    $region175: #{tpu_custom_call.1} parent=5 // pred_region
      %697 = sst [smem:[#allocation7]] [#allocation90]
      %698 = sst [smem:[#allocation8]] [#allocation89]
    $region176: #{tpu_custom_call.1} parent=5 // pred_fallthru
      _
    %700 = shalt.err (0)
    %s702 = sshll.u32 %s692, 4
    %s703 = int_to_ptr.vmem [resolvable:$true] %s702
    %705 = dma.vmem_to_hbm [thread:$0]  %s703, 16, %s694, %s38
    %s706 = sadd.s32 %s21, 42
    %s707 = sld [smem:[#allocation4 + %s706]]
    %s708 = scalar_lea.vmem %s2, %s706
    %s709 = smul.addr %s707, 16
    %s710 = scalar_lea.hbm %s3, %s709
    // Predicated region
    $region177: #{tpu_custom_call.1} parent=5 // pred_check
      _
    $region178: #{tpu_custom_call.1} parent=5 // pred_check_branch
      %712 = sbr.rel target = $region180
    $region179: #{tpu_custom_call.1} parent=5 // pred_region
      %713 = sst [smem:[#allocation7]] [#allocation92]
      %714 = sst [smem:[#allocation8]] [#allocation91]
    $region180: #{tpu_custom_call.1} parent=5 // pred_fallthru
      _
    %716 = shalt.err (0)
    %s718 = sshll.u32 %s708, 4
    %s719 = int_to_ptr.vmem [resolvable:$true] %s718
    %721 = dma.vmem_to_hbm [thread:$0]  %s719, 16, %s710, %s38
    %s722 = sadd.s32 %s21, 43
    %s723 = sld [smem:[#allocation4 + %s722]]
    %s724 = scalar_lea.vmem %s2, %s722
    %s725 = smul.addr %s723, 16
    %s726 = scalar_lea.hbm %s3, %s725
    // Predicated region
    $region181: #{tpu_custom_call.1} parent=5 // pred_check
      _
    $region182: #{tpu_custom_call.1} parent=5 // pred_check_branch
      %728 = sbr.rel target = $region184
    $region183: #{tpu_custom_call.1} parent=5 // pred_region
      %729 = sst [smem:[#allocation7]] [#allocation94]
      %730 = sst [smem:[#allocation8]] [#allocation93]
    $region184: #{tpu_custom_call.1} parent=5 // pred_fallthru
      _
    %732 = shalt.err (0)
    %s734 = sshll.u32 %s724, 4
    %s735 = int_to_ptr.vmem [resolvable:$true] %s734
    %737 = dma.vmem_to_hbm [thread:$0]  %s735, 16, %s726, %s38
    %s738 = sadd.s32 %s21, 44
    %s739 = sld [smem:[#allocation4 + %s738]]
    %s740 = scalar_lea.vmem %s2, %s738
    %s741 = smul.addr %s739, 16
    %s742 = scalar_lea.hbm %s3, %s741
    // Predicated region
    $region185: #{tpu_custom_call.1} parent=5 // pred_check
      _
    $region186: #{tpu_custom_call.1} parent=5 // pred_check_branch
      %744 = sbr.rel target = $region188
    $region187: #{tpu_custom_call.1} parent=5 // pred_region
      %745 = sst [smem:[#allocation7]] [#allocation96]
      %746 = sst [smem:[#allocation8]] [#allocation95]
    $region188: #{tpu_custom_call.1} parent=5 // pred_fallthru
      _
    %748 = shalt.err (0)
    %s750 = sshll.u32 %s740, 4
    %s751 = int_to_ptr.vmem [resolvable:$true] %s750
    %753 = dma.vmem_to_hbm [thread:$0]  %s751, 16, %s742, %s38
    %s754 = sadd.s32 %s21, 45
    %s755 = sld [smem:[#allocation4 + %s754]]
    %s756 = scalar_lea.vmem %s2, %s754
    %s757 = smul.addr %s755, 16
    %s758 = scalar_lea.hbm %s3, %s757
    // Predicated region
    $region189: #{tpu_custom_call.1} parent=5 // pred_check
      _
    $region190: #{tpu_custom_call.1} parent=5 // pred_check_branch
      %760 = sbr.rel target = $region192
    $region191: #{tpu_custom_call.1} parent=5 // pred_region
      %761 = sst [smem:[#allocation7]] [#allocation98]
      %762 = sst [smem:[#allocation8]] [#allocation97]
    $region192: #{tpu_custom_call.1} parent=5 // pred_fallthru
      _
    %764 = shalt.err (0)
    %s766 = sshll.u32 %s756, 4
    %s767 = int_to_ptr.vmem [resolvable:$true] %s766
    %769 = dma.vmem_to_hbm [thread:$0]  %s767, 16, %s758, %s38
    %s770 = sadd.s32 %s21, 46
    %s771 = sld [smem:[#allocation4 + %s770]]
    %s772 = scalar_lea.vmem %s2, %s770
    %s773 = smul.addr %s771, 16
    %s774 = scalar_lea.hbm %s3, %s773
    // Predicated region
    $region193: #{tpu_custom_call.1} parent=5 // pred_check
      _
    $region194: #{tpu_custom_call.1} parent=5 // pred_check_branch
      %776 = sbr.rel target = $region196
    $region195: #{tpu_custom_call.1} parent=5 // pred_region
      %777 = sst [smem:[#allocation7]] [#allocation100]
      %778 = sst [smem:[#allocation8]] [#allocation99]
    $region196: #{tpu_custom_call.1} parent=5 // pred_fallthru
      _
    %780 = shalt.err (0)
    %s782 = sshll.u32 %s772, 4
    %s783 = int_to_ptr.vmem [resolvable:$true] %s782
    %785 = dma.vmem_to_hbm [thread:$0]  %s783, 16, %s774, %s38
    %s786 = sadd.s32 %s21, 47
    %s787 = sld [smem:[#allocation4 + %s786]]
    %s788 = scalar_lea.vmem %s2, %s786
    %s789 = smul.addr %s787, 16
    %s790 = scalar_lea.hbm %s3, %s789
    // Predicated region
    $region197: #{tpu_custom_call.1} parent=5 // pred_check
      _
    $region198: #{tpu_custom_call.1} parent=5 // pred_check_branch
      %792 = sbr.rel target = $region200
    $region199: #{tpu_custom_call.1} parent=5 // pred_region
      %793 = sst [smem:[#allocation7]] [#allocation102]
      %794 = sst [smem:[#allocation8]] [#allocation101]
    $region200: #{tpu_custom_call.1} parent=5 // pred_fallthru
      _
    %796 = shalt.err (0)
    %s798 = sshll.u32 %s788, 4
    %s799 = int_to_ptr.vmem [resolvable:$true] %s798
    %801 = dma.vmem_to_hbm [thread:$0]  %s799, 16, %s790, %s38
    %s802 = sadd.s32 %s21, 48
    %s803 = sld [smem:[#allocation4 + %s802]]
    %s804 = scalar_lea.vmem %s2, %s802
    %s805 = smul.addr %s803, 16
    %s806 = scalar_lea.hbm %s3, %s805
    // Predicated region
    $region201: #{tpu_custom_call.1} parent=5 // pred_check
      _
    $region202: #{tpu_custom_call.1} parent=5 // pred_check_branch
      %808 = sbr.rel target = $region204
    $region203: #{tpu_custom_call.1} parent=5 // pred_region
      %809 = sst [smem:[#allocation7]] [#allocation104]
      %810 = sst [smem:[#allocation8]] [#allocation103]
    $region204: #{tpu_custom_call.1} parent=5 // pred_fallthru
      _
    %812 = shalt.err (0)
    %s814 = sshll.u32 %s804, 4
    %s815 = int_to_ptr.vmem [resolvable:$true] %s814
    %817 = dma.vmem_to_hbm [thread:$0]  %s815, 16, %s806, %s38
    %s818 = sadd.s32 %s21, 49
    %s819 = sld [smem:[#allocation4 + %s818]]
    %s820 = scalar_lea.vmem %s2, %s818
    %s821 = smul.addr %s819, 16
    %s822 = scalar_lea.hbm %s3, %s821
    // Predicated region
    $region205: #{tpu_custom_call.1} parent=5 // pred_check
      _
    $region206: #{tpu_custom_call.1} parent=5 // pred_check_branch
      %824 = sbr.rel target = $region208
    $region207: #{tpu_custom_call.1} parent=5 // pred_region
      %825 = sst [smem:[#allocation7]] [#allocation106]
      %826 = sst [smem:[#allocation8]] [#allocation105]
    $region208: #{tpu_custom_call.1} parent=5 // pred_fallthru
      _
    %828 = shalt.err (0)
    %s830 = sshll.u32 %s820, 4
    %s831 = int_to_ptr.vmem [resolvable:$true] %s830
    %833 = dma.vmem_to_hbm [thread:$0]  %s831, 16, %s822, %s38
    %s834 = sadd.s32 %s21, 50
    %s835 = sld [smem:[#allocation4 + %s834]]
    %s836 = scalar_lea.vmem %s2, %s834
    %s837 = smul.addr %s835, 16
    %s838 = scalar_lea.hbm %s3, %s837
    // Predicated region
    $region209: #{tpu_custom_call.1} parent=5 // pred_check
      _
    $region210: #{tpu_custom_call.1} parent=5 // pred_check_branch
      %840 = sbr.rel target = $region212
    $region211: #{tpu_custom_call.1} parent=5 // pred_region
      %841 = sst [smem:[#allocation7]] [#allocation108]
      %842 = sst [smem:[#allocation8]] [#allocation107]
    $region212: #{tpu_custom_call.1} parent=5 // pred_fallthru
      _
    %844 = shalt.err (0)
    %s846 = sshll.u32 %s836, 4
    %s847 = int_to_ptr.vmem [resolvable:$true] %s846
    %849 = dma.vmem_to_hbm [thread:$0]  %s847, 16, %s838, %s38
    %s850 = sadd.s32 %s21, 51
    %s851 = sld [smem:[#allocation4 + %s850]]
    %s852 = scalar_lea.vmem %s2, %s850
    %s853 = smul.addr %s851, 16
    %s854 = scalar_lea.hbm %s3, %s853
    // Predicated region
    $region213: #{tpu_custom_call.1} parent=5 // pred_check
      _
    $region214: #{tpu_custom_call.1} parent=5 // pred_check_branch
      %856 = sbr.rel target = $region216
    $region215: #{tpu_custom_call.1} parent=5 // pred_region
      %857 = sst [smem:[#allocation7]] [#allocation110]
      %858 = sst [smem:[#allocation8]] [#allocation109]
    $region216: #{tpu_custom_call.1} parent=5 // pred_fallthru
      _
    %860 = shalt.err (0)
    %s862 = sshll.u32 %s852, 4
    %s863 = int_to_ptr.vmem [resolvable:$true] %s862
    %865 = dma.vmem_to_hbm [thread:$0]  %s863, 16, %s854, %s38
    %s866 = sadd.s32 %s21, 52
    %s867 = sld [smem:[#allocation4 + %s866]]
    %s868 = scalar_lea.vmem %s2, %s866
    %s869 = smul.addr %s867, 16
    %s870 = scalar_lea.hbm %s3, %s869
    // Predicated region
    $region217: #{tpu_custom_call.1} parent=5 // pred_check
      _
    $region218: #{tpu_custom_call.1} parent=5 // pred_check_branch
      %872 = sbr.rel target = $region220
    $region219: #{tpu_custom_call.1} parent=5 // pred_region
      %873 = sst [smem:[#allocation7]] [#allocation112]
      %874 = sst [smem:[#allocation8]] [#allocation111]
    $region220: #{tpu_custom_call.1} parent=5 // pred_fallthru
      _
    %876 = shalt.err (0)
    %s878 = sshll.u32 %s868, 4
    %s879 = int_to_ptr.vmem [resolvable:$true] %s878
    %881 = dma.vmem_to_hbm [thread:$0]  %s879, 16, %s870, %s38
    %s882 = sadd.s32 %s21, 53
    %s883 = sld [smem:[#allocation4 + %s882]]
    %s884 = scalar_lea.vmem %s2, %s882
    %s885 = smul.addr %s883, 16
    %s886 = scalar_lea.hbm %s3, %s885
    // Predicated region
    $region221: #{tpu_custom_call.1} parent=5 // pred_check
      _
    $region222: #{tpu_custom_call.1} parent=5 // pred_check_branch
      %888 = sbr.rel target = $region224
    $region223: #{tpu_custom_call.1} parent=5 // pred_region
      %889 = sst [smem:[#allocation7]] [#allocation114]
      %890 = sst [smem:[#allocation8]] [#allocation113]
    $region224: #{tpu_custom_call.1} parent=5 // pred_fallthru
      _
    %892 = shalt.err (0)
    %s894 = sshll.u32 %s884, 4
    %s895 = int_to_ptr.vmem [resolvable:$true] %s894
    %897 = dma.vmem_to_hbm [thread:$0]  %s895, 16, %s886, %s38
    %s898 = sadd.s32 %s21, 54
    %s899 = sld [smem:[#allocation4 + %s898]]
    %s900 = scalar_lea.vmem %s2, %s898
    %s901 = smul.addr %s899, 16
    %s902 = scalar_lea.hbm %s3, %s901
    // Predicated region
    $region225: #{tpu_custom_call.1} parent=5 // pred_check
      _
    $region226: #{tpu_custom_call.1} parent=5 // pred_check_branch
      %904 = sbr.rel target = $region228
    $region227: #{tpu_custom_call.1} parent=5 // pred_region
      %905 = sst [smem:[#allocation7]] [#allocation116]
      %906 = sst [smem:[#allocation8]] [#allocation115]
    $region228: #{tpu_custom_call.1} parent=5 // pred_fallthru
      _
    %908 = shalt.err (0)
    %s910 = sshll.u32 %s900, 4
    %s911 = int_to_ptr.vmem [resolvable:$true] %s910
    %913 = dma.vmem_to_hbm [thread:$0]  %s911, 16, %s902, %s38
    %s914 = sadd.s32 %s21, 55
    %s915 = sld [smem:[#allocation4 + %s914]]
    %s916 = scalar_lea.vmem %s2, %s914
    %s917 = smul.addr %s915, 16
    %s918 = scalar_lea.hbm %s3, %s917
    // Predicated region
    $region229: #{tpu_custom_call.1} parent=5 // pred_check
      _
    $region230: #{tpu_custom_call.1} parent=5 // pred_check_branch
      %920 = sbr.rel target = $region232
    $region231: #{tpu_custom_call.1} parent=5 // pred_region
      %921 = sst [smem:[#allocation7]] [#allocation118]
      %922 = sst [smem:[#allocation8]] [#allocation117]
    $region232: #{tpu_custom_call.1} parent=5 // pred_fallthru
      _
    %924 = shalt.err (0)
    %s926 = sshll.u32 %s916, 4
    %s927 = int_to_ptr.vmem [resolvable:$true] %s926
    %929 = dma.vmem_to_hbm [thread:$0]  %s927, 16, %s918, %s38
    %s930 = sadd.s32 %s21, 56
    %s931 = sld [smem:[#allocation4 + %s930]]
    %s932 = scalar_lea.vmem %s2, %s930
    %s933 = smul.addr %s931, 16
    %s934 = scalar_lea.hbm %s3, %s933
    // Predicated region
    $region233: #{tpu_custom_call.1} parent=5 // pred_check
      _
    $region234: #{tpu_custom_call.1} parent=5 // pred_check_branch
      %936 = sbr.rel target = $region236
    $region235: #{tpu_custom_call.1} parent=5 // pred_region
      %937 = sst [smem:[#allocation7]] [#allocation120]
      %938 = sst [smem:[#allocation8]] [#allocation119]
    $region236: #{tpu_custom_call.1} parent=5 // pred_fallthru
      _
    %940 = shalt.err (0)
    %s942 = sshll.u32 %s932, 4
    %s943 = int_to_ptr.vmem [resolvable:$true] %s942
    %945 = dma.vmem_to_hbm [thread:$0]  %s943, 16, %s934, %s38
    %s946 = sadd.s32 %s21, 57
    %s947 = sld [smem:[#allocation4 + %s946]]
    %s948 = scalar_lea.vmem %s2, %s946
    %s949 = smul.addr %s947, 16
    %s950 = scalar_lea.hbm %s3, %s949
    // Predicated region
    $region237: #{tpu_custom_call.1} parent=5 // pred_check
      _
    $region238: #{tpu_custom_call.1} parent=5 // pred_check_branch
      %952 = sbr.rel target = $region240
    $region239: #{tpu_custom_call.1} parent=5 // pred_region
      %953 = sst [smem:[#allocation7]] [#allocation122]
      %954 = sst [smem:[#allocation8]] [#allocation121]
    $region240: #{tpu_custom_call.1} parent=5 // pred_fallthru
      _
    %956 = shalt.err (0)
    %s958 = sshll.u32 %s948, 4
    %s959 = int_to_ptr.vmem [resolvable:$true] %s958
    %961 = dma.vmem_to_hbm [thread:$0]  %s959, 16, %s950, %s38
    %s962 = sadd.s32 %s21, 58
    %s963 = sld [smem:[#allocation4 + %s962]]
    %s964 = scalar_lea.vmem %s2, %s962
    %s965 = smul.addr %s963, 16
    %s966 = scalar_lea.hbm %s3, %s965
    // Predicated region
    $region241: #{tpu_custom_call.1} parent=5 // pred_check
      _
    $region242: #{tpu_custom_call.1} parent=5 // pred_check_branch
      %968 = sbr.rel target = $region244
    $region243: #{tpu_custom_call.1} parent=5 // pred_region
      %969 = sst [smem:[#allocation7]] [#allocation124]
      %970 = sst [smem:[#allocation8]] [#allocation123]
    $region244: #{tpu_custom_call.1} parent=5 // pred_fallthru
      _
    %972 = shalt.err (0)
    %s974 = sshll.u32 %s964, 4
    %s975 = int_to_ptr.vmem [resolvable:$true] %s974
    %977 = dma.vmem_to_hbm [thread:$0]  %s975, 16, %s966, %s38
    %s978 = sadd.s32 %s21, 59
    %s979 = sld [smem:[#allocation4 + %s978]]
    %s980 = scalar_lea.vmem %s2, %s978
    %s981 = smul.addr %s979, 16
    %s982 = scalar_lea.hbm %s3, %s981
    // Predicated region
    $region245: #{tpu_custom_call.1} parent=5 // pred_check
      _
    $region246: #{tpu_custom_call.1} parent=5 // pred_check_branch
      %984 = sbr.rel target = $region248
    $region247: #{tpu_custom_call.1} parent=5 // pred_region
      %985 = sst [smem:[#allocation7]] [#allocation126]
      %986 = sst [smem:[#allocation8]] [#allocation125]
    $region248: #{tpu_custom_call.1} parent=5 // pred_fallthru
      _
    %988 = shalt.err (0)
    %s990 = sshll.u32 %s980, 4
    %s991 = int_to_ptr.vmem [resolvable:$true] %s990
    %993 = dma.vmem_to_hbm [thread:$0]  %s991, 16, %s982, %s38
    %s994 = sadd.s32 %s21, 60
    %s995 = sld [smem:[#allocation4 + %s994]]
    %s996 = scalar_lea.vmem %s2, %s994
    %s997 = smul.addr %s995, 16
    %s998 = scalar_lea.hbm %s3, %s997
    // Predicated region
    $region249: #{tpu_custom_call.1} parent=5 // pred_check
      _
    $region250: #{tpu_custom_call.1} parent=5 // pred_check_branch
      %1000 = sbr.rel target = $region252
    $region251: #{tpu_custom_call.1} parent=5 // pred_region
      %1001 = sst [smem:[#allocation7]] [#allocation128]
      %1002 = sst [smem:[#allocation8]] [#allocation127]
    $region252: #{tpu_custom_call.1} parent=5 // pred_fallthru
      _
    %1004 = shalt.err (0)
    %s1006 = sshll.u32 %s996, 4
    %s1007 = int_to_ptr.vmem [resolvable:$true] %s1006
    %1009 = dma.vmem_to_hbm [thread:$0]  %s1007, 16, %s998, %s38
    %s1010 = sadd.s32 %s21, 61
    %s1011 = sld [smem:[#allocation4 + %s1010]]
    %s1012 = scalar_lea.vmem %s2, %s1010
    %s1013 = smul.addr %s1011, 16
    %s1014 = scalar_lea.hbm %s3, %s1013
    // Predicated region
    $region253: #{tpu_custom_call.1} parent=5 // pred_check
      _
    $region254: #{tpu_custom_call.1} parent=5 // pred_check_branch
      %1016 = sbr.rel target = $region256
    $region255: #{tpu_custom_call.1} parent=5 // pred_region
      %1017 = sst [smem:[#allocation7]] [#allocation130]
      %1018 = sst [smem:[#allocation8]] [#allocation129]
    $region256: #{tpu_custom_call.1} parent=5 // pred_fallthru
      _
    %1020 = shalt.err (0)
    %s1022 = sshll.u32 %s1012, 4
    %s1023 = int_to_ptr.vmem [resolvable:$true] %s1022
    %1025 = dma.vmem_to_hbm [thread:$0]  %s1023, 16, %s1014, %s38
    %s1026 = sadd.s32 %s21, 62
    %s1027 = sld [smem:[#allocation4 + %s1026]]
    %s1028 = scalar_lea.vmem %s2, %s1026
    %s1029 = smul.addr %s1027, 16
    %s1030 = scalar_lea.hbm %s3, %s1029
    // Predicated region
    $region257: #{tpu_custom_call.1} parent=5 // pred_check
      _
    $region258: #{tpu_custom_call.1} parent=5 // pred_check_branch
      %1032 = sbr.rel target = $region260
    $region259: #{tpu_custom_call.1} parent=5 // pred_region
      %1033 = sst [smem:[#allocation7]] [#allocation132]
      %1034 = sst [smem:[#allocation8]] [#allocation131]
    $region260: #{tpu_custom_call.1} parent=5 // pred_fallthru
      _
    %1036 = shalt.err (0)
    %s1038 = sshll.u32 %s1028, 4
    %s1039 = int_to_ptr.vmem [resolvable:$true] %s1038
    %1041 = dma.vmem_to_hbm [thread:$0]  %s1039, 16, %s1030, %s38
    %s1042 = sadd.s32 %s21, 63
    %s1043 = sld [smem:[#allocation4 + %s1042]]
    %s1044 = scalar_lea.vmem %s2, %s1042
    %s1045 = smul.addr %s1043, 16
    %s1046 = scalar_lea.hbm %s3, %s1045
    // Predicated region
    $region261: #{tpu_custom_call.1} parent=5 // pred_check
      _
    $region262: #{tpu_custom_call.1} parent=5 // pred_check_branch
      %1048 = sbr.rel target = $region264
    $region263: #{tpu_custom_call.1} parent=5 // pred_region
      %1049 = sst [smem:[#allocation7]] [#allocation134]
      %1050 = sst [smem:[#allocation8]] [#allocation133]
    $region264: #{tpu_custom_call.1} parent=5 // pred_fallthru
      _
    %1052 = shalt.err (0)
    %s1054 = sshll.u32 %s1044, 4
    %s1055 = int_to_ptr.vmem [resolvable:$true] %s1054
    %1057 = dma.vmem_to_hbm [thread:$0]  %s1055, 16, %s1046, %s38
    %s1058 = smul.u32 1, 1
    %s1059 = sshll.u32 %s1058, 4
    %1060 = dma.done %s38, %s1059
    %s1061 = sshll.u32 %s1058, 4
    %1062 = dma.done %s38, %s1061
    %s1063 = sshll.u32 %s1058, 4
    %1064 = dma.done %s38, %s1063
    %s1065 = sshll.u32 %s1058, 4
    %1066 = dma.done %s38, %s1065
    %s1067 = sshll.u32 %s1058, 4
    %1068 = dma.done %s38, %s1067
    %s1069 = sshll.u32 %s1058, 4
    %1070 = dma.done %s38, %s1069
    %s1071 = sshll.u32 %s1058, 4
    %1072 = dma.done %s38, %s1071
    %s1073 = sshll.u32 %s1058, 4
    %1074 = dma.done %s38, %s1073
    %s1075 = sshll.u32 %s1058, 4
    %1076 = dma.done %s38, %s1075
    %s1077 = sshll.u32 %s1058, 4
    %1078 = dma.done %s38, %s1077
    %s1079 = sshll.u32 %s1058, 4
    %1080 = dma.done %s38, %s1079
    %s1081 = sshll.u32 %s1058, 4
    %1082 = dma.done %s38, %s1081
    %s1083 = sshll.u32 %s1058, 4
    %1084 = dma.done %s38, %s1083
    %s1085 = sshll.u32 %s1058, 4
    %1086 = dma.done %s38, %s1085
    %s1087 = sshll.u32 %s1058, 4
    %1088 = dma.done %s38, %s1087
    %s1089 = sshll.u32 %s1058, 4
    %1090 = dma.done %s38, %s1089
    %s1091 = sshll.u32 %s1058, 4
    %1092 = dma.done %s38, %s1091
    %s1093 = sshll.u32 %s1058, 4
    %1094 = dma.done %s38, %s1093
    %s1095 = sshll.u32 %s1058, 4
    %1096 = dma.done %s38, %s1095
    %s1097 = sshll.u32 %s1058, 4
    %1098 = dma.done %s38, %s1097
    %s1099 = sshll.u32 %s1058, 4
    %1100 = dma.done %s38, %s1099
    %s1101 = sshll.u32 %s1058, 4
    %1102 = dma.done %s38, %s1101
    %s1103 = sshll.u32 %s1058, 4
    %1104 = dma.done %s38, %s1103
    %s1105 = sshll.u32 %s1058, 4
    %1106 = dma.done %s38, %s1105
    %s1107 = sshll.u32 %s1058, 4
    %1108 = dma.done %s38, %s1107
    %s1109 = sshll.u32 %s1058, 4
    %1110 = dma.done %s38, %s1109
    %s1111 = sshll.u32 %s1058, 4
    %1112 = dma.done %s38, %s1111
    %s1113 = sshll.u32 %s1058, 4
    %1114 = dma.done %s38, %s1113
    %s1115 = sshll.u32 %s1058, 4
    %1116 = dma.done %s38, %s1115
    %s1117 = sshll.u32 %s1058, 4
    %1118 = dma.done %s38, %s1117
    %s1119 = sshll.u32 %s1058, 4
    %1120 = dma.done %s38, %s1119
    %s1121 = sshll.u32 %s1058, 4
    %1122 = dma.done %s38, %s1121
    %s1123 = sshll.u32 %s1058, 4
    %1124 = dma.done %s38, %s1123
    %s1125 = sshll.u32 %s1058, 4
    %1126 = dma.done %s38, %s1125
    %s1127 = sshll.u32 %s1058, 4
    %1128 = dma.done %s38, %s1127
    %s1129 = sshll.u32 %s1058, 4
    %1130 = dma.done %s38, %s1129
    %s1131 = sshll.u32 %s1058, 4
    %1132 = dma.done %s38, %s1131
    %s1133 = sshll.u32 %s1058, 4
    %1134 = dma.done %s38, %s1133
    %s1135 = sshll.u32 %s1058, 4
    %1136 = dma.done %s38, %s1135
    %s1137 = sshll.u32 %s1058, 4
    %1138 = dma.done %s38, %s1137
    %s1139 = sshll.u32 %s1058, 4
    %1140 = dma.done %s38, %s1139
    %s1141 = sshll.u32 %s1058, 4
    %1142 = dma.done %s38, %s1141
    %s1143 = sshll.u32 %s1058, 4
    %1144 = dma.done %s38, %s1143
    %s1145 = sshll.u32 %s1058, 4
    %1146 = dma.done %s38, %s1145
    %s1147 = sshll.u32 %s1058, 4
    %1148 = dma.done %s38, %s1147
    %s1149 = sshll.u32 %s1058, 4
    %1150 = dma.done %s38, %s1149
    %s1151 = sshll.u32 %s1058, 4
    %1152 = dma.done %s38, %s1151
    %s1153 = sshll.u32 %s1058, 4
    %1154 = dma.done %s38, %s1153
    %s1155 = sshll.u32 %s1058, 4
    %1156 = dma.done %s38, %s1155
    %s1157 = sshll.u32 %s1058, 4
    %1158 = dma.done %s38, %s1157
    %s1159 = sshll.u32 %s1058, 4
    %1160 = dma.done %s38, %s1159
    %s1161 = sshll.u32 %s1058, 4
    %1162 = dma.done %s38, %s1161
    %s1163 = sshll.u32 %s1058, 4
    %1164 = dma.done %s38, %s1163
    %s1165 = sshll.u32 %s1058, 4
    %1166 = dma.done %s38, %s1165
    %s1167 = sshll.u32 %s1058, 4
    %1168 = dma.done %s38, %s1167
    %s1169 = sshll.u32 %s1058, 4
    %1170 = dma.done %s38, %s1169
    %s1171 = sshll.u32 %s1058, 4
    %1172 = dma.done %s38, %s1171
    %s1173 = sshll.u32 %s1058, 4
    %1174 = dma.done %s38, %s1173
    %s1175 = sshll.u32 %s1058, 4
    %1176 = dma.done %s38, %s1175
    %s1177 = sshll.u32 %s1058, 4
    %1178 = dma.done %s38, %s1177
    %s1179 = sshll.u32 %s1058, 4
    %1180 = dma.done %s38, %s1179
    %s1181 = sshll.u32 %s1058, 4
    %1182 = dma.done %s38, %s1181
    %s1183 = sshll.u32 %s1058, 4
    %1184 = dma.done %s38, %s1183
    %s1185 = sshll.u32 %s1058, 4
    %1186 = dma.done %s38, %s1185
  $region6: #{tpu_custom_call.1} parent=0 // loop_footer
    %s19 = sadd.s32 1, %s15
  $region7: #{tpu_custom_call.1} parent=0 // loop_footer_branch
    %14 = sbr.rel target = $region3
  $region8: #{tpu_custom_call.1} parent=0 // loop_exit
    _
  %1187 = vsyncmov [#allocation2]
  %s1188 = vpop.sfrf %1187
  %p1189 = scmp.eq.s32.totalorder %s1188, 0
  %p1190 = pneg %p1189
  %1192 = shalt.err (%p1190)
  %s1193 = scalar_lea.sflag [#allocation2], 1
  %1194 = vsyncmov %s1193
  %s1195 = vpop.sfrf %1194
  %p1196 = scmp.eq.s32.totalorder %s1195, 0
  %p1197 = pneg %p1196
  %1199 = shalt.err (%p1197)

</llo_original>
